<compile_context>
chip_gen: v5e
topology: v5e:2x2
jax: 0.10.0
libtpu: 0.0.40
codegen_flags: <defaults>
</compile_context>

<pallas_src>
from functools import partial

import jax
import jax.numpy as jnp
from jax.experimental import pallas as pl
from jax.experimental.pallas import tpu as pltpu

STATE_DIM = 2
ACTION_DIM = 1
H1 = 512
H2 = 256
OUT = 2 * ACTION_DIM
HEAD_PAD = 8          # head weight padded to 8 output rows for clean MXU tiling

MAX_TB = 2048         # batch (lane) tile; h1 tile = 512*2048*4B = 4 MiB f32 / 2 MiB bf16


def _round_up(n, m):
    return ((n + m - 1) // m) * m


def _layer1_dtype():
    """bf16 layer-1 FMAs on v6e/v7x (packed bf16 VALU); f32 on older generations."""
    try:
        kind = jax.devices()[0].device_kind.lower()
    except Exception:
        return jnp.bfloat16
    for old in ("v2", "v3", "v4", "v5"):
        if old in kind:
            return jnp.float32
    return jnp.bfloat16


def _pick_tb(B):
    """Lane (batch) tile: multiple of 128; prefer >=2 grid steps for v7x dual-TC."""
    if B > MAX_TB:
        return MAX_TB
    if B >= 256:
        return min(MAX_TB, _round_up(-(-B // 2), 128))
    return _round_up(B, 128)


def policy_kernel(x_ref, w1_ref, b1_ref, w2_ref, b2_ref, w3_ref, b3_ref, o_ref,
                  *, l1_dtype):
    # Feature-major: x (2, TB), out (OUT, TB); lane axis = batch (dense 128 lanes).
    x = x_ref[...].astype(l1_dtype)                    # (2, TB)
    w1 = w1_ref[...].astype(l1_dtype)                  # (512, 2)
    b1 = b1_ref[...].astype(l1_dtype)                  # (512, 1)

    # Layer 1 (K=2): VPU broadcast FMAs; relu fused with the bf16 cast for the MXU.
    h1 = w1[:, 0:1] * x[0:1, :] + w1[:, 1:2] * x[1:2, :] + b1
    h1 = jnp.maximum(h1, 0).astype(jnp.bfloat16)       # (512, TB) bf16

    # Layer 2: dominant (256,512)@(512,TB) MXU matmul, bf16 in / f32 accumulate.
    h2 = jnp.dot(w2_ref[...], h1, preferred_element_type=jnp.float32) + b2_ref[...]
    h2 = jnp.maximum(h2, 0.0).astype(jnp.bfloat16)     # (256, TB) bf16

    # Layer 3 head (output rows padded to 8; pad rows sliced away).
    y = jnp.dot(w3_ref[...], h2, preferred_element_type=jnp.float32) + b3_ref[...]
    y = y[0:OUT, :]                                    # (2, TB) f32

    # Head: mean rows pass through; std rows get softplus (beta=1, threshold=20) + 1e-5.
    mean = y[0:ACTION_DIM, :]
    s = y[ACTION_DIM:OUT, :]
    sp = jnp.where(s > 20.0, s, jnp.log1p(jnp.exp(jnp.minimum(s, 20.0)))) + 1e-5
    o_ref[...] = jnp.concatenate([mean, sp], axis=0)   # one fused lane-dense store


def policy_net_forward(x, params):
    w1, b1, w2, b2, w3, b3 = params
    B = x.shape[0]

    TB = _pick_tb(B)
    n_tiles = pl.cdiv(B, TB)
    B_pad = n_tiles * TB

    # Feature-major operands. Padded batch columns are zeros (benign through the net).
    x_t = x.astype(jnp.float32).T                      # (2, B)
    if B_pad != B:
        x_t = jnp.pad(x_t, ((0, 0), (0, B_pad - B)))

    w1_fm = w1.T.astype(jnp.float32)                   # (512, 2)
    b1_col = b1.reshape(-1, 1).astype(jnp.float32)     # (512, 1)
    w2_fm = w2.T.astype(jnp.bfloat16)                  # (256, 512) bf16 for the MXU
    b2_col = b2.reshape(-1, 1).astype(jnp.float32)     # (256, 1)
    w3_fm = jnp.zeros((HEAD_PAD, H2), jnp.bfloat16).at[:OUT].set(w3.T.astype(jnp.bfloat16))
    b3_col = jnp.zeros((HEAD_PAD, 1), jnp.float32).at[:OUT, 0].set(b3.astype(jnp.float32))

    const = lambda i: (0, 0)   # weights/biases: one block, VMEM-resident across the grid
    cost = pl.CostEstimate(
        flops=2 * B_pad * (STATE_DIM * H1 + H1 * H2 + H2 * OUT),
        transcendentals=2 * B_pad * ACTION_DIM,
        bytes_accessed=(x_t.size + w1_fm.size + b1_col.size + b2_col.size
                        + b3_col.size + OUT * B_pad) * 4
                       + (w2_fm.size + w3_fm.size) * 2,
    )

    out_t = pl.pallas_call(
        partial(policy_kernel, l1_dtype=_layer1_dtype()),
        out_shape=jax.ShapeDtypeStruct((OUT, B_pad), jnp.float32),
        grid=(n_tiles,),
        in_specs=[
            pl.BlockSpec((STATE_DIM, TB), lambda i: (0, i)),   # x: lane-dense batch tile
            pl.BlockSpec((H1, STATE_DIM), const),              # w1^T
            pl.BlockSpec((H1, 1), const),                      # b1
            pl.BlockSpec((H2, H1), const),                     # w2^T (bf16)
            pl.BlockSpec((H2, 1), const),                      # b2
            pl.BlockSpec((HEAD_PAD, H2), const),               # w3^T padded (bf16)
            pl.BlockSpec((HEAD_PAD, 1), const),                # b3 padded
        ],
        out_specs=pl.BlockSpec((OUT, TB), lambda i: (0, i)),
        compiler_params=pltpu.CompilerParams(
            dimension_semantics=("parallel",),
            vmem_limit_bytes=40 * 1024 * 1024,
        ),
        cost_estimate=cost,
    )(x_t, w1_fm, b1_col, w2_fm, b2_col, w3_fm, b3_col)

    return out_t[:, :B].T                              # back to batch-major (B, OUT)


def init_params(key):
    """Deterministic init mimicking PyTorch Linear default (U[-1/sqrt(fan_in), +])."""
    ks = jax.random.split(key, 6)

    def lin(kw, kb, fan_in, fan_out):
        bound = 1.0 / jnp.sqrt(fan_in)
        w = jax.random.uniform(kw, (fan_in, fan_out), jnp.float32, -bound, bound)
        b = jax.random.uniform(kb, (fan_out,), jnp.float32, -bound, bound)
        return w, b

    w1, b1 = lin(ks[0], ks[1], STATE_DIM, H1)
    w2, b2 = lin(ks[2], ks[3], H1, H2)
    w3, b3 = lin(ks[4], ks[5], H2, OUT)
    return (w1, b1, w2, b2, w3, b3)


def _softplus_torch(v):
    # PyTorch softplus: beta=1, threshold=20 -> identity above 20.
    return jnp.where(v > 20.0, v, jnp.log1p(jnp.exp(jnp.minimum(v, 20.0))))


def _head(y):
    m = OUT // 2
    return jnp.concatenate([y[:, :m], _softplus_torch(y[:, m:]) + 1e-5], axis=1)


def reference_forward_f32(x, params):
    """Pure-f32 JAX reference (PyTorch semantics)."""
    w1, b1, w2, b2, w3, b3 = params
    h1 = jax.nn.relu(x @ w1 + b1)
    h2 = jax.nn.relu(h1 @ w2 + b2)
    return _head(h2 @ w3 + b3)


def reference_forward_matched(x, params):
    """Reference replicating the kernel's mixed-precision path (batch-major)."""
    l1 = _layer1_dtype()
    w1, b1, w2, b2, w3, b3 = params
    xl, w1l, b1l = x.astype(l1), w1.astype(l1), b1.astype(l1)
    h1 = xl[:, 0:1] * w1l[0:1, :] + xl[:, 1:2] * w1l[1:2, :] + b1l[None, :]
    h1 = jnp.maximum(h1, 0).astype(jnp.bfloat16)
    h2 = jnp.dot(h1, w2.astype(jnp.bfloat16), preferred_element_type=jnp.float32) + b2
    h2 = jnp.maximum(h2, 0.0).astype(jnp.bfloat16)
    y = jnp.dot(h2, w3.astype(jnp.bfloat16), preferred_element_type=jnp.float32) + b3
    return _head(y)


if __name__ == "__main__":
    key = jax.random.PRNGKey(0)
    kp, kx = jax.random.split(key)
    params = init_params(kp)

    B = 8
    x = jax.random.normal(kx, (B, STATE_DIM), dtype=jnp.float32)

    out = policy_net_forward(x, params)
    out = jax.block_until_ready(out)
    assert out.shape == (B, OUT)

    # Tight check vs. a precision-matched reference, loose check vs. pure f32
    # (layers 2/3 intentionally use bf16 inputs with f32 accumulation).
    ref_m = reference_forward_matched(x, params)
    ref_f = reference_forward_f32(x, params)
    assert jnp.allclose(out, ref_m, atol=5e-3, rtol=5e-3), "mismatch vs matched reference"
    assert jnp.allclose(out, ref_f, atol=5e-2, rtol=5e-2), "mismatch vs f32 reference"

    print("KERNEL_OK")
</pallas_src>

<mosaic_0001>
module attributes {stable_mosaic.version = 11 : i64} {
  func.func @policy_kernel(%arg0: i32, %arg1: memref<2x128xf32, #tpu.memory_space<vmem>>, %arg2: memref<512x2xf32, #tpu.memory_space<vmem>>, %arg3: memref<512x1xf32, #tpu.memory_space<vmem>>, %arg4: memref<256x512xbf16, #tpu.memory_space<vmem>>, %arg5: memref<256x1xf32, #tpu.memory_space<vmem>>, %arg6: memref<8x256xbf16, #tpu.memory_space<vmem>>, %arg7: memref<8x1xf32, #tpu.memory_space<vmem>>, %arg8: memref<2x128xf32, #tpu.memory_space<vmem>>) attributes {dimension_semantics = [#tpu.dimension_semantics<parallel>], iteration_bounds = array<i64: 1>, scalar_prefetch = 0 : i64, scratch_operands = 0 : i64, tpu.core_type = #tpu.core_type<tc>, window_params = [{transform_indices = @transform_0, window_bounds = array<i64: 2, 128>}, {pipeline_mode = #tpu.pipeline_mode<synchronous>, transform_indices = @transform_1, window_bounds = array<i64: 512, 2>}, {pipeline_mode = #tpu.pipeline_mode<synchronous>, transform_indices = @transform_2, window_bounds = array<i64: 512, 1>}, {pipeline_mode = #tpu.pipeline_mode<synchronous>, transform_indices = @transform_3, window_bounds = array<i64: 256, 512>}, {pipeline_mode = #tpu.pipeline_mode<synchronous>, transform_indices = @transform_4, window_bounds = array<i64: 256, 1>}, {pipeline_mode = #tpu.pipeline_mode<synchronous>, transform_indices = @transform_5, window_bounds = array<i64: 8, 256>}, {pipeline_mode = #tpu.pipeline_mode<synchronous>, transform_indices = @transform_6, window_bounds = array<i64: 8, 1>}, {transform_indices = @transform_7, window_bounds = array<i64: 2, 128>}]} {
    %c0 = arith.constant 0 : index
    %c0_0 = arith.constant 0 : index
    %0 = vector.load %arg1[%c0, %c0_0] : memref<2x128xf32, #tpu.memory_space<vmem>>, vector<2x128xf32>
    %1 = arith.truncf %0 : vector<2x128xf32> to vector<2x128xbf16>
    %c0_1 = arith.constant 0 : index
    %c0_2 = arith.constant 0 : index
    %2 = vector.load %arg2[%c0_1, %c0_2] : memref<512x2xf32, #tpu.memory_space<vmem>>, vector<512x2xf32>
    %3 = arith.truncf %2 : vector<512x2xf32> to vector<512x2xbf16>
    %c0_3 = arith.constant 0 : index
    %c0_4 = arith.constant 0 : index
    %4 = vector.load %arg3[%c0_3, %c0_4] : memref<512x1xf32, #tpu.memory_space<vmem>>, vector<512x1xf32>
    %5 = arith.truncf %4 : vector<512x1xf32> to vector<512x1xbf16>
    %6 = vector.extract_strided_slice %3 {offsets = [0, 0], sizes = [512, 1], strides = [1, 1]} : vector<512x2xbf16> to vector<512x1xbf16>
    %7 = vector.extract_strided_slice %1 {offsets = [0, 0], sizes = [1, 128], strides = [1, 1]} : vector<2x128xbf16> to vector<1x128xbf16>
    %8 = vector.broadcast %6 : vector<512x1xbf16> to vector<512x128xbf16>
    %9 = vector.broadcast %7 : vector<1x128xbf16> to vector<512x128xbf16>
    %10 = arith.mulf %8, %9 : vector<512x128xbf16>
    %11 = vector.extract_strided_slice %3 {offsets = [0, 1], sizes = [512, 1], strides = [1, 1]} : vector<512x2xbf16> to vector<512x1xbf16>
    %12 = vector.extract_strided_slice %1 {offsets = [1, 0], sizes = [1, 128], strides = [1, 1]} : vector<2x128xbf16> to vector<1x128xbf16>
    %13 = vector.broadcast %11 : vector<512x1xbf16> to vector<512x128xbf16>
    %14 = vector.broadcast %12 : vector<1x128xbf16> to vector<512x128xbf16>
    %15 = arith.mulf %13, %14 : vector<512x128xbf16>
    %16 = arith.addf %10, %15 : vector<512x128xbf16>
    %17 = vector.broadcast %5 : vector<512x1xbf16> to vector<512x128xbf16>
    %18 = arith.addf %16, %17 : vector<512x128xbf16>
    %cst = arith.constant 0.000000e+00 : bf16
    %19 = vector.broadcast %cst : bf16 to vector<512x128xbf16>
    %20 = arith.maximumf %18, %19 : vector<512x128xbf16>
    %c0_5 = arith.constant 0 : index
    %c0_6 = arith.constant 0 : index
    %21 = vector.load %arg4[%c0_5, %c0_6] : memref<256x512xbf16, #tpu.memory_space<vmem>>, vector<256x512xbf16>
    %cst_7 = arith.constant dense<0.000000e+00> : vector<256x128xf32>
    %22 = tpu.matmul %21, %20, %cst_7 {dimension_numbers = #tpu.dot_dimension_numbers<[1], [0], [0], [1], [0, 0, 1, 1], [], []>} : vector<256x512xbf16>, vector<512x128xbf16>, vector<256x128xf32> -> vector<256x128xf32>
    %c0_8 = arith.constant 0 : index
    %c0_9 = arith.constant 0 : index
    %23 = vector.load %arg5[%c0_8, %c0_9] : memref<256x1xf32, #tpu.memory_space<vmem>>, vector<256x1xf32>
    %24 = vector.broadcast %23 : vector<256x1xf32> to vector<256x128xf32>
    %25 = arith.addf %22, %24 : vector<256x128xf32>
    %cst_10 = arith.constant 0.000000e+00 : f32
    %26 = vector.broadcast %cst_10 : f32 to vector<256x128xf32>
    %27 = arith.maximumf %25, %26 : vector<256x128xf32>
    %28 = arith.truncf %27 : vector<256x128xf32> to vector<256x128xbf16>
    %c0_11 = arith.constant 0 : index
    %c0_12 = arith.constant 0 : index
    %29 = vector.load %arg6[%c0_11, %c0_12] : memref<8x256xbf16, #tpu.memory_space<vmem>>, vector<8x256xbf16>
    %cst_13 = arith.constant dense<0.000000e+00> : vector<8x128xf32>
    %30 = tpu.matmul %29, %28, %cst_13 {dimension_numbers = #tpu.dot_dimension_numbers<[1], [0], [0], [1], [0, 0, 1, 1], [], []>} : vector<8x256xbf16>, vector<256x128xbf16>, vector<8x128xf32> -> vector<8x128xf32>
    %c0_14 = arith.constant 0 : index
    %c0_15 = arith.constant 0 : index
    %31 = vector.load %arg7[%c0_14, %c0_15] : memref<8x1xf32, #tpu.memory_space<vmem>>, vector<8x1xf32>
    %32 = vector.broadcast %31 : vector<8x1xf32> to vector<8x128xf32>
    %33 = arith.addf %30, %32 : vector<8x128xf32>
    %34 = vector.extract_strided_slice %33 {offsets = [0, 0], sizes = [2, 128], strides = [1, 1]} : vector<8x128xf32> to vector<2x128xf32>
    %35 = vector.extract_strided_slice %34 {offsets = [0, 0], sizes = [1, 128], strides = [1, 1]} : vector<2x128xf32> to vector<1x128xf32>
    %36 = vector.extract_strided_slice %34 {offsets = [1, 0], sizes = [1, 128], strides = [1, 1]} : vector<2x128xf32> to vector<1x128xf32>
    %cst_16 = arith.constant 2.000000e+01 : f32
    %37 = vector.broadcast %cst_16 : f32 to vector<1x128xf32>
    %38 = arith.cmpf ogt, %36, %37 : vector<1x128xf32>
    %cst_17 = arith.constant 2.000000e+01 : f32
    %39 = vector.broadcast %cst_17 : f32 to vector<1x128xf32>
    %40 = arith.minimumf %36, %39 : vector<1x128xf32>
    %41 = math.exp %40 : vector<1x128xf32>
    %42 = math.log1p %41 : vector<1x128xf32>
    %43 = arith.select %38, %36, %42 : vector<1x128xi1>, vector<1x128xf32>
    %cst_18 = arith.constant 9.99999974E-6 : f32
    %44 = vector.broadcast %cst_18 : f32 to vector<1x128xf32>
    %45 = arith.addf %43, %44 : vector<1x128xf32>
    %46 = tpu.concatenate %35, %45 in 0 : vector<1x128xf32>, vector<1x128xf32> -> vector<2x128xf32>
    %c0_19 = arith.constant 0 : index
    %c0_20 = arith.constant 0 : index
    %47 = vector.load %arg8[%c0_19, %c0_20] : memref<2x128xf32, #tpu.memory_space<vmem>>, vector<2x128xf32>
    tpu.vector_store %arg8[%c0_19, %c0_20], %46 {strides = array<i32>} : memref<2x128xf32, #tpu.memory_space<vmem>>, vector<2x128xf32>,
    return
  }
  func.func @transform_0(%arg0: i32) -> (i32, i32) {
    %c0_i32 = arith.constant 0 : i32
    %c0_i32_0 = arith.constant 0 : i32
    return %c0_i32, %arg0 : i32, i32
  }
  func.func @transform_1(%arg0: i32) -> (i32, i32) {
    %c0_i32 = arith.constant 0 : i32
    %c0_i32_0 = arith.constant 0 : i32
    %c0_i32_1 = arith.constant 0 : i32
    return %c0_i32, %c0_i32_0 : i32, i32
  }
  func.func @transform_2(%arg0: i32) -> (i32, i32) {
    %c0_i32 = arith.constant 0 : i32
    %c0_i32_0 = arith.constant 0 : i32
    %c0_i32_1 = arith.constant 0 : i32
    return %c0_i32, %c0_i32_0 : i32, i32
  }
  func.func @transform_3(%arg0: i32) -> (i32, i32) {
    %c0_i32 = arith.constant 0 : i32
    %c0_i32_0 = arith.constant 0 : i32
    %c0_i32_1 = arith.constant 0 : i32
    return %c0_i32, %c0_i32_0 : i32, i32
  }
  func.func @transform_4(%arg0: i32) -> (i32, i32) {
    %c0_i32 = arith.constant 0 : i32
    %c0_i32_0 = arith.constant 0 : i32
    %c0_i32_1 = arith.constant 0 : i32
    return %c0_i32, %c0_i32_0 : i32, i32
  }
  func.func @transform_5(%arg0: i32) -> (i32, i32) {
    %c0_i32 = arith.constant 0 : i32
    %c0_i32_0 = arith.constant 0 : i32
    %c0_i32_1 = arith.constant 0 : i32
    return %c0_i32, %c0_i32_0 : i32, i32
  }
  func.func @transform_6(%arg0: i32) -> (i32, i32) {
    %c0_i32 = arith.constant 0 : i32
    %c0_i32_0 = arith.constant 0 : i32
    %c0_i32_1 = arith.constant 0 : i32
    return %c0_i32, %c0_i32_0 : i32, i32
  }
  func.func @transform_7(%arg0: i32) -> (i32, i32) {
    %c0_i32 = arith.constant 0 : i32
    %c0_i32_0 = arith.constant 0 : i32
    return %c0_i32, %arg0 : i32, i32
  }
}

</mosaic_0001>

<llo_original>
// kernel: tpu_custom_call.1
$region0: #{tpu_custom_call.1}
  #allocation0 [shape = 'u32[]', space=smem, size = 0x4, offset = 0x4, fixed_abs, tag = 'smem constant byte address 0x4 - core index']
  #allocation1 [shape = 'u32[72,128]{1,0:T(1,128)}', space=vmem, size = 0x9000, scoped, tag = 'internal scratch']
  %s0 = inlined_call_operand.vmem [shape: f32[2,128], index: 0, kind: input, shape index: {}]
  %s1 = inlined_call_operand.vmem [shape: f32[512,2], index: 1, kind: input, shape index: {}]
  %s2 = inlined_call_operand.vmem [shape: f32[512,1], index: 2, kind: input, shape index: {}]
  %s3 = inlined_call_operand.vmem [shape: bf16[256,512], index: 3, kind: input, shape index: {}]
  %s4 = inlined_call_operand.vmem [shape: f32[256,1], index: 4, kind: input, shape index: {}]
  %s5 = inlined_call_operand.vmem [shape: bf16[8,256], index: 5, kind: input, shape index: {}]
  %s6 = inlined_call_operand.vmem [shape: f32[8,1], index: 6, kind: input, shape index: {}]
  %s7 = inlined_call_operand.hbm [shape: f32[2,128], index: 7, kind: output, shape index: {}]
  %s8 = sld [smem:[#allocation0]]
  $region38: #{tpu_custom_call.1} parent=0
    _
  %s10 = ssub.s32 1, %s8
  %s11 = scalar_select 0, %s10, %s8
  $region1: #{tpu_custom_call.1} parent=0
    #allocation2 [shape = 'u8[1024]{0}', space=vmem, size = 0x400, scoped, tag = 'output window, operand 0, single buffered']
    #allocation3 [shape = 's32[1]{0}', space=sflag, size = 0x4, scoped, tag = 'scoped memory for tpu_custom_call.1']
    %12 = vsyncpa [#allocation3], 0
    // Predicated region
    $region2: #{tpu_custom_call.1} parent=1 // pred_check
      _
    $region3: #{tpu_custom_call.1} parent=1 // pred_check_branch
      %14 = sbr.rel (0) target = $region5
    $region4: #{tpu_custom_call.1} parent=1 // pred_region
      _
    $region5: #{tpu_custom_call.1} parent=1 // pred_fallthru
      _
    // Predicated region
    $region6: #{tpu_custom_call.1} parent=1 // pred_check
      _
    $region7: #{tpu_custom_call.1} parent=1 // pred_check_branch
      %16 = sbr.rel (0) target = $region9
    $region8: #{tpu_custom_call.1} parent=1 // pred_region
      _
    $region9: #{tpu_custom_call.1} parent=1 // pred_fallthru
      _
    // Predicated region
    $region10: #{tpu_custom_call.1} parent=1 // pred_check
      _
    $region11: #{tpu_custom_call.1} parent=1 // pred_check_branch
      %18 = sbr.rel (0) target = $region13
    $region12: #{tpu_custom_call.1} parent=1 // pred_region
      _
    $region13: #{tpu_custom_call.1} parent=1 // pred_fallthru
      _
    // Predicated region
    $region14: #{tpu_custom_call.1} parent=1 // pred_check
      _
    $region15: #{tpu_custom_call.1} parent=1 // pred_check_branch
      %20 = sbr.rel (0) target = $region17
    $region16: #{tpu_custom_call.1} parent=1 // pred_region
      _
    $region17: #{tpu_custom_call.1} parent=1 // pred_fallthru
      _
    // Predicated region
    $region18: #{tpu_custom_call.1} parent=1 // pred_check
      _
    $region19: #{tpu_custom_call.1} parent=1 // pred_check_branch
      %22 = sbr.rel (0) target = $region21
    $region20: #{tpu_custom_call.1} parent=1 // pred_region
      _
    $region21: #{tpu_custom_call.1} parent=1 // pred_fallthru
      _
    // Predicated region
    $region22: #{tpu_custom_call.1} parent=1 // pred_check
      _
    $region23: #{tpu_custom_call.1} parent=1 // pred_check_branch
      %24 = sbr.rel (0) target = $region25
    $region24: #{tpu_custom_call.1} parent=1 // pred_region
      _
    $region25: #{tpu_custom_call.1} parent=1 // pred_fallthru
      _
    // Predicated region
    $region26: #{tpu_custom_call.1} parent=1 // pred_check
      _
    $region27: #{tpu_custom_call.1} parent=1 // pred_check_branch
      %26 = sbr.rel (0) target = $region29
    $region28: #{tpu_custom_call.1} parent=1 // pred_region
      _
    $region29: #{tpu_custom_call.1} parent=1 // pred_fallthru
      _
    %v27 = vld [vmem:[%s0] sm:$0x3]
    %v28 = vpack.c.bf16 %v27, %v27
    %v29 = vld [vmem:[%s1] sm:$0xff]
    %v30 = vld [vmem:[%s1 + $0x8] sm:$0xff]
    %v31 = vld [vmem:[%s1 + $0x10] sm:$0xff]
    %v32 = vld [vmem:[%s1 + $0x18] sm:$0xff]
    %v33 = vld [vmem:[%s1 + $0x20] sm:$0xff]
    %v34 = vld [vmem:[%s1 + $0x28] sm:$0xff]
    %v35 = vld [vmem:[%s1 + $0x30] sm:$0xff]
    %v36 = vld [vmem:[%s1 + $0x38] sm:$0xff]
    %v37 = vld [vmem:[%s1 + $0x40] sm:$0xff]
    %v38 = vld [vmem:[%s1 + $0x48] sm:$0xff]
    %v39 = vld [vmem:[%s1 + $0x50] sm:$0xff]
    %v40 = vld [vmem:[%s1 + $0x58] sm:$0xff]
    %v41 = vld [vmem:[%s1 + $0x60] sm:$0xff]
    %v42 = vld [vmem:[%s1 + $0x68] sm:$0xff]
    %v43 = vld [vmem:[%s1 + $0x70] sm:$0xff]
    %v44 = vld [vmem:[%s1 + $0x78] sm:$0xff]
    %v45 = vld [vmem:[%s1 + $0x80] sm:$0xff]
    %v46 = vld [vmem:[%s1 + $0x88] sm:$0xff]
    %v47 = vld [vmem:[%s1 + $0x90] sm:$0xff]
    %v48 = vld [vmem:[%s1 + $0x98] sm:$0xff]
    %v49 = vld [vmem:[%s1 + $0xa0] sm:$0xff]
    %v50 = vld [vmem:[%s1 + $0xa8] sm:$0xff]
    %v51 = vld [vmem:[%s1 + $0xb0] sm:$0xff]
    %v52 = vld [vmem:[%s1 + $0xb8] sm:$0xff]
    %v53 = vld [vmem:[%s1 + $0xc0] sm:$0xff]
    %v54 = vld [vmem:[%s1 + $0xc8] sm:$0xff]
    %v55 = vld [vmem:[%s1 + $0xd0] sm:$0xff]
    %v56 = vld [vmem:[%s1 + $0xd8] sm:$0xff]
    %v57 = vld [vmem:[%s1 + $0xe0] sm:$0xff]
    %v58 = vld [vmem:[%s1 + $0xe8] sm:$0xff]
    %v59 = vld [vmem:[%s1 + $0xf0] sm:$0xff]
    %v60 = vld [vmem:[%s1 + $0xf8] sm:$0xff]
    %v61 = vld [vmem:[%s1 + $0x100] sm:$0xff]
    %v62 = vld [vmem:[%s1 + $0x108] sm:$0xff]
    %v63 = vld [vmem:[%s1 + $0x110] sm:$0xff]
    %v64 = vld [vmem:[%s1 + $0x118] sm:$0xff]
    %v65 = vld [vmem:[%s1 + $0x120] sm:$0xff]
    %v66 = vld [vmem:[%s1 + $0x128] sm:$0xff]
    %v67 = vld [vmem:[%s1 + $0x130] sm:$0xff]
    %v68 = vld [vmem:[%s1 + $0x138] sm:$0xff]
    %v69 = vld [vmem:[%s1 + $0x140] sm:$0xff]
    %v70 = vld [vmem:[%s1 + $0x148] sm:$0xff]
    %v71 = vld [vmem:[%s1 + $0x150] sm:$0xff]
    %v72 = vld [vmem:[%s1 + $0x158] sm:$0xff]
    %v73 = vld [vmem:[%s1 + $0x160] sm:$0xff]
    %v74 = vld [vmem:[%s1 + $0x168] sm:$0xff]
    %v75 = vld [vmem:[%s1 + $0x170] sm:$0xff]
    %v76 = vld [vmem:[%s1 + $0x178] sm:$0xff]
    %v77 = vld [vmem:[%s1 + $0x180] sm:$0xff]
    %v78 = vld [vmem:[%s1 + $0x188] sm:$0xff]
    %v79 = vld [vmem:[%s1 + $0x190] sm:$0xff]
    %v80 = vld [vmem:[%s1 + $0x198] sm:$0xff]
    %v81 = vld [vmem:[%s1 + $0x1a0] sm:$0xff]
    %v82 = vld [vmem:[%s1 + $0x1a8] sm:$0xff]
    %v83 = vld [vmem:[%s1 + $0x1b0] sm:$0xff]
    %v84 = vld [vmem:[%s1 + $0x1b8] sm:$0xff]
    %v85 = vld [vmem:[%s1 + $0x1c0] sm:$0xff]
    %v86 = vld [vmem:[%s1 + $0x1c8] sm:$0xff]
    %v87 = vld [vmem:[%s1 + $0x1d0] sm:$0xff]
    %v88 = vld [vmem:[%s1 + $0x1d8] sm:$0xff]
    %v89 = vld [vmem:[%s1 + $0x1e0] sm:$0xff]
    %v90 = vld [vmem:[%s1 + $0x1e8] sm:$0xff]
    %v91 = vld [vmem:[%s1 + $0x1f0] sm:$0xff]
    %v92 = vld [vmem:[%s1 + $0x1f8] sm:$0xff]
    %v93 = vpack.c.bf16 %v29, %v29
    %v94 = vpack.c.bf16 %v30, %v30
    %v95 = vpack.c.bf16 %v31, %v31
    %v96 = vpack.c.bf16 %v32, %v32
    %v97 = vpack.c.bf16 %v33, %v33
    %v98 = vpack.c.bf16 %v34, %v34
    %v99 = vpack.c.bf16 %v35, %v35
    %v100 = vpack.c.bf16 %v36, %v36
    %v101 = vpack.c.bf16 %v37, %v37
    %v102 = vpack.c.bf16 %v38, %v38
    %v103 = vpack.c.bf16 %v39, %v39
    %v104 = vpack.c.bf16 %v40, %v40
    %v105 = vpack.c.bf16 %v41, %v41
    %v106 = vpack.c.bf16 %v42, %v42
    %v107 = vpack.c.bf16 %v43, %v43
    %v108 = vpack.c.bf16 %v44, %v44
    %v109 = vpack.c.bf16 %v45, %v45
    %v110 = vpack.c.bf16 %v46, %v46
    %v111 = vpack.c.bf16 %v47, %v47
    %v112 = vpack.c.bf16 %v48, %v48
    %v113 = vpack.c.bf16 %v49, %v49
    %v114 = vpack.c.bf16 %v50, %v50
    %v115 = vpack.c.bf16 %v51, %v51
    %v116 = vpack.c.bf16 %v52, %v52
    %v117 = vpack.c.bf16 %v53, %v53
    %v118 = vpack.c.bf16 %v54, %v54
    %v119 = vpack.c.bf16 %v55, %v55
    %v120 = vpack.c.bf16 %v56, %v56
    %v121 = vpack.c.bf16 %v57, %v57
    %v122 = vpack.c.bf16 %v58, %v58
    %v123 = vpack.c.bf16 %v59, %v59
    %v124 = vpack.c.bf16 %v60, %v60
    %v125 = vpack.c.bf16 %v61, %v61
    %v126 = vpack.c.bf16 %v62, %v62
    %v127 = vpack.c.bf16 %v63, %v63
    %v128 = vpack.c.bf16 %v64, %v64
    %v129 = vpack.c.bf16 %v65, %v65
    %v130 = vpack.c.bf16 %v66, %v66
    %v131 = vpack.c.bf16 %v67, %v67
    %v132 = vpack.c.bf16 %v68, %v68
    %v133 = vpack.c.bf16 %v69, %v69
    %v134 = vpack.c.bf16 %v70, %v70
    %v135 = vpack.c.bf16 %v71, %v71
    %v136 = vpack.c.bf16 %v72, %v72
    %v137 = vpack.c.bf16 %v73, %v73
    %v138 = vpack.c.bf16 %v74, %v74
    %v139 = vpack.c.bf16 %v75, %v75
    %v140 = vpack.c.bf16 %v76, %v76
    %v141 = vpack.c.bf16 %v77, %v77
    %v142 = vpack.c.bf16 %v78, %v78
    %v143 = vpack.c.bf16 %v79, %v79
    %v144 = vpack.c.bf16 %v80, %v80
    %v145 = vpack.c.bf16 %v81, %v81
    %v146 = vpack.c.bf16 %v82, %v82
    %v147 = vpack.c.bf16 %v83, %v83
    %v148 = vpack.c.bf16 %v84, %v84
    %v149 = vpack.c.bf16 %v85, %v85
    %v150 = vpack.c.bf16 %v86, %v86
    %v151 = vpack.c.bf16 %v87, %v87
    %v152 = vpack.c.bf16 %v88, %v88
    %v153 = vpack.c.bf16 %v89, %v89
    %v154 = vpack.c.bf16 %v90, %v90
    %v155 = vpack.c.bf16 %v91, %v91
    %v156 = vpack.c.bf16 %v92, %v92
    %v157 = vld [vmem:[%s2] sm:$0xff]
    %v158 = vld [vmem:[%s2 + $0x8] sm:$0xff]
    %v159 = vld [vmem:[%s2 + $0x10] sm:$0xff]
    %v160 = vld [vmem:[%s2 + $0x18] sm:$0xff]
    %v161 = vld [vmem:[%s2 + $0x20] sm:$0xff]
    %v162 = vld [vmem:[%s2 + $0x28] sm:$0xff]
    %v163 = vld [vmem:[%s2 + $0x30] sm:$0xff]
    %v164 = vld [vmem:[%s2 + $0x38] sm:$0xff]
    %v165 = vld [vmem:[%s2 + $0x40] sm:$0xff]
    %v166 = vld [vmem:[%s2 + $0x48] sm:$0xff]
    %v167 = vld [vmem:[%s2 + $0x50] sm:$0xff]
    %v168 = vld [vmem:[%s2 + $0x58] sm:$0xff]
    %v169 = vld [vmem:[%s2 + $0x60] sm:$0xff]
    %v170 = vld [vmem:[%s2 + $0x68] sm:$0xff]
    %v171 = vld [vmem:[%s2 + $0x70] sm:$0xff]
    %v172 = vld [vmem:[%s2 + $0x78] sm:$0xff]
    %v173 = vld [vmem:[%s2 + $0x80] sm:$0xff]
    %v174 = vld [vmem:[%s2 + $0x88] sm:$0xff]
    %v175 = vld [vmem:[%s2 + $0x90] sm:$0xff]
    %v176 = vld [vmem:[%s2 + $0x98] sm:$0xff]
    %v177 = vld [vmem:[%s2 + $0xa0] sm:$0xff]
    %v178 = vld [vmem:[%s2 + $0xa8] sm:$0xff]
    %v179 = vld [vmem:[%s2 + $0xb0] sm:$0xff]
    %v180 = vld [vmem:[%s2 + $0xb8] sm:$0xff]
    %v181 = vld [vmem:[%s2 + $0xc0] sm:$0xff]
    %v182 = vld [vmem:[%s2 + $0xc8] sm:$0xff]
    %v183 = vld [vmem:[%s2 + $0xd0] sm:$0xff]
    %v184 = vld [vmem:[%s2 + $0xd8] sm:$0xff]
    %v185 = vld [vmem:[%s2 + $0xe0] sm:$0xff]
    %v186 = vld [vmem:[%s2 + $0xe8] sm:$0xff]
    %v187 = vld [vmem:[%s2 + $0xf0] sm:$0xff]
    %v188 = vld [vmem:[%s2 + $0xf8] sm:$0xff]
    %v189 = vld [vmem:[%s2 + $0x100] sm:$0xff]
    %v190 = vld [vmem:[%s2 + $0x108] sm:$0xff]
    %v191 = vld [vmem:[%s2 + $0x110] sm:$0xff]
    %v192 = vld [vmem:[%s2 + $0x118] sm:$0xff]
    %v193 = vld [vmem:[%s2 + $0x120] sm:$0xff]
    %v194 = vld [vmem:[%s2 + $0x128] sm:$0xff]
    %v195 = vld [vmem:[%s2 + $0x130] sm:$0xff]
    %v196 = vld [vmem:[%s2 + $0x138] sm:$0xff]
    %v197 = vld [vmem:[%s2 + $0x140] sm:$0xff]
    %v198 = vld [vmem:[%s2 + $0x148] sm:$0xff]
    %v199 = vld [vmem:[%s2 + $0x150] sm:$0xff]
    %v200 = vld [vmem:[%s2 + $0x158] sm:$0xff]
    %v201 = vld [vmem:[%s2 + $0x160] sm:$0xff]
    %v202 = vld [vmem:[%s2 + $0x168] sm:$0xff]
    %v203 = vld [vmem:[%s2 + $0x170] sm:$0xff]
    %v204 = vld [vmem:[%s2 + $0x178] sm:$0xff]
    %v205 = vld [vmem:[%s2 + $0x180] sm:$0xff]
    %v206 = vld [vmem:[%s2 + $0x188] sm:$0xff]
    %v207 = vld [vmem:[%s2 + $0x190] sm:$0xff]
    %v208 = vld [vmem:[%s2 + $0x198] sm:$0xff]
    %v209 = vld [vmem:[%s2 + $0x1a0] sm:$0xff]
    %v210 = vld [vmem:[%s2 + $0x1a8] sm:$0xff]
    %v211 = vld [vmem:[%s2 + $0x1b0] sm:$0xff]
    %v212 = vld [vmem:[%s2 + $0x1b8] sm:$0xff]
    %v213 = vld [vmem:[%s2 + $0x1c0] sm:$0xff]
    %v214 = vld [vmem:[%s2 + $0x1c8] sm:$0xff]
    %v215 = vld [vmem:[%s2 + $0x1d0] sm:$0xff]
    %v216 = vld [vmem:[%s2 + $0x1d8] sm:$0xff]
    %v217 = vld [vmem:[%s2 + $0x1e0] sm:$0xff]
    %v218 = vld [vmem:[%s2 + $0x1e8] sm:$0xff]
    %v219 = vld [vmem:[%s2 + $0x1f0] sm:$0xff]
    %v220 = vld [vmem:[%s2 + $0x1f8] sm:$0xff]
    %v221 = vpack.c.bf16 %v157, %v157
    %v222 = vpack.c.bf16 %v158, %v158
    %v223 = vpack.c.bf16 %v159, %v159
    %v224 = vpack.c.bf16 %v160, %v160
    %v225 = vpack.c.bf16 %v161, %v161
    %v226 = vpack.c.bf16 %v162, %v162
    %v227 = vpack.c.bf16 %v163, %v163
    %v228 = vpack.c.bf16 %v164, %v164
    %v229 = vpack.c.bf16 %v165, %v165
    %v230 = vpack.c.bf16 %v166, %v166
    %v231 = vpack.c.bf16 %v167, %v167
    %v232 = vpack.c.bf16 %v168, %v168
    %v233 = vpack.c.bf16 %v169, %v169
    %v234 = vpack.c.bf16 %v170, %v170
    %v235 = vpack.c.bf16 %v171, %v171
    %v236 = vpack.c.bf16 %v172, %v172
    %v237 = vpack.c.bf16 %v173, %v173
    %v238 = vpack.c.bf16 %v174, %v174
    %v239 = vpack.c.bf16 %v175, %v175
    %v240 = vpack.c.bf16 %v176, %v176
    %v241 = vpack.c.bf16 %v177, %v177
    %v242 = vpack.c.bf16 %v178, %v178
    %v243 = vpack.c.bf16 %v179, %v179
    %v244 = vpack.c.bf16 %v180, %v180
    %v245 = vpack.c.bf16 %v181, %v181
    %v246 = vpack.c.bf16 %v182, %v182
    %v247 = vpack.c.bf16 %v183, %v183
    %v248 = vpack.c.bf16 %v184, %v184
    %v249 = vpack.c.bf16 %v185, %v185
    %v250 = vpack.c.bf16 %v186, %v186
    %v251 = vpack.c.bf16 %v187, %v187
    %v252 = vpack.c.bf16 %v188, %v188
    %v253 = vpack.c.bf16 %v189, %v189
    %v254 = vpack.c.bf16 %v190, %v190
    %v255 = vpack.c.bf16 %v191, %v191
    %v256 = vpack.c.bf16 %v192, %v192
    %v257 = vpack.c.bf16 %v193, %v193
    %v258 = vpack.c.bf16 %v194, %v194
    %v259 = vpack.c.bf16 %v195, %v195
    %v260 = vpack.c.bf16 %v196, %v196
    %v261 = vpack.c.bf16 %v197, %v197
    %v262 = vpack.c.bf16 %v198, %v198
    %v263 = vpack.c.bf16 %v199, %v199
    %v264 = vpack.c.bf16 %v200, %v200
    %v265 = vpack.c.bf16 %v201, %v201
    %v266 = vpack.c.bf16 %v202, %v202
    %v267 = vpack.c.bf16 %v203, %v203
    %v268 = vpack.c.bf16 %v204, %v204
    %v269 = vpack.c.bf16 %v205, %v205
    %v270 = vpack.c.bf16 %v206, %v206
    %v271 = vpack.c.bf16 %v207, %v207
    %v272 = vpack.c.bf16 %v208, %v208
    %v273 = vpack.c.bf16 %v209, %v209
    %v274 = vpack.c.bf16 %v210, %v210
    %v275 = vpack.c.bf16 %v211, %v211
    %v276 = vpack.c.bf16 %v212, %v212
    %v277 = vpack.c.bf16 %v213, %v213
    %v278 = vpack.c.bf16 %v214, %v214
    %v279 = vpack.c.bf16 %v215, %v215
    %v280 = vpack.c.bf16 %v216, %v216
    %v281 = vpack.c.bf16 %v217, %v217
    %v282 = vpack.c.bf16 %v218, %v218
    %v283 = vpack.c.bf16 %v219, %v219
    %v284 = vpack.c.bf16 %v220, %v220
    %286 = vset.pattern.permute.xlu0 0
    %287 = vperm.xlu0 %286, %v93
    %v288 = vpop.permute.xlu0 %287
    %v291 = vunpack.c.l.s4 839922192
    %v292 = vunpack.c.0.s8 %v291
    %v293 = vperm.slane %v288, %v292
    %295 = vset.pattern.permute.xlu0 0
    %296 = vperm.xlu0 %295, %v94
    %v297 = vpop.permute.xlu0 %296
    %v300 = vunpack.c.l.s4 839922192
    %v301 = vunpack.c.0.s8 %v300
    %v302 = vperm.slane %v297, %v301
    %304 = vset.pattern.permute.xlu0 0
    %305 = vperm.xlu0 %304, %v95
    %v306 = vpop.permute.xlu0 %305
    %v309 = vunpack.c.l.s4 839922192
    %v310 = vunpack.c.0.s8 %v309
    %v311 = vperm.slane %v306, %v310
    %313 = vset.pattern.permute.xlu0 0
    %314 = vperm.xlu0 %313, %v96
    %v315 = vpop.permute.xlu0 %314
    %v318 = vunpack.c.l.s4 839922192
    %v319 = vunpack.c.0.s8 %v318
    %v320 = vperm.slane %v315, %v319
    %322 = vset.pattern.permute.xlu0 0
    %323 = vperm.xlu0 %322, %v97
    %v324 = vpop.permute.xlu0 %323
    %v327 = vunpack.c.l.s4 839922192
    %v328 = vunpack.c.0.s8 %v327
    %v329 = vperm.slane %v324, %v328
    %331 = vset.pattern.permute.xlu0 0
    %332 = vperm.xlu0 %331, %v98
    %v333 = vpop.permute.xlu0 %332
    %v336 = vunpack.c.l.s4 839922192
    %v337 = vunpack.c.0.s8 %v336
    %v338 = vperm.slane %v333, %v337
    %340 = vset.pattern.permute.xlu0 0
    %341 = vperm.xlu0 %340, %v99
    %v342 = vpop.permute.xlu0 %341
    %v345 = vunpack.c.l.s4 839922192
    %v346 = vunpack.c.0.s8 %v345
    %v347 = vperm.slane %v342, %v346
    %349 = vset.pattern.permute.xlu0 0
    %350 = vperm.xlu0 %349, %v100
    %v351 = vpop.permute.xlu0 %350
    %v354 = vunpack.c.l.s4 839922192
    %v355 = vunpack.c.0.s8 %v354
    %v356 = vperm.slane %v351, %v355
    %358 = vset.pattern.permute.xlu0 0
    %359 = vperm.xlu0 %358, %v101
    %v360 = vpop.permute.xlu0 %359
    %v363 = vunpack.c.l.s4 839922192
    %v364 = vunpack.c.0.s8 %v363
    %v365 = vperm.slane %v360, %v364
    %367 = vset.pattern.permute.xlu0 0
    %368 = vperm.xlu0 %367, %v102
    %v369 = vpop.permute.xlu0 %368
    %v372 = vunpack.c.l.s4 839922192
    %v373 = vunpack.c.0.s8 %v372
    %v374 = vperm.slane %v369, %v373
    %376 = vset.pattern.permute.xlu0 0
    %377 = vperm.xlu0 %376, %v103
    %v378 = vpop.permute.xlu0 %377
    %v381 = vunpack.c.l.s4 839922192
    %v382 = vunpack.c.0.s8 %v381
    %v383 = vperm.slane %v378, %v382
    %385 = vset.pattern.permute.xlu0 0
    %386 = vperm.xlu0 %385, %v104
    %v387 = vpop.permute.xlu0 %386
    %v390 = vunpack.c.l.s4 839922192
    %v391 = vunpack.c.0.s8 %v390
    %v392 = vperm.slane %v387, %v391
    %394 = vset.pattern.permute.xlu0 0
    %395 = vperm.xlu0 %394, %v105
    %v396 = vpop.permute.xlu0 %395
    %v399 = vunpack.c.l.s4 839922192
    %v400 = vunpack.c.0.s8 %v399
    %v401 = vperm.slane %v396, %v400
    %403 = vset.pattern.permute.xlu0 0
    %404 = vperm.xlu0 %403, %v106
    %v405 = vpop.permute.xlu0 %404
    %v408 = vunpack.c.l.s4 839922192
    %v409 = vunpack.c.0.s8 %v408
    %v410 = vperm.slane %v405, %v409
    %412 = vset.pattern.permute.xlu0 0
    %413 = vperm.xlu0 %412, %v107
    %v414 = vpop.permute.xlu0 %413
    %v417 = vunpack.c.l.s4 839922192
    %v418 = vunpack.c.0.s8 %v417
    %v419 = vperm.slane %v414, %v418
    %421 = vset.pattern.permute.xlu0 0
    %422 = vperm.xlu0 %421, %v108
    %v423 = vpop.permute.xlu0 %422
    %v426 = vunpack.c.l.s4 839922192
    %v427 = vunpack.c.0.s8 %v426
    %v428 = vperm.slane %v423, %v427
    %430 = vset.pattern.permute.xlu0 0
    %431 = vperm.xlu0 %430, %v109
    %v432 = vpop.permute.xlu0 %431
    %v435 = vunpack.c.l.s4 839922192
    %v436 = vunpack.c.0.s8 %v435
    %v437 = vperm.slane %v432, %v436
    %439 = vset.pattern.permute.xlu0 0
    %440 = vperm.xlu0 %439, %v110
    %v441 = vpop.permute.xlu0 %440
    %v444 = vunpack.c.l.s4 839922192
    %v445 = vunpack.c.0.s8 %v444
    %v446 = vperm.slane %v441, %v445
    %448 = vset.pattern.permute.xlu0 0
    %449 = vperm.xlu0 %448, %v111
    %v450 = vpop.permute.xlu0 %449
    %v453 = vunpack.c.l.s4 839922192
    %v454 = vunpack.c.0.s8 %v453
    %v455 = vperm.slane %v450, %v454
    %457 = vset.pattern.permute.xlu0 0
    %458 = vperm.xlu0 %457, %v112
    %v459 = vpop.permute.xlu0 %458
    %v462 = vunpack.c.l.s4 839922192
    %v463 = vunpack.c.0.s8 %v462
    %v464 = vperm.slane %v459, %v463
    %466 = vset.pattern.permute.xlu0 0
    %467 = vperm.xlu0 %466, %v113
    %v468 = vpop.permute.xlu0 %467
    %v471 = vunpack.c.l.s4 839922192
    %v472 = vunpack.c.0.s8 %v471
    %v473 = vperm.slane %v468, %v472
    %475 = vset.pattern.permute.xlu0 0
    %476 = vperm.xlu0 %475, %v114
    %v477 = vpop.permute.xlu0 %476
    %v480 = vunpack.c.l.s4 839922192
    %v481 = vunpack.c.0.s8 %v480
    %v482 = vperm.slane %v477, %v481
    %484 = vset.pattern.permute.xlu0 0
    %485 = vperm.xlu0 %484, %v115
    %v486 = vpop.permute.xlu0 %485
    %v489 = vunpack.c.l.s4 839922192
    %v490 = vunpack.c.0.s8 %v489
    %v491 = vperm.slane %v486, %v490
    %493 = vset.pattern.permute.xlu0 0
    %494 = vperm.xlu0 %493, %v116
    %v495 = vpop.permute.xlu0 %494
    %v498 = vunpack.c.l.s4 839922192
    %v499 = vunpack.c.0.s8 %v498
    %v500 = vperm.slane %v495, %v499
    %502 = vset.pattern.permute.xlu0 0
    %503 = vperm.xlu0 %502, %v117
    %v504 = vpop.permute.xlu0 %503
    %v507 = vunpack.c.l.s4 839922192
    %v508 = vunpack.c.0.s8 %v507
    %v509 = vperm.slane %v504, %v508
    %511 = vset.pattern.permute.xlu0 0
    %512 = vperm.xlu0 %511, %v118
    %v513 = vpop.permute.xlu0 %512
    %v516 = vunpack.c.l.s4 839922192
    %v517 = vunpack.c.0.s8 %v516
    %v518 = vperm.slane %v513, %v517
    %520 = vset.pattern.permute.xlu0 0
    %521 = vperm.xlu0 %520, %v119
    %v522 = vpop.permute.xlu0 %521
    %v525 = vunpack.c.l.s4 839922192
    %v526 = vunpack.c.0.s8 %v525
    %v527 = vperm.slane %v522, %v526
    %529 = vset.pattern.permute.xlu0 0
    %530 = vperm.xlu0 %529, %v120
    %v531 = vpop.permute.xlu0 %530
    %v534 = vunpack.c.l.s4 839922192
    %v535 = vunpack.c.0.s8 %v534
    %v536 = vperm.slane %v531, %v535
    %538 = vset.pattern.permute.xlu0 0
    %539 = vperm.xlu0 %538, %v121
    %v540 = vpop.permute.xlu0 %539
    %v543 = vunpack.c.l.s4 839922192
    %v544 = vunpack.c.0.s8 %v543
    %v545 = vperm.slane %v540, %v544
    %547 = vset.pattern.permute.xlu0 0
    %548 = vperm.xlu0 %547, %v122
    %v549 = vpop.permute.xlu0 %548
    %v552 = vunpack.c.l.s4 839922192
    %v553 = vunpack.c.0.s8 %v552
    %v554 = vperm.slane %v549, %v553
    %556 = vset.pattern.permute.xlu0 0
    %557 = vperm.xlu0 %556, %v123
    %v558 = vpop.permute.xlu0 %557
    %v561 = vunpack.c.l.s4 839922192
    %v562 = vunpack.c.0.s8 %v561
    %v563 = vperm.slane %v558, %v562
    %565 = vset.pattern.permute.xlu0 0
    %566 = vperm.xlu0 %565, %v124
    %v567 = vpop.permute.xlu0 %566
    %v570 = vunpack.c.l.s4 839922192
    %v571 = vunpack.c.0.s8 %v570
    %v572 = vperm.slane %v567, %v571
    %574 = vset.pattern.permute.xlu0 0
    %575 = vperm.xlu0 %574, %v125
    %v576 = vpop.permute.xlu0 %575
    %v579 = vunpack.c.l.s4 839922192
    %v580 = vunpack.c.0.s8 %v579
    %v581 = vperm.slane %v576, %v580
    %583 = vset.pattern.permute.xlu0 0
    %584 = vperm.xlu0 %583, %v126
    %v585 = vpop.permute.xlu0 %584
    %v588 = vunpack.c.l.s4 839922192
    %v589 = vunpack.c.0.s8 %v588
    %v590 = vperm.slane %v585, %v589
    %592 = vset.pattern.permute.xlu0 0
    %593 = vperm.xlu0 %592, %v127
    %v594 = vpop.permute.xlu0 %593
    %v597 = vunpack.c.l.s4 839922192
    %v598 = vunpack.c.0.s8 %v597
    %v599 = vperm.slane %v594, %v598
    %601 = vset.pattern.permute.xlu0 0
    %602 = vperm.xlu0 %601, %v128
    %v603 = vpop.permute.xlu0 %602
    %v606 = vunpack.c.l.s4 839922192
    %v607 = vunpack.c.0.s8 %v606
    %v608 = vperm.slane %v603, %v607
    %610 = vset.pattern.permute.xlu0 0
    %611 = vperm.xlu0 %610, %v129
    %v612 = vpop.permute.xlu0 %611
    %v615 = vunpack.c.l.s4 839922192
    %v616 = vunpack.c.0.s8 %v615
    %v617 = vperm.slane %v612, %v616
    %619 = vset.pattern.permute.xlu0 0
    %620 = vperm.xlu0 %619, %v130
    %v621 = vpop.permute.xlu0 %620
    %v624 = vunpack.c.l.s4 839922192
    %v625 = vunpack.c.0.s8 %v624
    %v626 = vperm.slane %v621, %v625
    %628 = vset.pattern.permute.xlu0 0
    %629 = vperm.xlu0 %628, %v131
    %v630 = vpop.permute.xlu0 %629
    %v633 = vunpack.c.l.s4 839922192
    %v634 = vunpack.c.0.s8 %v633
    %v635 = vperm.slane %v630, %v634
    %637 = vset.pattern.permute.xlu0 0
    %638 = vperm.xlu0 %637, %v132
    %v639 = vpop.permute.xlu0 %638
    %v642 = vunpack.c.l.s4 839922192
    %v643 = vunpack.c.0.s8 %v642
    %v644 = vperm.slane %v639, %v643
    %646 = vset.pattern.permute.xlu0 0
    %647 = vperm.xlu0 %646, %v133
    %v648 = vpop.permute.xlu0 %647
    %v651 = vunpack.c.l.s4 839922192
    %v652 = vunpack.c.0.s8 %v651
    %v653 = vperm.slane %v648, %v652
    %655 = vset.pattern.permute.xlu0 0
    %656 = vperm.xlu0 %655, %v134
    %v657 = vpop.permute.xlu0 %656
    %v660 = vunpack.c.l.s4 839922192
    %v661 = vunpack.c.0.s8 %v660
    %v662 = vperm.slane %v657, %v661
    %664 = vset.pattern.permute.xlu0 0
    %665 = vperm.xlu0 %664, %v135
    %v666 = vpop.permute.xlu0 %665
    %v669 = vunpack.c.l.s4 839922192
    %v670 = vunpack.c.0.s8 %v669
    %v671 = vperm.slane %v666, %v670
    %673 = vset.pattern.permute.xlu0 0
    %674 = vperm.xlu0 %673, %v136
    %v675 = vpop.permute.xlu0 %674
    %v678 = vunpack.c.l.s4 839922192
    %v679 = vunpack.c.0.s8 %v678
    %v680 = vperm.slane %v675, %v679
    %682 = vset.pattern.permute.xlu0 0
    %683 = vperm.xlu0 %682, %v137
    %v684 = vpop.permute.xlu0 %683
    %v687 = vunpack.c.l.s4 839922192
    %v688 = vunpack.c.0.s8 %v687
    %v689 = vperm.slane %v684, %v688
    %691 = vset.pattern.permute.xlu0 0
    %692 = vperm.xlu0 %691, %v138
    %v693 = vpop.permute.xlu0 %692
    %v696 = vunpack.c.l.s4 839922192
    %v697 = vunpack.c.0.s8 %v696
    %v698 = vperm.slane %v693, %v697
    %700 = vset.pattern.permute.xlu0 0
    %701 = vperm.xlu0 %700, %v139
    %v702 = vpop.permute.xlu0 %701
    %v705 = vunpack.c.l.s4 839922192
    %v706 = vunpack.c.0.s8 %v705
    %v707 = vperm.slane %v702, %v706
    %709 = vset.pattern.permute.xlu0 0
    %710 = vperm.xlu0 %709, %v140
    %v711 = vpop.permute.xlu0 %710
    %v714 = vunpack.c.l.s4 839922192
    %v715 = vunpack.c.0.s8 %v714
    %v716 = vperm.slane %v711, %v715
    %718 = vset.pattern.permute.xlu0 0
    %719 = vperm.xlu0 %718, %v141
    %v720 = vpop.permute.xlu0 %719
    %v723 = vunpack.c.l.s4 839922192
    %v724 = vunpack.c.0.s8 %v723
    %v725 = vperm.slane %v720, %v724
    %727 = vset.pattern.permute.xlu0 0
    %728 = vperm.xlu0 %727, %v142
    %v729 = vpop.permute.xlu0 %728
    %v732 = vunpack.c.l.s4 839922192
    %v733 = vunpack.c.0.s8 %v732
    %v734 = vperm.slane %v729, %v733
    %736 = vset.pattern.permute.xlu0 0
    %737 = vperm.xlu0 %736, %v143
    %v738 = vpop.permute.xlu0 %737
    %v741 = vunpack.c.l.s4 839922192
    %v742 = vunpack.c.0.s8 %v741
    %v743 = vperm.slane %v738, %v742
    %745 = vset.pattern.permute.xlu0 0
    %746 = vperm.xlu0 %745, %v144
    %v747 = vpop.permute.xlu0 %746
    %v750 = vunpack.c.l.s4 839922192
    %v751 = vunpack.c.0.s8 %v750
    %v752 = vperm.slane %v747, %v751
    %754 = vset.pattern.permute.xlu0 0
    %755 = vperm.xlu0 %754, %v145
    %v756 = vpop.permute.xlu0 %755
    %v759 = vunpack.c.l.s4 839922192
    %v760 = vunpack.c.0.s8 %v759
    %v761 = vperm.slane %v756, %v760
    %763 = vset.pattern.permute.xlu0 0
    %764 = vperm.xlu0 %763, %v146
    %v765 = vpop.permute.xlu0 %764
    %v768 = vunpack.c.l.s4 839922192
    %v769 = vunpack.c.0.s8 %v768
    %v770 = vperm.slane %v765, %v769
    %772 = vset.pattern.permute.xlu0 0
    %773 = vperm.xlu0 %772, %v147
    %v774 = vpop.permute.xlu0 %773
    %v777 = vunpack.c.l.s4 839922192
    %v778 = vunpack.c.0.s8 %v777
    %v779 = vperm.slane %v774, %v778
    %781 = vset.pattern.permute.xlu0 0
    %782 = vperm.xlu0 %781, %v148
    %v783 = vpop.permute.xlu0 %782
    %v786 = vunpack.c.l.s4 839922192
    %v787 = vunpack.c.0.s8 %v786
    %v788 = vperm.slane %v783, %v787
    %790 = vset.pattern.permute.xlu0 0
    %791 = vperm.xlu0 %790, %v149
    %v792 = vpop.permute.xlu0 %791
    %v795 = vunpack.c.l.s4 839922192
    %v796 = vunpack.c.0.s8 %v795
    %v797 = vperm.slane %v792, %v796
    %799 = vset.pattern.permute.xlu0 0
    %800 = vperm.xlu0 %799, %v150
    %v801 = vpop.permute.xlu0 %800
    %v804 = vunpack.c.l.s4 839922192
    %v805 = vunpack.c.0.s8 %v804
    %v806 = vperm.slane %v801, %v805
    %808 = vset.pattern.permute.xlu0 0
    %809 = vperm.xlu0 %808, %v151
    %v810 = vpop.permute.xlu0 %809
    %v813 = vunpack.c.l.s4 839922192
    %v814 = vunpack.c.0.s8 %v813
    %v815 = vperm.slane %v810, %v814
    %817 = vset.pattern.permute.xlu0 0
    %818 = vperm.xlu0 %817, %v152
    %v819 = vpop.permute.xlu0 %818
    %v822 = vunpack.c.l.s4 839922192
    %v823 = vunpack.c.0.s8 %v822
    %v824 = vperm.slane %v819, %v823
    %826 = vset.pattern.permute.xlu0 0
    %827 = vperm.xlu0 %826, %v153
    %v828 = vpop.permute.xlu0 %827
    %v831 = vunpack.c.l.s4 839922192
    %v832 = vunpack.c.0.s8 %v831
    %v833 = vperm.slane %v828, %v832
    %835 = vset.pattern.permute.xlu0 0
    %836 = vperm.xlu0 %835, %v154
    %v837 = vpop.permute.xlu0 %836
    %v840 = vunpack.c.l.s4 839922192
    %v841 = vunpack.c.0.s8 %v840
    %v842 = vperm.slane %v837, %v841
    %844 = vset.pattern.permute.xlu0 0
    %845 = vperm.xlu0 %844, %v155
    %v846 = vpop.permute.xlu0 %845
    %v849 = vunpack.c.l.s4 839922192
    %v850 = vunpack.c.0.s8 %v849
    %v851 = vperm.slane %v846, %v850
    %853 = vset.pattern.permute.xlu0 0
    %854 = vperm.xlu0 %853, %v156
    %v855 = vpop.permute.xlu0 %854
    %v858 = vunpack.c.l.s4 839922192
    %v859 = vunpack.c.0.s8 %v858
    %v860 = vperm.slane %v855, %v859
    %v862 = vpack.i.b16 %v28, %v28
    %v864 = vperm.slane %v862, 0
    %v865 = vunpack.c.l.bf16 %v293
    %v866 = vunpack.c.l.bf16 %v302
    %v867 = vunpack.c.l.bf16 %v311
    %v868 = vunpack.c.l.bf16 %v320
    %v869 = vunpack.c.l.bf16 %v329
    %v870 = vunpack.c.l.bf16 %v338
    %v871 = vunpack.c.l.bf16 %v347
    %v872 = vunpack.c.l.bf16 %v356
    %v873 = vunpack.c.l.bf16 %v365
    %v874 = vunpack.c.l.bf16 %v374
    %v875 = vunpack.c.l.bf16 %v383
    %v876 = vunpack.c.l.bf16 %v392
    %v877 = vunpack.c.l.bf16 %v401
    %v878 = vunpack.c.l.bf16 %v410
    %v879 = vunpack.c.l.bf16 %v419
    %v880 = vunpack.c.l.bf16 %v428
    %v881 = vunpack.c.l.bf16 %v437
    %v882 = vunpack.c.l.bf16 %v446
    %v883 = vunpack.c.l.bf16 %v455
    %v884 = vunpack.c.l.bf16 %v464
    %v885 = vunpack.c.l.bf16 %v473
    %v886 = vunpack.c.l.bf16 %v482
    %v887 = vunpack.c.l.bf16 %v491
    %v888 = vunpack.c.l.bf16 %v500
    %v889 = vunpack.c.l.bf16 %v509
    %v890 = vunpack.c.l.bf16 %v518
    %v891 = vunpack.c.l.bf16 %v527
    %v892 = vunpack.c.l.bf16 %v536
    %v893 = vunpack.c.l.bf16 %v545
    %v894 = vunpack.c.l.bf16 %v554
    %v895 = vunpack.c.l.bf16 %v563
    %v896 = vunpack.c.l.bf16 %v572
    %v897 = vunpack.c.l.bf16 %v581
    %v898 = vunpack.c.l.bf16 %v590
    %v899 = vunpack.c.l.bf16 %v599
    %v900 = vunpack.c.l.bf16 %v608
    %v901 = vunpack.c.l.bf16 %v617
    %v902 = vunpack.c.l.bf16 %v626
    %v903 = vunpack.c.l.bf16 %v635
    %v904 = vunpack.c.l.bf16 %v644
    %v905 = vunpack.c.l.bf16 %v653
    %v906 = vunpack.c.l.bf16 %v662
    %v907 = vunpack.c.l.bf16 %v671
    %v908 = vunpack.c.l.bf16 %v680
    %v909 = vunpack.c.l.bf16 %v689
    %v910 = vunpack.c.l.bf16 %v698
    %v911 = vunpack.c.l.bf16 %v707
    %v912 = vunpack.c.l.bf16 %v716
    %v913 = vunpack.c.l.bf16 %v725
    %v914 = vunpack.c.l.bf16 %v734
    %v915 = vunpack.c.l.bf16 %v743
    %v916 = vunpack.c.l.bf16 %v752
    %v917 = vunpack.c.l.bf16 %v761
    %v918 = vunpack.c.l.bf16 %v770
    %v919 = vunpack.c.l.bf16 %v779
    %v920 = vunpack.c.l.bf16 %v788
    %v921 = vunpack.c.l.bf16 %v797
    %v922 = vunpack.c.l.bf16 %v806
    %v923 = vunpack.c.l.bf16 %v815
    %v924 = vunpack.c.l.bf16 %v824
    %v925 = vunpack.c.l.bf16 %v833
    %v926 = vunpack.c.l.bf16 %v842
    %v927 = vunpack.c.l.bf16 %v851
    %v928 = vunpack.c.l.bf16 %v860
    %v929 = vunpack.c.l.bf16 %v864
    %v930 = vmul.f32 %v865, %v929
    %v931 = vmul.f32 %v866, %v929
    %v932 = vmul.f32 %v867, %v929
    %v933 = vmul.f32 %v868, %v929
    %v934 = vmul.f32 %v869, %v929
    %v935 = vmul.f32 %v870, %v929
    %v936 = vmul.f32 %v871, %v929
    %v937 = vmul.f32 %v872, %v929
    %v938 = vmul.f32 %v873, %v929
    %v939 = vmul.f32 %v874, %v929
    %v940 = vmul.f32 %v875, %v929
    %v941 = vmul.f32 %v876, %v929
    %v942 = vmul.f32 %v877, %v929
    %v943 = vmul.f32 %v878, %v929
    %v944 = vmul.f32 %v879, %v929
    %v945 = vmul.f32 %v880, %v929
    %v946 = vmul.f32 %v881, %v929
    %v947 = vmul.f32 %v882, %v929
    %v948 = vmul.f32 %v883, %v929
    %v949 = vmul.f32 %v884, %v929
    %v950 = vmul.f32 %v885, %v929
    %v951 = vmul.f32 %v886, %v929
    %v952 = vmul.f32 %v887, %v929
    %v953 = vmul.f32 %v888, %v929
    %v954 = vmul.f32 %v889, %v929
    %v955 = vmul.f32 %v890, %v929
    %v956 = vmul.f32 %v891, %v929
    %v957 = vmul.f32 %v892, %v929
    %v958 = vmul.f32 %v893, %v929
    %v959 = vmul.f32 %v894, %v929
    %v960 = vmul.f32 %v895, %v929
    %v961 = vmul.f32 %v896, %v929
    %v962 = vmul.f32 %v897, %v929
    %v963 = vmul.f32 %v898, %v929
    %v964 = vmul.f32 %v899, %v929
    %v965 = vmul.f32 %v900, %v929
    %v966 = vmul.f32 %v901, %v929
    %v967 = vmul.f32 %v902, %v929
    %v968 = vmul.f32 %v903, %v929
    %v969 = vmul.f32 %v904, %v929
    %v970 = vmul.f32 %v905, %v929
    %v971 = vmul.f32 %v906, %v929
    %v972 = vmul.f32 %v907, %v929
    %v973 = vmul.f32 %v908, %v929
    %v974 = vmul.f32 %v909, %v929
    %v975 = vmul.f32 %v910, %v929
    %v976 = vmul.f32 %v911, %v929
    %v977 = vmul.f32 %v912, %v929
    %v978 = vmul.f32 %v913, %v929
    %v979 = vmul.f32 %v914, %v929
    %v980 = vmul.f32 %v915, %v929
    %v981 = vmul.f32 %v916, %v929
    %v982 = vmul.f32 %v917, %v929
    %v983 = vmul.f32 %v918, %v929
    %v984 = vmul.f32 %v919, %v929
    %v985 = vmul.f32 %v920, %v929
    %v986 = vmul.f32 %v921, %v929
    %v987 = vmul.f32 %v922, %v929
    %v988 = vmul.f32 %v923, %v929
    %v989 = vmul.f32 %v924, %v929
    %v990 = vmul.f32 %v925, %v929
    %v991 = vmul.f32 %v926, %v929
    %v992 = vmul.f32 %v927, %v929
    %v993 = vmul.f32 %v928, %v929
    %v994 = vpack.c.bf16 %v930, %v930
    %v995 = vpack.c.bf16 %v931, %v931
    %v996 = vpack.c.bf16 %v932, %v932
    %v997 = vpack.c.bf16 %v933, %v933
    %v998 = vpack.c.bf16 %v934, %v934
    %v999 = vpack.c.bf16 %v935, %v935
    %v1000 = vpack.c.bf16 %v936, %v936
    %v1001 = vpack.c.bf16 %v937, %v937
    %v1002 = vpack.c.bf16 %v938, %v938
    %v1003 = vpack.c.bf16 %v939, %v939
    %v1004 = vpack.c.bf16 %v940, %v940
    %v1005 = vpack.c.bf16 %v941, %v941
    %v1006 = vpack.c.bf16 %v942, %v942
    %v1007 = vpack.c.bf16 %v943, %v943
    %v1008 = vpack.c.bf16 %v944, %v944
    %v1009 = vpack.c.bf16 %v945, %v945
    %v1010 = vpack.c.bf16 %v946, %v946
    %v1011 = vpack.c.bf16 %v947, %v947
    %v1012 = vpack.c.bf16 %v948, %v948
    %v1013 = vpack.c.bf16 %v949, %v949
    %v1014 = vpack.c.bf16 %v950, %v950
    %v1015 = vpack.c.bf16 %v951, %v951
    %v1016 = vpack.c.bf16 %v952, %v952
    %v1017 = vpack.c.bf16 %v953, %v953
    %v1018 = vpack.c.bf16 %v954, %v954
    %v1019 = vpack.c.bf16 %v955, %v955
    %v1020 = vpack.c.bf16 %v956, %v956
    %v1021 = vpack.c.bf16 %v957, %v957
    %v1022 = vpack.c.bf16 %v958, %v958
    %v1023 = vpack.c.bf16 %v959, %v959
    %v1024 = vpack.c.bf16 %v960, %v960
    %v1025 = vpack.c.bf16 %v961, %v961
    %v1026 = vpack.c.bf16 %v962, %v962
    %v1027 = vpack.c.bf16 %v963, %v963
    %v1028 = vpack.c.bf16 %v964, %v964
    %v1029 = vpack.c.bf16 %v965, %v965
    %v1030 = vpack.c.bf16 %v966, %v966
    %v1031 = vpack.c.bf16 %v967, %v967
    %v1032 = vpack.c.bf16 %v968, %v968
    %v1033 = vpack.c.bf16 %v969, %v969
    %v1034 = vpack.c.bf16 %v970, %v970
    %v1035 = vpack.c.bf16 %v971, %v971
    %v1036 = vpack.c.bf16 %v972, %v972
    %v1037 = vpack.c.bf16 %v973, %v973
    %v1038 = vpack.c.bf16 %v974, %v974
    %v1039 = vpack.c.bf16 %v975, %v975
    %v1040 = vpack.c.bf16 %v976, %v976
    %v1041 = vpack.c.bf16 %v977, %v977
    %v1042 = vpack.c.bf16 %v978, %v978
    %v1043 = vpack.c.bf16 %v979, %v979
    %v1044 = vpack.c.bf16 %v980, %v980
    %v1045 = vpack.c.bf16 %v981, %v981
    %v1046 = vpack.c.bf16 %v982, %v982
    %v1047 = vpack.c.bf16 %v983, %v983
    %v1048 = vpack.c.bf16 %v984, %v984
    %v1049 = vpack.c.bf16 %v985, %v985
    %v1050 = vpack.c.bf16 %v986, %v986
    %v1051 = vpack.c.bf16 %v987, %v987
    %v1052 = vpack.c.bf16 %v988, %v988
    %v1053 = vpack.c.bf16 %v989, %v989
    %v1054 = vpack.c.bf16 %v990, %v990
    %v1055 = vpack.c.bf16 %v991, %v991
    %v1056 = vpack.c.bf16 %v992, %v992
    %v1057 = vpack.c.bf16 %v993, %v993
    %1058 = vset.pattern.permute.xlu0 1
    %1059 = vperm.xlu0 %1058, %v93
    %v1060 = vpop.permute.xlu0 %1059
    %v1063 = vunpack.c.l.s4 839922192
    %v1064 = vunpack.c.0.s8 %v1063
    %v1065 = vperm.slane %v1060, %v1064
    %1066 = vset.pattern.permute.xlu0 1
    %1067 = vperm.xlu0 %1066, %v94
    %v1068 = vpop.permute.xlu0 %1067
    %v1071 = vunpack.c.l.s4 839922192
    %v1072 = vunpack.c.0.s8 %v1071
    %v1073 = vperm.slane %v1068, %v1072
    %1074 = vset.pattern.permute.xlu0 1
    %1075 = vperm.xlu0 %1074, %v95
    %v1076 = vpop.permute.xlu0 %1075
    %v1079 = vunpack.c.l.s4 839922192
    %v1080 = vunpack.c.0.s8 %v1079
    %v1081 = vperm.slane %v1076, %v1080
    %1082 = vset.pattern.permute.xlu0 1
    %1083 = vperm.xlu0 %1082, %v96
    %v1084 = vpop.permute.xlu0 %1083
    %v1087 = vunpack.c.l.s4 839922192
    %v1088 = vunpack.c.0.s8 %v1087
    %v1089 = vperm.slane %v1084, %v1088
    %1090 = vset.pattern.permute.xlu0 1
    %1091 = vperm.xlu0 %1090, %v97
    %v1092 = vpop.permute.xlu0 %1091
    %v1095 = vunpack.c.l.s4 839922192
    %v1096 = vunpack.c.0.s8 %v1095
    %v1097 = vperm.slane %v1092, %v1096
    %1098 = vset.pattern.permute.xlu0 1
    %1099 = vperm.xlu0 %1098, %v98
    %v1100 = vpop.permute.xlu0 %1099
    %v1103 = vunpack.c.l.s4 839922192
    %v1104 = vunpack.c.0.s8 %v1103
    %v1105 = vperm.slane %v1100, %v1104
    %1106 = vset.pattern.permute.xlu0 1
    %1107 = vperm.xlu0 %1106, %v99
    %v1108 = vpop.permute.xlu0 %1107
    %v1111 = vunpack.c.l.s4 839922192
    %v1112 = vunpack.c.0.s8 %v1111
    %v1113 = vperm.slane %v1108, %v1112
    %1114 = vset.pattern.permute.xlu0 1
    %1115 = vperm.xlu0 %1114, %v100
    %v1116 = vpop.permute.xlu0 %1115
    %v1119 = vunpack.c.l.s4 839922192
    %v1120 = vunpack.c.0.s8 %v1119
    %v1121 = vperm.slane %v1116, %v1120
    %1122 = vset.pattern.permute.xlu0 1
    %1123 = vperm.xlu0 %1122, %v101
    %v1124 = vpop.permute.xlu0 %1123
    %v1127 = vunpack.c.l.s4 839922192
    %v1128 = vunpack.c.0.s8 %v1127
    %v1129 = vperm.slane %v1124, %v1128
    %1130 = vset.pattern.permute.xlu0 1
    %1131 = vperm.xlu0 %1130, %v102
    %v1132 = vpop.permute.xlu0 %1131
    %v1135 = vunpack.c.l.s4 839922192
    %v1136 = vunpack.c.0.s8 %v1135
    %v1137 = vperm.slane %v1132, %v1136
    %1138 = vset.pattern.permute.xlu0 1
    %1139 = vperm.xlu0 %1138, %v103
    %v1140 = vpop.permute.xlu0 %1139
    %v1143 = vunpack.c.l.s4 839922192
    %v1144 = vunpack.c.0.s8 %v1143
    %v1145 = vperm.slane %v1140, %v1144
    %1146 = vset.pattern.permute.xlu0 1
    %1147 = vperm.xlu0 %1146, %v104
    %v1148 = vpop.permute.xlu0 %1147
    %v1151 = vunpack.c.l.s4 839922192
    %v1152 = vunpack.c.0.s8 %v1151
    %v1153 = vperm.slane %v1148, %v1152
    %1154 = vset.pattern.permute.xlu0 1
    %1155 = vperm.xlu0 %1154, %v105
    %v1156 = vpop.permute.xlu0 %1155
    %v1159 = vunpack.c.l.s4 839922192
    %v1160 = vunpack.c.0.s8 %v1159
    %v1161 = vperm.slane %v1156, %v1160
    %1162 = vset.pattern.permute.xlu0 1
    %1163 = vperm.xlu0 %1162, %v106
    %v1164 = vpop.permute.xlu0 %1163
    %v1167 = vunpack.c.l.s4 839922192
    %v1168 = vunpack.c.0.s8 %v1167
    %v1169 = vperm.slane %v1164, %v1168
    %1170 = vset.pattern.permute.xlu0 1
    %1171 = vperm.xlu0 %1170, %v107
    %v1172 = vpop.permute.xlu0 %1171
    %v1175 = vunpack.c.l.s4 839922192
    %v1176 = vunpack.c.0.s8 %v1175
    %v1177 = vperm.slane %v1172, %v1176
    %1178 = vset.pattern.permute.xlu0 1
    %1179 = vperm.xlu0 %1178, %v108
    %v1180 = vpop.permute.xlu0 %1179
    %v1183 = vunpack.c.l.s4 839922192
    %v1184 = vunpack.c.0.s8 %v1183
    %v1185 = vperm.slane %v1180, %v1184
    %1186 = vset.pattern.permute.xlu0 1
    %1187 = vperm.xlu0 %1186, %v109
    %v1188 = vpop.permute.xlu0 %1187
    %v1191 = vunpack.c.l.s4 839922192
    %v1192 = vunpack.c.0.s8 %v1191
    %v1193 = vperm.slane %v1188, %v1192
    %1194 = vset.pattern.permute.xlu0 1
    %1195 = vperm.xlu0 %1194, %v110
    %v1196 = vpop.permute.xlu0 %1195
    %v1199 = vunpack.c.l.s4 839922192
    %v1200 = vunpack.c.0.s8 %v1199
    %v1201 = vperm.slane %v1196, %v1200
    %1202 = vset.pattern.permute.xlu0 1
    %1203 = vperm.xlu0 %1202, %v111
    %v1204 = vpop.permute.xlu0 %1203
    %v1207 = vunpack.c.l.s4 839922192
    %v1208 = vunpack.c.0.s8 %v1207
    %v1209 = vperm.slane %v1204, %v1208
    %1210 = vset.pattern.permute.xlu0 1
    %1211 = vperm.xlu0 %1210, %v112
    %v1212 = vpop.permute.xlu0 %1211
    %v1215 = vunpack.c.l.s4 839922192
    %v1216 = vunpack.c.0.s8 %v1215
    %v1217 = vperm.slane %v1212, %v1216
    %1218 = vset.pattern.permute.xlu0 1
    %1219 = vperm.xlu0 %1218, %v113
    %v1220 = vpop.permute.xlu0 %1219
    %v1223 = vunpack.c.l.s4 839922192
    %v1224 = vunpack.c.0.s8 %v1223
    %v1225 = vperm.slane %v1220, %v1224
    %1226 = vset.pattern.permute.xlu0 1
    %1227 = vperm.xlu0 %1226, %v114
    %v1228 = vpop.permute.xlu0 %1227
    %v1231 = vunpack.c.l.s4 839922192
    %v1232 = vunpack.c.0.s8 %v1231
    %v1233 = vperm.slane %v1228, %v1232
    %1234 = vset.pattern.permute.xlu0 1
    %1235 = vperm.xlu0 %1234, %v115
    %v1236 = vpop.permute.xlu0 %1235
    %v1239 = vunpack.c.l.s4 839922192
    %v1240 = vunpack.c.0.s8 %v1239
    %v1241 = vperm.slane %v1236, %v1240
    %1242 = vset.pattern.permute.xlu0 1
    %1243 = vperm.xlu0 %1242, %v116
    %v1244 = vpop.permute.xlu0 %1243
    %v1247 = vunpack.c.l.s4 839922192
    %v1248 = vunpack.c.0.s8 %v1247
    %v1249 = vperm.slane %v1244, %v1248
    %1250 = vset.pattern.permute.xlu0 1
    %1251 = vperm.xlu0 %1250, %v117
    %v1252 = vpop.permute.xlu0 %1251
    %v1255 = vunpack.c.l.s4 839922192
    %v1256 = vunpack.c.0.s8 %v1255
    %v1257 = vperm.slane %v1252, %v1256
    %1258 = vset.pattern.permute.xlu0 1
    %1259 = vperm.xlu0 %1258, %v118
    %v1260 = vpop.permute.xlu0 %1259
    %v1263 = vunpack.c.l.s4 839922192
    %v1264 = vunpack.c.0.s8 %v1263
    %v1265 = vperm.slane %v1260, %v1264
    %1266 = vset.pattern.permute.xlu0 1
    %1267 = vperm.xlu0 %1266, %v119
    %v1268 = vpop.permute.xlu0 %1267
    %v1271 = vunpack.c.l.s4 839922192
    %v1272 = vunpack.c.0.s8 %v1271
    %v1273 = vperm.slane %v1268, %v1272
    %1274 = vset.pattern.permute.xlu0 1
    %1275 = vperm.xlu0 %1274, %v120
    %v1276 = vpop.permute.xlu0 %1275
    %v1279 = vunpack.c.l.s4 839922192
    %v1280 = vunpack.c.0.s8 %v1279
    %v1281 = vperm.slane %v1276, %v1280
    %1282 = vset.pattern.permute.xlu0 1
    %1283 = vperm.xlu0 %1282, %v121
    %v1284 = vpop.permute.xlu0 %1283
    %v1287 = vunpack.c.l.s4 839922192
    %v1288 = vunpack.c.0.s8 %v1287
    %v1289 = vperm.slane %v1284, %v1288
    %1290 = vset.pattern.permute.xlu0 1
    %1291 = vperm.xlu0 %1290, %v122
    %v1292 = vpop.permute.xlu0 %1291
    %v1295 = vunpack.c.l.s4 839922192
    %v1296 = vunpack.c.0.s8 %v1295
    %v1297 = vperm.slane %v1292, %v1296
    %1298 = vset.pattern.permute.xlu0 1
    %1299 = vperm.xlu0 %1298, %v123
    %v1300 = vpop.permute.xlu0 %1299
    %v1303 = vunpack.c.l.s4 839922192
    %v1304 = vunpack.c.0.s8 %v1303
    %v1305 = vperm.slane %v1300, %v1304
    %1306 = vset.pattern.permute.xlu0 1
    %1307 = vperm.xlu0 %1306, %v124
    %v1308 = vpop.permute.xlu0 %1307
    %v1311 = vunpack.c.l.s4 839922192
    %v1312 = vunpack.c.0.s8 %v1311
    %v1313 = vperm.slane %v1308, %v1312
    %1314 = vset.pattern.permute.xlu0 1
    %1315 = vperm.xlu0 %1314, %v125
    %v1316 = vpop.permute.xlu0 %1315
    %v1319 = vunpack.c.l.s4 839922192
    %v1320 = vunpack.c.0.s8 %v1319
    %v1321 = vperm.slane %v1316, %v1320
    %1322 = vset.pattern.permute.xlu0 1
    %1323 = vperm.xlu0 %1322, %v126
    %v1324 = vpop.permute.xlu0 %1323
    %v1327 = vunpack.c.l.s4 839922192
    %v1328 = vunpack.c.0.s8 %v1327
    %v1329 = vperm.slane %v1324, %v1328
    %1330 = vset.pattern.permute.xlu0 1
    %1331 = vperm.xlu0 %1330, %v127
    %v1332 = vpop.permute.xlu0 %1331
    %v1335 = vunpack.c.l.s4 839922192
    %v1336 = vunpack.c.0.s8 %v1335
    %v1337 = vperm.slane %v1332, %v1336
    %1338 = vset.pattern.permute.xlu0 1
    %1339 = vperm.xlu0 %1338, %v128
    %v1340 = vpop.permute.xlu0 %1339
    %v1343 = vunpack.c.l.s4 839922192
    %v1344 = vunpack.c.0.s8 %v1343
    %v1345 = vperm.slane %v1340, %v1344
    %1346 = vset.pattern.permute.xlu0 1
    %1347 = vperm.xlu0 %1346, %v129
    %v1348 = vpop.permute.xlu0 %1347
    %v1351 = vunpack.c.l.s4 839922192
    %v1352 = vunpack.c.0.s8 %v1351
    %v1353 = vperm.slane %v1348, %v1352
    %1354 = vset.pattern.permute.xlu0 1
    %1355 = vperm.xlu0 %1354, %v130
    %v1356 = vpop.permute.xlu0 %1355
    %v1359 = vunpack.c.l.s4 839922192
    %v1360 = vunpack.c.0.s8 %v1359
    %v1361 = vperm.slane %v1356, %v1360
    %1362 = vset.pattern.permute.xlu0 1
    %1363 = vperm.xlu0 %1362, %v131
    %v1364 = vpop.permute.xlu0 %1363
    %v1367 = vunpack.c.l.s4 839922192
    %v1368 = vunpack.c.0.s8 %v1367
    %v1369 = vperm.slane %v1364, %v1368
    %1370 = vset.pattern.permute.xlu0 1
    %1371 = vperm.xlu0 %1370, %v132
    %v1372 = vpop.permute.xlu0 %1371
    %v1375 = vunpack.c.l.s4 839922192
    %v1376 = vunpack.c.0.s8 %v1375
    %v1377 = vperm.slane %v1372, %v1376
    %1378 = vset.pattern.permute.xlu0 1
    %1379 = vperm.xlu0 %1378, %v133
    %v1380 = vpop.permute.xlu0 %1379
    %v1383 = vunpack.c.l.s4 839922192
    %v1384 = vunpack.c.0.s8 %v1383
    %v1385 = vperm.slane %v1380, %v1384
    %1386 = vset.pattern.permute.xlu0 1
    %1387 = vperm.xlu0 %1386, %v134
    %v1388 = vpop.permute.xlu0 %1387
    %v1391 = vunpack.c.l.s4 839922192
    %v1392 = vunpack.c.0.s8 %v1391
    %v1393 = vperm.slane %v1388, %v1392
    %1394 = vset.pattern.permute.xlu0 1
    %1395 = vperm.xlu0 %1394, %v135
    %v1396 = vpop.permute.xlu0 %1395
    %v1399 = vunpack.c.l.s4 839922192
    %v1400 = vunpack.c.0.s8 %v1399
    %v1401 = vperm.slane %v1396, %v1400
    %1402 = vset.pattern.permute.xlu0 1
    %1403 = vperm.xlu0 %1402, %v136
    %v1404 = vpop.permute.xlu0 %1403
    %v1407 = vunpack.c.l.s4 839922192
    %v1408 = vunpack.c.0.s8 %v1407
    %v1409 = vperm.slane %v1404, %v1408
    %1410 = vset.pattern.permute.xlu0 1
    %1411 = vperm.xlu0 %1410, %v137
    %v1412 = vpop.permute.xlu0 %1411
    %v1415 = vunpack.c.l.s4 839922192
    %v1416 = vunpack.c.0.s8 %v1415
    %v1417 = vperm.slane %v1412, %v1416
    %1418 = vset.pattern.permute.xlu0 1
    %1419 = vperm.xlu0 %1418, %v138
    %v1420 = vpop.permute.xlu0 %1419
    %v1423 = vunpack.c.l.s4 839922192
    %v1424 = vunpack.c.0.s8 %v1423
    %v1425 = vperm.slane %v1420, %v1424
    %1426 = vset.pattern.permute.xlu0 1
    %1427 = vperm.xlu0 %1426, %v139
    %v1428 = vpop.permute.xlu0 %1427
    %v1431 = vunpack.c.l.s4 839922192
    %v1432 = vunpack.c.0.s8 %v1431
    %v1433 = vperm.slane %v1428, %v1432
    %1434 = vset.pattern.permute.xlu0 1
    %1435 = vperm.xlu0 %1434, %v140
    %v1436 = vpop.permute.xlu0 %1435
    %v1439 = vunpack.c.l.s4 839922192
    %v1440 = vunpack.c.0.s8 %v1439
    %v1441 = vperm.slane %v1436, %v1440
    %1442 = vset.pattern.permute.xlu0 1
    %1443 = vperm.xlu0 %1442, %v141
    %v1444 = vpop.permute.xlu0 %1443
    %v1447 = vunpack.c.l.s4 839922192
    %v1448 = vunpack.c.0.s8 %v1447
    %v1449 = vperm.slane %v1444, %v1448
    %1450 = vset.pattern.permute.xlu0 1
    %1451 = vperm.xlu0 %1450, %v142
    %v1452 = vpop.permute.xlu0 %1451
    %v1455 = vunpack.c.l.s4 839922192
    %v1456 = vunpack.c.0.s8 %v1455
    %v1457 = vperm.slane %v1452, %v1456
    %1458 = vset.pattern.permute.xlu0 1
    %1459 = vperm.xlu0 %1458, %v143
    %v1460 = vpop.permute.xlu0 %1459
    %v1463 = vunpack.c.l.s4 839922192
    %v1464 = vunpack.c.0.s8 %v1463
    %v1465 = vperm.slane %v1460, %v1464
    %1466 = vset.pattern.permute.xlu0 1
    %1467 = vperm.xlu0 %1466, %v144
    %v1468 = vpop.permute.xlu0 %1467
    %v1471 = vunpack.c.l.s4 839922192
    %v1472 = vunpack.c.0.s8 %v1471
    %v1473 = vperm.slane %v1468, %v1472
    %1474 = vset.pattern.permute.xlu0 1
    %1475 = vperm.xlu0 %1474, %v145
    %v1476 = vpop.permute.xlu0 %1475
    %v1479 = vunpack.c.l.s4 839922192
    %v1480 = vunpack.c.0.s8 %v1479
    %v1481 = vperm.slane %v1476, %v1480
    %1482 = vset.pattern.permute.xlu0 1
    %1483 = vperm.xlu0 %1482, %v146
    %v1484 = vpop.permute.xlu0 %1483
    %v1487 = vunpack.c.l.s4 839922192
    %v1488 = vunpack.c.0.s8 %v1487
    %v1489 = vperm.slane %v1484, %v1488
    %1490 = vset.pattern.permute.xlu0 1
    %1491 = vperm.xlu0 %1490, %v147
    %v1492 = vpop.permute.xlu0 %1491
    %v1495 = vunpack.c.l.s4 839922192
    %v1496 = vunpack.c.0.s8 %v1495
    %v1497 = vperm.slane %v1492, %v1496
    %1498 = vset.pattern.permute.xlu0 1
    %1499 = vperm.xlu0 %1498, %v148
    %v1500 = vpop.permute.xlu0 %1499
    %v1503 = vunpack.c.l.s4 839922192
    %v1504 = vunpack.c.0.s8 %v1503
    %v1505 = vperm.slane %v1500, %v1504
    %1506 = vset.pattern.permute.xlu0 1
    %1507 = vperm.xlu0 %1506, %v149
    %v1508 = vpop.permute.xlu0 %1507
    %v1511 = vunpack.c.l.s4 839922192
    %v1512 = vunpack.c.0.s8 %v1511
    %v1513 = vperm.slane %v1508, %v1512
    %1514 = vset.pattern.permute.xlu0 1
    %1515 = vperm.xlu0 %1514, %v150
    %v1516 = vpop.permute.xlu0 %1515
    %v1519 = vunpack.c.l.s4 839922192
    %v1520 = vunpack.c.0.s8 %v1519
    %v1521 = vperm.slane %v1516, %v1520
    %1522 = vset.pattern.permute.xlu0 1
    %1523 = vperm.xlu0 %1522, %v151
    %v1524 = vpop.permute.xlu0 %1523
    %v1527 = vunpack.c.l.s4 839922192
    %v1528 = vunpack.c.0.s8 %v1527
    %v1529 = vperm.slane %v1524, %v1528
    %1530 = vset.pattern.permute.xlu0 1
    %1531 = vperm.xlu0 %1530, %v152
    %v1532 = vpop.permute.xlu0 %1531
    %v1535 = vunpack.c.l.s4 839922192
    %v1536 = vunpack.c.0.s8 %v1535
    %v1537 = vperm.slane %v1532, %v1536
    %1538 = vset.pattern.permute.xlu0 1
    %1539 = vperm.xlu0 %1538, %v153
    %v1540 = vpop.permute.xlu0 %1539
    %v1543 = vunpack.c.l.s4 839922192
    %v1544 = vunpack.c.0.s8 %v1543
    %v1545 = vperm.slane %v1540, %v1544
    %1546 = vset.pattern.permute.xlu0 1
    %1547 = vperm.xlu0 %1546, %v154
    %v1548 = vpop.permute.xlu0 %1547
    %v1551 = vunpack.c.l.s4 839922192
    %v1552 = vunpack.c.0.s8 %v1551
    %v1553 = vperm.slane %v1548, %v1552
    %1554 = vset.pattern.permute.xlu0 1
    %1555 = vperm.xlu0 %1554, %v155
    %v1556 = vpop.permute.xlu0 %1555
    %v1559 = vunpack.c.l.s4 839922192
    %v1560 = vunpack.c.0.s8 %v1559
    %v1561 = vperm.slane %v1556, %v1560
    %1562 = vset.pattern.permute.xlu0 1
    %1563 = vperm.xlu0 %1562, %v156
    %v1564 = vpop.permute.xlu0 %1563
    %v1567 = vunpack.c.l.s4 839922192
    %v1568 = vunpack.c.0.s8 %v1567
    %v1569 = vperm.slane %v1564, %v1568
    %v1570 = vshrl.u32 %v28, 16
    %v1571 = vpack.i.b16 %v1570, %v1570
    %v1573 = vperm.slane %v1571, 0
    %v1574 = vunpack.c.l.bf16 %v1065
    %v1575 = vunpack.c.l.bf16 %v1073
    %v1576 = vunpack.c.l.bf16 %v1081
    %v1577 = vunpack.c.l.bf16 %v1089
    %v1578 = vunpack.c.l.bf16 %v1097
    %v1579 = vunpack.c.l.bf16 %v1105
    %v1580 = vunpack.c.l.bf16 %v1113
    %v1581 = vunpack.c.l.bf16 %v1121
    %v1582 = vunpack.c.l.bf16 %v1129
    %v1583 = vunpack.c.l.bf16 %v1137
    %v1584 = vunpack.c.l.bf16 %v1145
    %v1585 = vunpack.c.l.bf16 %v1153
    %v1586 = vunpack.c.l.bf16 %v1161
    %v1587 = vunpack.c.l.bf16 %v1169
    %v1588 = vunpack.c.l.bf16 %v1177
    %v1589 = vunpack.c.l.bf16 %v1185
    %v1590 = vunpack.c.l.bf16 %v1193
    %v1591 = vunpack.c.l.bf16 %v1201
    %v1592 = vunpack.c.l.bf16 %v1209
    %v1593 = vunpack.c.l.bf16 %v1217
    %v1594 = vunpack.c.l.bf16 %v1225
    %v1595 = vunpack.c.l.bf16 %v1233
    %v1596 = vunpack.c.l.bf16 %v1241
    %v1597 = vunpack.c.l.bf16 %v1249
    %v1598 = vunpack.c.l.bf16 %v1257
    %v1599 = vunpack.c.l.bf16 %v1265
    %v1600 = vunpack.c.l.bf16 %v1273
    %v1601 = vunpack.c.l.bf16 %v1281
    %v1602 = vunpack.c.l.bf16 %v1289
    %v1603 = vunpack.c.l.bf16 %v1297
    %v1604 = vunpack.c.l.bf16 %v1305
    %v1605 = vunpack.c.l.bf16 %v1313
    %v1606 = vunpack.c.l.bf16 %v1321
    %v1607 = vunpack.c.l.bf16 %v1329
    %v1608 = vunpack.c.l.bf16 %v1337
    %v1609 = vunpack.c.l.bf16 %v1345
    %v1610 = vunpack.c.l.bf16 %v1353
    %v1611 = vunpack.c.l.bf16 %v1361
    %v1612 = vunpack.c.l.bf16 %v1369
    %v1613 = vunpack.c.l.bf16 %v1377
    %v1614 = vunpack.c.l.bf16 %v1385
    %v1615 = vunpack.c.l.bf16 %v1393
    %v1616 = vunpack.c.l.bf16 %v1401
    %v1617 = vunpack.c.l.bf16 %v1409
    %v1618 = vunpack.c.l.bf16 %v1417
    %v1619 = vunpack.c.l.bf16 %v1425
    %v1620 = vunpack.c.l.bf16 %v1433
    %v1621 = vunpack.c.l.bf16 %v1441
    %v1622 = vunpack.c.l.bf16 %v1449
    %v1623 = vunpack.c.l.bf16 %v1457
    %v1624 = vunpack.c.l.bf16 %v1465
    %v1625 = vunpack.c.l.bf16 %v1473
    %v1626 = vunpack.c.l.bf16 %v1481
    %v1627 = vunpack.c.l.bf16 %v1489
    %v1628 = vunpack.c.l.bf16 %v1497
    %v1629 = vunpack.c.l.bf16 %v1505
    %v1630 = vunpack.c.l.bf16 %v1513
    %v1631 = vunpack.c.l.bf16 %v1521
    %v1632 = vunpack.c.l.bf16 %v1529
    %v1633 = vunpack.c.l.bf16 %v1537
    %v1634 = vunpack.c.l.bf16 %v1545
    %v1635 = vunpack.c.l.bf16 %v1553
    %v1636 = vunpack.c.l.bf16 %v1561
    %v1637 = vunpack.c.l.bf16 %v1569
    %v1638 = vunpack.c.l.bf16 %v1573
    %v1639 = vmul.f32 %v1574, %v1638
    %v1640 = vmul.f32 %v1575, %v1638
    %v1641 = vmul.f32 %v1576, %v1638
    %v1642 = vmul.f32 %v1577, %v1638
    %v1643 = vmul.f32 %v1578, %v1638
    %v1644 = vmul.f32 %v1579, %v1638
    %v1645 = vmul.f32 %v1580, %v1638
    %v1646 = vmul.f32 %v1581, %v1638
    %v1647 = vmul.f32 %v1582, %v1638
    %v1648 = vmul.f32 %v1583, %v1638
    %v1649 = vmul.f32 %v1584, %v1638
    %v1650 = vmul.f32 %v1585, %v1638
    %v1651 = vmul.f32 %v1586, %v1638
    %v1652 = vmul.f32 %v1587, %v1638
    %v1653 = vmul.f32 %v1588, %v1638
    %v1654 = vmul.f32 %v1589, %v1638
    %v1655 = vmul.f32 %v1590, %v1638
    %v1656 = vmul.f32 %v1591, %v1638
    %v1657 = vmul.f32 %v1592, %v1638
    %v1658 = vmul.f32 %v1593, %v1638
    %v1659 = vmul.f32 %v1594, %v1638
    %v1660 = vmul.f32 %v1595, %v1638
    %v1661 = vmul.f32 %v1596, %v1638
    %v1662 = vmul.f32 %v1597, %v1638
    %v1663 = vmul.f32 %v1598, %v1638
    %v1664 = vmul.f32 %v1599, %v1638
    %v1665 = vmul.f32 %v1600, %v1638
    %v1666 = vmul.f32 %v1601, %v1638
    %v1667 = vmul.f32 %v1602, %v1638
    %v1668 = vmul.f32 %v1603, %v1638
    %v1669 = vmul.f32 %v1604, %v1638
    %v1670 = vmul.f32 %v1605, %v1638
    %v1671 = vmul.f32 %v1606, %v1638
    %v1672 = vmul.f32 %v1607, %v1638
    %v1673 = vmul.f32 %v1608, %v1638
    %v1674 = vmul.f32 %v1609, %v1638
    %v1675 = vmul.f32 %v1610, %v1638
    %v1676 = vmul.f32 %v1611, %v1638
    %v1677 = vmul.f32 %v1612, %v1638
    %v1678 = vmul.f32 %v1613, %v1638
    %v1679 = vmul.f32 %v1614, %v1638
    %v1680 = vmul.f32 %v1615, %v1638
    %v1681 = vmul.f32 %v1616, %v1638
    %v1682 = vmul.f32 %v1617, %v1638
    %v1683 = vmul.f32 %v1618, %v1638
    %v1684 = vmul.f32 %v1619, %v1638
    %v1685 = vmul.f32 %v1620, %v1638
    %v1686 = vmul.f32 %v1621, %v1638
    %v1687 = vmul.f32 %v1622, %v1638
    %v1688 = vmul.f32 %v1623, %v1638
    %v1689 = vmul.f32 %v1624, %v1638
    %v1690 = vmul.f32 %v1625, %v1638
    %v1691 = vmul.f32 %v1626, %v1638
    %v1692 = vmul.f32 %v1627, %v1638
    %v1693 = vmul.f32 %v1628, %v1638
    %v1694 = vmul.f32 %v1629, %v1638
    %v1695 = vmul.f32 %v1630, %v1638
    %v1696 = vmul.f32 %v1631, %v1638
    %v1697 = vmul.f32 %v1632, %v1638
    %v1698 = vmul.f32 %v1633, %v1638
    %v1699 = vmul.f32 %v1634, %v1638
    %v1700 = vmul.f32 %v1635, %v1638
    %v1701 = vmul.f32 %v1636, %v1638
    %v1702 = vmul.f32 %v1637, %v1638
    %v1703 = vpack.c.bf16 %v1639, %v1639
    %v1704 = vpack.c.bf16 %v1640, %v1640
    %v1705 = vpack.c.bf16 %v1641, %v1641
    %v1706 = vpack.c.bf16 %v1642, %v1642
    %v1707 = vpack.c.bf16 %v1643, %v1643
    %v1708 = vpack.c.bf16 %v1644, %v1644
    %v1709 = vpack.c.bf16 %v1645, %v1645
    %v1710 = vpack.c.bf16 %v1646, %v1646
    %v1711 = vpack.c.bf16 %v1647, %v1647
    %v1712 = vpack.c.bf16 %v1648, %v1648
    %v1713 = vpack.c.bf16 %v1649, %v1649
    %v1714 = vpack.c.bf16 %v1650, %v1650
    %v1715 = vpack.c.bf16 %v1651, %v1651
    %v1716 = vpack.c.bf16 %v1652, %v1652
    %v1717 = vpack.c.bf16 %v1653, %v1653
    %v1718 = vpack.c.bf16 %v1654, %v1654
    %v1719 = vpack.c.bf16 %v1655, %v1655
    %v1720 = vpack.c.bf16 %v1656, %v1656
    %v1721 = vpack.c.bf16 %v1657, %v1657
    %v1722 = vpack.c.bf16 %v1658, %v1658
    %v1723 = vpack.c.bf16 %v1659, %v1659
    %v1724 = vpack.c.bf16 %v1660, %v1660
    %v1725 = vpack.c.bf16 %v1661, %v1661
    %v1726 = vpack.c.bf16 %v1662, %v1662
    %v1727 = vpack.c.bf16 %v1663, %v1663
    %v1728 = vpack.c.bf16 %v1664, %v1664
    %v1729 = vpack.c.bf16 %v1665, %v1665
    %v1730 = vpack.c.bf16 %v1666, %v1666
    %v1731 = vpack.c.bf16 %v1667, %v1667
    %v1732 = vpack.c.bf16 %v1668, %v1668
    %v1733 = vpack.c.bf16 %v1669, %v1669
    %v1734 = vpack.c.bf16 %v1670, %v1670
    %v1735 = vpack.c.bf16 %v1671, %v1671
    %v1736 = vpack.c.bf16 %v1672, %v1672
    %v1737 = vpack.c.bf16 %v1673, %v1673
    %v1738 = vpack.c.bf16 %v1674, %v1674
    %v1739 = vpack.c.bf16 %v1675, %v1675
    %v1740 = vpack.c.bf16 %v1676, %v1676
    %v1741 = vpack.c.bf16 %v1677, %v1677
    %v1742 = vpack.c.bf16 %v1678, %v1678
    %v1743 = vpack.c.bf16 %v1679, %v1679
    %v1744 = vpack.c.bf16 %v1680, %v1680
    %v1745 = vpack.c.bf16 %v1681, %v1681
    %v1746 = vpack.c.bf16 %v1682, %v1682
    %v1747 = vpack.c.bf16 %v1683, %v1683
    %v1748 = vpack.c.bf16 %v1684, %v1684
    %v1749 = vpack.c.bf16 %v1685, %v1685
    %v1750 = vpack.c.bf16 %v1686, %v1686
    %v1751 = vpack.c.bf16 %v1687, %v1687
    %v1752 = vpack.c.bf16 %v1688, %v1688
    %v1753 = vpack.c.bf16 %v1689, %v1689
    %v1754 = vpack.c.bf16 %v1690, %v1690
    %v1755 = vpack.c.bf16 %v1691, %v1691
    %v1756 = vpack.c.bf16 %v1692, %v1692
    %v1757 = vpack.c.bf16 %v1693, %v1693
    %v1758 = vpack.c.bf16 %v1694, %v1694
    %v1759 = vpack.c.bf16 %v1695, %v1695
    %v1760 = vpack.c.bf16 %v1696, %v1696
    %v1761 = vpack.c.bf16 %v1697, %v1697
    %v1762 = vpack.c.bf16 %v1698, %v1698
    %v1763 = vpack.c.bf16 %v1699, %v1699
    %v1764 = vpack.c.bf16 %v1700, %v1700
    %v1765 = vpack.c.bf16 %v1701, %v1701
    %v1766 = vpack.c.bf16 %v1702, %v1702
    %v1767 = vunpack.c.l.bf16 %v994
    %v1768 = vunpack.c.l.bf16 %v995
    %v1769 = vunpack.c.l.bf16 %v996
    %v1770 = vunpack.c.l.bf16 %v997
    %v1771 = vunpack.c.l.bf16 %v998
    %v1772 = vunpack.c.l.bf16 %v999
    %v1773 = vunpack.c.l.bf16 %v1000
    %v1774 = vunpack.c.l.bf16 %v1001
    %v1775 = vunpack.c.l.bf16 %v1002
    %v1776 = vunpack.c.l.bf16 %v1003
    %v1777 = vunpack.c.l.bf16 %v1004
    %v1778 = vunpack.c.l.bf16 %v1005
    %v1779 = vunpack.c.l.bf16 %v1006
    %v1780 = vunpack.c.l.bf16 %v1007
    %v1781 = vunpack.c.l.bf16 %v1008
    %v1782 = vunpack.c.l.bf16 %v1009
    %v1783 = vunpack.c.l.bf16 %v1010
    %v1784 = vunpack.c.l.bf16 %v1011
    %v1785 = vunpack.c.l.bf16 %v1012
    %v1786 = vunpack.c.l.bf16 %v1013
    %v1787 = vunpack.c.l.bf16 %v1014
    %v1788 = vunpack.c.l.bf16 %v1015
    %v1789 = vunpack.c.l.bf16 %v1016
    %v1790 = vunpack.c.l.bf16 %v1017
    %v1791 = vunpack.c.l.bf16 %v1018
    %v1792 = vunpack.c.l.bf16 %v1019
    %v1793 = vunpack.c.l.bf16 %v1020
    %v1794 = vunpack.c.l.bf16 %v1021
    %v1795 = vunpack.c.l.bf16 %v1022
    %v1796 = vunpack.c.l.bf16 %v1023
    %v1797 = vunpack.c.l.bf16 %v1024
    %v1798 = vunpack.c.l.bf16 %v1025
    %v1799 = vunpack.c.l.bf16 %v1026
    %v1800 = vunpack.c.l.bf16 %v1027
    %v1801 = vunpack.c.l.bf16 %v1028
    %v1802 = vunpack.c.l.bf16 %v1029
    %v1803 = vunpack.c.l.bf16 %v1030
    %v1804 = vunpack.c.l.bf16 %v1031
    %v1805 = vunpack.c.l.bf16 %v1032
    %v1806 = vunpack.c.l.bf16 %v1033
    %v1807 = vunpack.c.l.bf16 %v1034
    %v1808 = vunpack.c.l.bf16 %v1035
    %v1809 = vunpack.c.l.bf16 %v1036
    %v1810 = vunpack.c.l.bf16 %v1037
    %v1811 = vunpack.c.l.bf16 %v1038
    %v1812 = vunpack.c.l.bf16 %v1039
    %v1813 = vunpack.c.l.bf16 %v1040
    %v1814 = vunpack.c.l.bf16 %v1041
    %v1815 = vunpack.c.l.bf16 %v1042
    %v1816 = vunpack.c.l.bf16 %v1043
    %v1817 = vunpack.c.l.bf16 %v1044
    %v1818 = vunpack.c.l.bf16 %v1045
    %v1819 = vunpack.c.l.bf16 %v1046
    %v1820 = vunpack.c.l.bf16 %v1047
    %v1821 = vunpack.c.l.bf16 %v1048
    %v1822 = vunpack.c.l.bf16 %v1049
    %v1823 = vunpack.c.l.bf16 %v1050
    %v1824 = vunpack.c.l.bf16 %v1051
    %v1825 = vunpack.c.l.bf16 %v1052
    %v1826 = vunpack.c.l.bf16 %v1053
    %v1827 = vunpack.c.l.bf16 %v1054
    %v1828 = vunpack.c.l.bf16 %v1055
    %v1829 = vunpack.c.l.bf16 %v1056
    %v1830 = vunpack.c.l.bf16 %v1057
    %v1831 = vunpack.c.l.bf16 %v1703
    %v1832 = vunpack.c.l.bf16 %v1704
    %v1833 = vunpack.c.l.bf16 %v1705
    %v1834 = vunpack.c.l.bf16 %v1706
    %v1835 = vunpack.c.l.bf16 %v1707
    %v1836 = vunpack.c.l.bf16 %v1708
    %v1837 = vunpack.c.l.bf16 %v1709
    %v1838 = vunpack.c.l.bf16 %v1710
    %v1839 = vunpack.c.l.bf16 %v1711
    %v1840 = vunpack.c.l.bf16 %v1712
    %v1841 = vunpack.c.l.bf16 %v1713
    %v1842 = vunpack.c.l.bf16 %v1714
    %v1843 = vunpack.c.l.bf16 %v1715
    %v1844 = vunpack.c.l.bf16 %v1716
    %v1845 = vunpack.c.l.bf16 %v1717
    %v1846 = vunpack.c.l.bf16 %v1718
    %v1847 = vunpack.c.l.bf16 %v1719
    %v1848 = vunpack.c.l.bf16 %v1720
    %v1849 = vunpack.c.l.bf16 %v1721
    %v1850 = vunpack.c.l.bf16 %v1722
    %v1851 = vunpack.c.l.bf16 %v1723
    %v1852 = vunpack.c.l.bf16 %v1724
    %v1853 = vunpack.c.l.bf16 %v1725
    %v1854 = vunpack.c.l.bf16 %v1726
    %v1855 = vunpack.c.l.bf16 %v1727
    %v1856 = vunpack.c.l.bf16 %v1728
    %v1857 = vunpack.c.l.bf16 %v1729
    %v1858 = vunpack.c.l.bf16 %v1730
    %v1859 = vunpack.c.l.bf16 %v1731
    %v1860 = vunpack.c.l.bf16 %v1732
    %v1861 = vunpack.c.l.bf16 %v1733
    %v1862 = vunpack.c.l.bf16 %v1734
    %v1863 = vunpack.c.l.bf16 %v1735
    %v1864 = vunpack.c.l.bf16 %v1736
    %v1865 = vunpack.c.l.bf16 %v1737
    %v1866 = vunpack.c.l.bf16 %v1738
    %v1867 = vunpack.c.l.bf16 %v1739
    %v1868 = vunpack.c.l.bf16 %v1740
    %v1869 = vunpack.c.l.bf16 %v1741
    %v1870 = vunpack.c.l.bf16 %v1742
    %v1871 = vunpack.c.l.bf16 %v1743
    %v1872 = vunpack.c.l.bf16 %v1744
    %v1873 = vunpack.c.l.bf16 %v1745
    %v1874 = vunpack.c.l.bf16 %v1746
    %v1875 = vunpack.c.l.bf16 %v1747
    %v1876 = vunpack.c.l.bf16 %v1748
    %v1877 = vunpack.c.l.bf16 %v1749
    %v1878 = vunpack.c.l.bf16 %v1750
    %v1879 = vunpack.c.l.bf16 %v1751
    %v1880 = vunpack.c.l.bf16 %v1752
    %v1881 = vunpack.c.l.bf16 %v1753
    %v1882 = vunpack.c.l.bf16 %v1754
    %v1883 = vunpack.c.l.bf16 %v1755
    %v1884 = vunpack.c.l.bf16 %v1756
    %v1885 = vunpack.c.l.bf16 %v1757
    %v1886 = vunpack.c.l.bf16 %v1758
    %v1887 = vunpack.c.l.bf16 %v1759
    %v1888 = vunpack.c.l.bf16 %v1760
    %v1889 = vunpack.c.l.bf16 %v1761
    %v1890 = vunpack.c.l.bf16 %v1762
    %v1891 = vunpack.c.l.bf16 %v1763
    %v1892 = vunpack.c.l.bf16 %v1764
    %v1893 = vunpack.c.l.bf16 %v1765
    %v1894 = vunpack.c.l.bf16 %v1766
    %v1895 = vadd.f32 %v1767, %v1831
    %v1896 = vadd.f32 %v1768, %v1832
    %v1897 = vadd.f32 %v1769, %v1833
    %v1898 = vadd.f32 %v1770, %v1834
    %v1899 = vadd.f32 %v1771, %v1835
    %v1900 = vadd.f32 %v1772, %v1836
    %v1901 = vadd.f32 %v1773, %v1837
    %v1902 = vadd.f32 %v1774, %v1838
    %v1903 = vadd.f32 %v1775, %v1839
    %v1904 = vadd.f32 %v1776, %v1840
    %v1905 = vadd.f32 %v1777, %v1841
    %v1906 = vadd.f32 %v1778, %v1842
    %v1907 = vadd.f32 %v1779, %v1843
    %v1908 = vadd.f32 %v1780, %v1844
    %v1909 = vadd.f32 %v1781, %v1845
    %v1910 = vadd.f32 %v1782, %v1846
    %v1911 = vadd.f32 %v1783, %v1847
    %v1912 = vadd.f32 %v1784, %v1848
    %v1913 = vadd.f32 %v1785, %v1849
    %v1914 = vadd.f32 %v1786, %v1850
    %v1915 = vadd.f32 %v1787, %v1851
    %v1916 = vadd.f32 %v1788, %v1852
    %v1917 = vadd.f32 %v1789, %v1853
    %v1918 = vadd.f32 %v1790, %v1854
    %v1919 = vadd.f32 %v1791, %v1855
    %v1920 = vadd.f32 %v1792, %v1856
    %v1921 = vadd.f32 %v1793, %v1857
    %v1922 = vadd.f32 %v1794, %v1858
    %v1923 = vadd.f32 %v1795, %v1859
    %v1924 = vadd.f32 %v1796, %v1860
    %v1925 = vadd.f32 %v1797, %v1861
    %v1926 = vadd.f32 %v1798, %v1862
    %v1927 = vadd.f32 %v1799, %v1863
    %v1928 = vadd.f32 %v1800, %v1864
    %v1929 = vadd.f32 %v1801, %v1865
    %v1930 = vadd.f32 %v1802, %v1866
    %v1931 = vadd.f32 %v1803, %v1867
    %v1932 = vadd.f32 %v1804, %v1868
    %v1933 = vadd.f32 %v1805, %v1869
    %v1934 = vadd.f32 %v1806, %v1870
    %v1935 = vadd.f32 %v1807, %v1871
    %v1936 = vadd.f32 %v1808, %v1872
    %v1937 = vadd.f32 %v1809, %v1873
    %v1938 = vadd.f32 %v1810, %v1874
    %v1939 = vadd.f32 %v1811, %v1875
    %v1940 = vadd.f32 %v1812, %v1876
    %v1941 = vadd.f32 %v1813, %v1877
    %v1942 = vadd.f32 %v1814, %v1878
    %v1943 = vadd.f32 %v1815, %v1879
    %v1944 = vadd.f32 %v1816, %v1880
    %v1945 = vadd.f32 %v1817, %v1881
    %v1946 = vadd.f32 %v1818, %v1882
    %v1947 = vadd.f32 %v1819, %v1883
    %v1948 = vadd.f32 %v1820, %v1884
    %v1949 = vadd.f32 %v1821, %v1885
    %v1950 = vadd.f32 %v1822, %v1886
    %v1951 = vadd.f32 %v1823, %v1887
    %v1952 = vadd.f32 %v1824, %v1888
    %v1953 = vadd.f32 %v1825, %v1889
    %v1954 = vadd.f32 %v1826, %v1890
    %v1955 = vadd.f32 %v1827, %v1891
    %v1956 = vadd.f32 %v1828, %v1892
    %v1957 = vadd.f32 %v1829, %v1893
    %v1958 = vadd.f32 %v1830, %v1894
    %v1959 = vpack.c.bf16 %v1895, %v1895
    %v1960 = vpack.c.bf16 %v1896, %v1896
    %v1961 = vpack.c.bf16 %v1897, %v1897
    %v1962 = vpack.c.bf16 %v1898, %v1898
    %v1963 = vpack.c.bf16 %v1899, %v1899
    %v1964 = vpack.c.bf16 %v1900, %v1900
    %v1965 = vpack.c.bf16 %v1901, %v1901
    %v1966 = vpack.c.bf16 %v1902, %v1902
    %v1967 = vpack.c.bf16 %v1903, %v1903
    %v1968 = vpack.c.bf16 %v1904, %v1904
    %v1969 = vpack.c.bf16 %v1905, %v1905
    %v1970 = vpack.c.bf16 %v1906, %v1906
    %v1971 = vpack.c.bf16 %v1907, %v1907
    %v1972 = vpack.c.bf16 %v1908, %v1908
    %v1973 = vpack.c.bf16 %v1909, %v1909
    %v1974 = vpack.c.bf16 %v1910, %v1910
    %v1975 = vpack.c.bf16 %v1911, %v1911
    %v1976 = vpack.c.bf16 %v1912, %v1912
    %v1977 = vpack.c.bf16 %v1913, %v1913
    %v1978 = vpack.c.bf16 %v1914, %v1914
    %v1979 = vpack.c.bf16 %v1915, %v1915
    %v1980 = vpack.c.bf16 %v1916, %v1916
    %v1981 = vpack.c.bf16 %v1917, %v1917
    %v1982 = vpack.c.bf16 %v1918, %v1918
    %v1983 = vpack.c.bf16 %v1919, %v1919
    %v1984 = vpack.c.bf16 %v1920, %v1920
    %v1985 = vpack.c.bf16 %v1921, %v1921
    %v1986 = vpack.c.bf16 %v1922, %v1922
    %v1987 = vpack.c.bf16 %v1923, %v1923
    %v1988 = vpack.c.bf16 %v1924, %v1924
    %v1989 = vpack.c.bf16 %v1925, %v1925
    %v1990 = vpack.c.bf16 %v1926, %v1926
    %v1991 = vpack.c.bf16 %v1927, %v1927
    %v1992 = vpack.c.bf16 %v1928, %v1928
    %v1993 = vpack.c.bf16 %v1929, %v1929
    %v1994 = vpack.c.bf16 %v1930, %v1930
    %v1995 = vpack.c.bf16 %v1931, %v1931
    %v1996 = vpack.c.bf16 %v1932, %v1932
    %v1997 = vpack.c.bf16 %v1933, %v1933
    %v1998 = vpack.c.bf16 %v1934, %v1934
    %v1999 = vpack.c.bf16 %v1935, %v1935
    %v2000 = vpack.c.bf16 %v1936, %v1936
    %v2001 = vpack.c.bf16 %v1937, %v1937
    %v2002 = vpack.c.bf16 %v1938, %v1938
    %v2003 = vpack.c.bf16 %v1939, %v1939
    %v2004 = vpack.c.bf16 %v1940, %v1940
    %v2005 = vpack.c.bf16 %v1941, %v1941
    %v2006 = vpack.c.bf16 %v1942, %v1942
    %v2007 = vpack.c.bf16 %v1943, %v1943
    %v2008 = vpack.c.bf16 %v1944, %v1944
    %v2009 = vpack.c.bf16 %v1945, %v1945
    %v2010 = vpack.c.bf16 %v1946, %v1946
    %v2011 = vpack.c.bf16 %v1947, %v1947
    %v2012 = vpack.c.bf16 %v1948, %v1948
    %v2013 = vpack.c.bf16 %v1949, %v1949
    %v2014 = vpack.c.bf16 %v1950, %v1950
    %v2015 = vpack.c.bf16 %v1951, %v1951
    %v2016 = vpack.c.bf16 %v1952, %v1952
    %v2017 = vpack.c.bf16 %v1953, %v1953
    %v2018 = vpack.c.bf16 %v1954, %v1954
    %v2019 = vpack.c.bf16 %v1955, %v1955
    %v2020 = vpack.c.bf16 %v1956, %v1956
    %v2021 = vpack.c.bf16 %v1957, %v1957
    %v2022 = vpack.c.bf16 %v1958, %v1958
    %2024 = vset.pattern.permute.xlu0 0
    %2025 = vperm.xlu0 %2024, %v221
    %v2026 = vpop.permute.xlu0 %2025
    %v2029 = vunpack.c.l.s4 839922192
    %v2030 = vunpack.c.0.s8 %v2029
    %v2031 = vperm.slane %v2026, %v2030
    %2033 = vset.pattern.permute.xlu0 0
    %2034 = vperm.xlu0 %2033, %v222
    %v2035 = vpop.permute.xlu0 %2034
    %v2038 = vunpack.c.l.s4 839922192
    %v2039 = vunpack.c.0.s8 %v2038
    %v2040 = vperm.slane %v2035, %v2039
    %2042 = vset.pattern.permute.xlu0 0
    %2043 = vperm.xlu0 %2042, %v223
    %v2044 = vpop.permute.xlu0 %2043
    %v2047 = vunpack.c.l.s4 839922192
    %v2048 = vunpack.c.0.s8 %v2047
    %v2049 = vperm.slane %v2044, %v2048
    %2051 = vset.pattern.permute.xlu0 0
    %2052 = vperm.xlu0 %2051, %v224
    %v2053 = vpop.permute.xlu0 %2052
    %v2056 = vunpack.c.l.s4 839922192
    %v2057 = vunpack.c.0.s8 %v2056
    %v2058 = vperm.slane %v2053, %v2057
    %2060 = vset.pattern.permute.xlu0 0
    %2061 = vperm.xlu0 %2060, %v225
    %v2062 = vpop.permute.xlu0 %2061
    %v2065 = vunpack.c.l.s4 839922192
    %v2066 = vunpack.c.0.s8 %v2065
    %v2067 = vperm.slane %v2062, %v2066
    %2069 = vset.pattern.permute.xlu0 0
    %2070 = vperm.xlu0 %2069, %v226
    %v2071 = vpop.permute.xlu0 %2070
    %v2074 = vunpack.c.l.s4 839922192
    %v2075 = vunpack.c.0.s8 %v2074
    %v2076 = vperm.slane %v2071, %v2075
    %2078 = vset.pattern.permute.xlu0 0
    %2079 = vperm.xlu0 %2078, %v227
    %v2080 = vpop.permute.xlu0 %2079
    %v2083 = vunpack.c.l.s4 839922192
    %v2084 = vunpack.c.0.s8 %v2083
    %v2085 = vperm.slane %v2080, %v2084
    %2087 = vset.pattern.permute.xlu0 0
    %2088 = vperm.xlu0 %2087, %v228
    %v2089 = vpop.permute.xlu0 %2088
    %v2092 = vunpack.c.l.s4 839922192
    %v2093 = vunpack.c.0.s8 %v2092
    %v2094 = vperm.slane %v2089, %v2093
    %2096 = vset.pattern.permute.xlu0 0
    %2097 = vperm.xlu0 %2096, %v229
    %v2098 = vpop.permute.xlu0 %2097
    %v2101 = vunpack.c.l.s4 839922192
    %v2102 = vunpack.c.0.s8 %v2101
    %v2103 = vperm.slane %v2098, %v2102
    %2105 = vset.pattern.permute.xlu0 0
    %2106 = vperm.xlu0 %2105, %v230
    %v2107 = vpop.permute.xlu0 %2106
    %v2110 = vunpack.c.l.s4 839922192
    %v2111 = vunpack.c.0.s8 %v2110
    %v2112 = vperm.slane %v2107, %v2111
    %2114 = vset.pattern.permute.xlu0 0
    %2115 = vperm.xlu0 %2114, %v231
    %v2116 = vpop.permute.xlu0 %2115
    %v2119 = vunpack.c.l.s4 839922192
    %v2120 = vunpack.c.0.s8 %v2119
    %v2121 = vperm.slane %v2116, %v2120
    %2123 = vset.pattern.permute.xlu0 0
    %2124 = vperm.xlu0 %2123, %v232
    %v2125 = vpop.permute.xlu0 %2124
    %v2128 = vunpack.c.l.s4 839922192
    %v2129 = vunpack.c.0.s8 %v2128
    %v2130 = vperm.slane %v2125, %v2129
    %2132 = vset.pattern.permute.xlu0 0
    %2133 = vperm.xlu0 %2132, %v233
    %v2134 = vpop.permute.xlu0 %2133
    %v2137 = vunpack.c.l.s4 839922192
    %v2138 = vunpack.c.0.s8 %v2137
    %v2139 = vperm.slane %v2134, %v2138
    %2141 = vset.pattern.permute.xlu0 0
    %2142 = vperm.xlu0 %2141, %v234
    %v2143 = vpop.permute.xlu0 %2142
    %v2146 = vunpack.c.l.s4 839922192
    %v2147 = vunpack.c.0.s8 %v2146
    %v2148 = vperm.slane %v2143, %v2147
    %2150 = vset.pattern.permute.xlu0 0
    %2151 = vperm.xlu0 %2150, %v235
    %v2152 = vpop.permute.xlu0 %2151
    %v2155 = vunpack.c.l.s4 839922192
    %v2156 = vunpack.c.0.s8 %v2155
    %v2157 = vperm.slane %v2152, %v2156
    %2159 = vset.pattern.permute.xlu0 0
    %2160 = vperm.xlu0 %2159, %v236
    %v2161 = vpop.permute.xlu0 %2160
    %v2164 = vunpack.c.l.s4 839922192
    %v2165 = vunpack.c.0.s8 %v2164
    %v2166 = vperm.slane %v2161, %v2165
    %2168 = vset.pattern.permute.xlu0 0
    %2169 = vperm.xlu0 %2168, %v237
    %v2170 = vpop.permute.xlu0 %2169
    %v2173 = vunpack.c.l.s4 839922192
    %v2174 = vunpack.c.0.s8 %v2173
    %v2175 = vperm.slane %v2170, %v2174
    %2177 = vset.pattern.permute.xlu0 0
    %2178 = vperm.xlu0 %2177, %v238
    %v2179 = vpop.permute.xlu0 %2178
    %v2182 = vunpack.c.l.s4 839922192
    %v2183 = vunpack.c.0.s8 %v2182
    %v2184 = vperm.slane %v2179, %v2183
    %2186 = vset.pattern.permute.xlu0 0
    %2187 = vperm.xlu0 %2186, %v239
    %v2188 = vpop.permute.xlu0 %2187
    %v2191 = vunpack.c.l.s4 839922192
    %v2192 = vunpack.c.0.s8 %v2191
    %v2193 = vperm.slane %v2188, %v2192
    %2195 = vset.pattern.permute.xlu0 0
    %2196 = vperm.xlu0 %2195, %v240
    %v2197 = vpop.permute.xlu0 %2196
    %v2200 = vunpack.c.l.s4 839922192
    %v2201 = vunpack.c.0.s8 %v2200
    %v2202 = vperm.slane %v2197, %v2201
    %2204 = vset.pattern.permute.xlu0 0
    %2205 = vperm.xlu0 %2204, %v241
    %v2206 = vpop.permute.xlu0 %2205
    %v2209 = vunpack.c.l.s4 839922192
    %v2210 = vunpack.c.0.s8 %v2209
    %v2211 = vperm.slane %v2206, %v2210
    %2213 = vset.pattern.permute.xlu0 0
    %2214 = vperm.xlu0 %2213, %v242
    %v2215 = vpop.permute.xlu0 %2214
    %v2218 = vunpack.c.l.s4 839922192
    %v2219 = vunpack.c.0.s8 %v2218
    %v2220 = vperm.slane %v2215, %v2219
    %2222 = vset.pattern.permute.xlu0 0
    %2223 = vperm.xlu0 %2222, %v243
    %v2224 = vpop.permute.xlu0 %2223
    %v2227 = vunpack.c.l.s4 839922192
    %v2228 = vunpack.c.0.s8 %v2227
    %v2229 = vperm.slane %v2224, %v2228
    %2231 = vset.pattern.permute.xlu0 0
    %2232 = vperm.xlu0 %2231, %v244
    %v2233 = vpop.permute.xlu0 %2232
    %v2236 = vunpack.c.l.s4 839922192
    %v2237 = vunpack.c.0.s8 %v2236
    %v2238 = vperm.slane %v2233, %v2237
    %2240 = vset.pattern.permute.xlu0 0
    %2241 = vperm.xlu0 %2240, %v245
    %v2242 = vpop.permute.xlu0 %2241
    %v2245 = vunpack.c.l.s4 839922192
    %v2246 = vunpack.c.0.s8 %v2245
    %v2247 = vperm.slane %v2242, %v2246
    %2249 = vset.pattern.permute.xlu0 0
    %2250 = vperm.xlu0 %2249, %v246
    %v2251 = vpop.permute.xlu0 %2250
    %v2254 = vunpack.c.l.s4 839922192
    %v2255 = vunpack.c.0.s8 %v2254
    %v2256 = vperm.slane %v2251, %v2255
    %2258 = vset.pattern.permute.xlu0 0
    %2259 = vperm.xlu0 %2258, %v247
    %v2260 = vpop.permute.xlu0 %2259
    %v2263 = vunpack.c.l.s4 839922192
    %v2264 = vunpack.c.0.s8 %v2263
    %v2265 = vperm.slane %v2260, %v2264
    %2267 = vset.pattern.permute.xlu0 0
    %2268 = vperm.xlu0 %2267, %v248
    %v2269 = vpop.permute.xlu0 %2268
    %v2272 = vunpack.c.l.s4 839922192
    %v2273 = vunpack.c.0.s8 %v2272
    %v2274 = vperm.slane %v2269, %v2273
    %2276 = vset.pattern.permute.xlu0 0
    %2277 = vperm.xlu0 %2276, %v249
    %v2278 = vpop.permute.xlu0 %2277
    %v2281 = vunpack.c.l.s4 839922192
    %v2282 = vunpack.c.0.s8 %v2281
    %v2283 = vperm.slane %v2278, %v2282
    %2285 = vset.pattern.permute.xlu0 0
    %2286 = vperm.xlu0 %2285, %v250
    %v2287 = vpop.permute.xlu0 %2286
    %v2290 = vunpack.c.l.s4 839922192
    %v2291 = vunpack.c.0.s8 %v2290
    %v2292 = vperm.slane %v2287, %v2291
    %2294 = vset.pattern.permute.xlu0 0
    %2295 = vperm.xlu0 %2294, %v251
    %v2296 = vpop.permute.xlu0 %2295
    %v2299 = vunpack.c.l.s4 839922192
    %v2300 = vunpack.c.0.s8 %v2299
    %v2301 = vperm.slane %v2296, %v2300
    %2303 = vset.pattern.permute.xlu0 0
    %2304 = vperm.xlu0 %2303, %v252
    %v2305 = vpop.permute.xlu0 %2304
    %v2308 = vunpack.c.l.s4 839922192
    %v2309 = vunpack.c.0.s8 %v2308
    %v2310 = vperm.slane %v2305, %v2309
    %2312 = vset.pattern.permute.xlu0 0
    %2313 = vperm.xlu0 %2312, %v253
    %v2314 = vpop.permute.xlu0 %2313
    %v2317 = vunpack.c.l.s4 839922192
    %v2318 = vunpack.c.0.s8 %v2317
    %v2319 = vperm.slane %v2314, %v2318
    %2321 = vset.pattern.permute.xlu0 0
    %2322 = vperm.xlu0 %2321, %v254
    %v2323 = vpop.permute.xlu0 %2322
    %v2326 = vunpack.c.l.s4 839922192
    %v2327 = vunpack.c.0.s8 %v2326
    %v2328 = vperm.slane %v2323, %v2327
    %2330 = vset.pattern.permute.xlu0 0
    %2331 = vperm.xlu0 %2330, %v255
    %v2332 = vpop.permute.xlu0 %2331
    %v2335 = vunpack.c.l.s4 839922192
    %v2336 = vunpack.c.0.s8 %v2335
    %v2337 = vperm.slane %v2332, %v2336
    %2339 = vset.pattern.permute.xlu0 0
    %2340 = vperm.xlu0 %2339, %v256
    %v2341 = vpop.permute.xlu0 %2340
    %v2344 = vunpack.c.l.s4 839922192
    %v2345 = vunpack.c.0.s8 %v2344
    %v2346 = vperm.slane %v2341, %v2345
    %2348 = vset.pattern.permute.xlu0 0
    %2349 = vperm.xlu0 %2348, %v257
    %v2350 = vpop.permute.xlu0 %2349
    %v2353 = vunpack.c.l.s4 839922192
    %v2354 = vunpack.c.0.s8 %v2353
    %v2355 = vperm.slane %v2350, %v2354
    %2357 = vset.pattern.permute.xlu0 0
    %2358 = vperm.xlu0 %2357, %v258
    %v2359 = vpop.permute.xlu0 %2358
    %v2362 = vunpack.c.l.s4 839922192
    %v2363 = vunpack.c.0.s8 %v2362
    %v2364 = vperm.slane %v2359, %v2363
    %2366 = vset.pattern.permute.xlu0 0
    %2367 = vperm.xlu0 %2366, %v259
    %v2368 = vpop.permute.xlu0 %2367
    %v2371 = vunpack.c.l.s4 839922192
    %v2372 = vunpack.c.0.s8 %v2371
    %v2373 = vperm.slane %v2368, %v2372
    %2375 = vset.pattern.permute.xlu0 0
    %2376 = vperm.xlu0 %2375, %v260
    %v2377 = vpop.permute.xlu0 %2376
    %v2380 = vunpack.c.l.s4 839922192
    %v2381 = vunpack.c.0.s8 %v2380
    %v2382 = vperm.slane %v2377, %v2381
    %2384 = vset.pattern.permute.xlu0 0
    %2385 = vperm.xlu0 %2384, %v261
    %v2386 = vpop.permute.xlu0 %2385
    %v2389 = vunpack.c.l.s4 839922192
    %v2390 = vunpack.c.0.s8 %v2389
    %v2391 = vperm.slane %v2386, %v2390
    %2393 = vset.pattern.permute.xlu0 0
    %2394 = vperm.xlu0 %2393, %v262
    %v2395 = vpop.permute.xlu0 %2394
    %v2398 = vunpack.c.l.s4 839922192
    %v2399 = vunpack.c.0.s8 %v2398
    %v2400 = vperm.slane %v2395, %v2399
    %2402 = vset.pattern.permute.xlu0 0
    %2403 = vperm.xlu0 %2402, %v263
    %v2404 = vpop.permute.xlu0 %2403
    %v2407 = vunpack.c.l.s4 839922192
    %v2408 = vunpack.c.0.s8 %v2407
    %v2409 = vperm.slane %v2404, %v2408
    %2411 = vset.pattern.permute.xlu0 0
    %2412 = vperm.xlu0 %2411, %v264
    %v2413 = vpop.permute.xlu0 %2412
    %v2416 = vunpack.c.l.s4 839922192
    %v2417 = vunpack.c.0.s8 %v2416
    %v2418 = vperm.slane %v2413, %v2417
    %2420 = vset.pattern.permute.xlu0 0
    %2421 = vperm.xlu0 %2420, %v265
    %v2422 = vpop.permute.xlu0 %2421
    %v2425 = vunpack.c.l.s4 839922192
    %v2426 = vunpack.c.0.s8 %v2425
    %v2427 = vperm.slane %v2422, %v2426
    %2429 = vset.pattern.permute.xlu0 0
    %2430 = vperm.xlu0 %2429, %v266
    %v2431 = vpop.permute.xlu0 %2430
    %v2434 = vunpack.c.l.s4 839922192
    %v2435 = vunpack.c.0.s8 %v2434
    %v2436 = vperm.slane %v2431, %v2435
    %2438 = vset.pattern.permute.xlu0 0
    %2439 = vperm.xlu0 %2438, %v267
    %v2440 = vpop.permute.xlu0 %2439
    %v2443 = vunpack.c.l.s4 839922192
    %v2444 = vunpack.c.0.s8 %v2443
    %v2445 = vperm.slane %v2440, %v2444
    %2447 = vset.pattern.permute.xlu0 0
    %2448 = vperm.xlu0 %2447, %v268
    %v2449 = vpop.permute.xlu0 %2448
    %v2452 = vunpack.c.l.s4 839922192
    %v2453 = vunpack.c.0.s8 %v2452
    %v2454 = vperm.slane %v2449, %v2453
    %2456 = vset.pattern.permute.xlu0 0
    %2457 = vperm.xlu0 %2456, %v269
    %v2458 = vpop.permute.xlu0 %2457
    %v2461 = vunpack.c.l.s4 839922192
    %v2462 = vunpack.c.0.s8 %v2461
    %v2463 = vperm.slane %v2458, %v2462
    %2465 = vset.pattern.permute.xlu0 0
    %2466 = vperm.xlu0 %2465, %v270
    %v2467 = vpop.permute.xlu0 %2466
    %v2470 = vunpack.c.l.s4 839922192
    %v2471 = vunpack.c.0.s8 %v2470
    %v2472 = vperm.slane %v2467, %v2471
    %2474 = vset.pattern.permute.xlu0 0
    %2475 = vperm.xlu0 %2474, %v271
    %v2476 = vpop.permute.xlu0 %2475
    %v2479 = vunpack.c.l.s4 839922192
    %v2480 = vunpack.c.0.s8 %v2479
    %v2481 = vperm.slane %v2476, %v2480
    %2483 = vset.pattern.permute.xlu0 0
    %2484 = vperm.xlu0 %2483, %v272
    %v2485 = vpop.permute.xlu0 %2484
    %v2488 = vunpack.c.l.s4 839922192
    %v2489 = vunpack.c.0.s8 %v2488
    %v2490 = vperm.slane %v2485, %v2489
    %2492 = vset.pattern.permute.xlu0 0
    %2493 = vperm.xlu0 %2492, %v273
    %v2494 = vpop.permute.xlu0 %2493
    %v2497 = vunpack.c.l.s4 839922192
    %v2498 = vunpack.c.0.s8 %v2497
    %v2499 = vperm.slane %v2494, %v2498
    %2501 = vset.pattern.permute.xlu0 0
    %2502 = vperm.xlu0 %2501, %v274
    %v2503 = vpop.permute.xlu0 %2502
    %v2506 = vunpack.c.l.s4 839922192
    %v2507 = vunpack.c.0.s8 %v2506
    %v2508 = vperm.slane %v2503, %v2507
    %2510 = vset.pattern.permute.xlu0 0
    %2511 = vperm.xlu0 %2510, %v275
    %v2512 = vpop.permute.xlu0 %2511
    %v2515 = vunpack.c.l.s4 839922192
    %v2516 = vunpack.c.0.s8 %v2515
    %v2517 = vperm.slane %v2512, %v2516
    %2519 = vset.pattern.permute.xlu0 0
    %2520 = vperm.xlu0 %2519, %v276
    %v2521 = vpop.permute.xlu0 %2520
    %v2524 = vunpack.c.l.s4 839922192
    %v2525 = vunpack.c.0.s8 %v2524
    %v2526 = vperm.slane %v2521, %v2525
    %2528 = vset.pattern.permute.xlu0 0
    %2529 = vperm.xlu0 %2528, %v277
    %v2530 = vpop.permute.xlu0 %2529
    %v2533 = vunpack.c.l.s4 839922192
    %v2534 = vunpack.c.0.s8 %v2533
    %v2535 = vperm.slane %v2530, %v2534
    %2537 = vset.pattern.permute.xlu0 0
    %2538 = vperm.xlu0 %2537, %v278
    %v2539 = vpop.permute.xlu0 %2538
    %v2542 = vunpack.c.l.s4 839922192
    %v2543 = vunpack.c.0.s8 %v2542
    %v2544 = vperm.slane %v2539, %v2543
    %2546 = vset.pattern.permute.xlu0 0
    %2547 = vperm.xlu0 %2546, %v279
    %v2548 = vpop.permute.xlu0 %2547
    %v2551 = vunpack.c.l.s4 839922192
    %v2552 = vunpack.c.0.s8 %v2551
    %v2553 = vperm.slane %v2548, %v2552
    %2555 = vset.pattern.permute.xlu0 0
    %2556 = vperm.xlu0 %2555, %v280
    %v2557 = vpop.permute.xlu0 %2556
    %v2560 = vunpack.c.l.s4 839922192
    %v2561 = vunpack.c.0.s8 %v2560
    %v2562 = vperm.slane %v2557, %v2561
    %2564 = vset.pattern.permute.xlu0 0
    %2565 = vperm.xlu0 %2564, %v281
    %v2566 = vpop.permute.xlu0 %2565
    %v2569 = vunpack.c.l.s4 839922192
    %v2570 = vunpack.c.0.s8 %v2569
    %v2571 = vperm.slane %v2566, %v2570
    %2573 = vset.pattern.permute.xlu0 0
    %2574 = vperm.xlu0 %2573, %v282
    %v2575 = vpop.permute.xlu0 %2574
    %v2578 = vunpack.c.l.s4 839922192
    %v2579 = vunpack.c.0.s8 %v2578
    %v2580 = vperm.slane %v2575, %v2579
    %2582 = vset.pattern.permute.xlu0 0
    %2583 = vperm.xlu0 %2582, %v283
    %v2584 = vpop.permute.xlu0 %2583
    %v2587 = vunpack.c.l.s4 839922192
    %v2588 = vunpack.c.0.s8 %v2587
    %v2589 = vperm.slane %v2584, %v2588
    %2591 = vset.pattern.permute.xlu0 0
    %2592 = vperm.xlu0 %2591, %v284
    %v2593 = vpop.permute.xlu0 %2592
    %v2596 = vunpack.c.l.s4 839922192
    %v2597 = vunpack.c.0.s8 %v2596
    %v2598 = vperm.slane %v2593, %v2597
    %v2599 = vunpack.c.l.bf16 %v1959
    %v2600 = vunpack.c.l.bf16 %v1960
    %v2601 = vunpack.c.l.bf16 %v1961
    %v2602 = vunpack.c.l.bf16 %v1962
    %v2603 = vunpack.c.l.bf16 %v1963
    %v2604 = vunpack.c.l.bf16 %v1964
    %v2605 = vunpack.c.l.bf16 %v1965
    %v2606 = vunpack.c.l.bf16 %v1966
    %v2607 = vunpack.c.l.bf16 %v1967
    %v2608 = vunpack.c.l.bf16 %v1968
    %v2609 = vunpack.c.l.bf16 %v1969
    %v2610 = vunpack.c.l.bf16 %v1970
    %v2611 = vunpack.c.l.bf16 %v1971
    %v2612 = vunpack.c.l.bf16 %v1972
    %v2613 = vunpack.c.l.bf16 %v1973
    %v2614 = vunpack.c.l.bf16 %v1974
    %v2615 = vunpack.c.l.bf16 %v1975
    %v2616 = vunpack.c.l.bf16 %v1976
    %v2617 = vunpack.c.l.bf16 %v1977
    %v2618 = vunpack.c.l.bf16 %v1978
    %v2619 = vunpack.c.l.bf16 %v1979
    %v2620 = vunpack.c.l.bf16 %v1980
    %v2621 = vunpack.c.l.bf16 %v1981
    %v2622 = vunpack.c.l.bf16 %v1982
    %v2623 = vunpack.c.l.bf16 %v1983
    %v2624 = vunpack.c.l.bf16 %v1984
    %v2625 = vunpack.c.l.bf16 %v1985
    %v2626 = vunpack.c.l.bf16 %v1986
    %v2627 = vunpack.c.l.bf16 %v1987
    %v2628 = vunpack.c.l.bf16 %v1988
    %v2629 = vunpack.c.l.bf16 %v1989
    %v2630 = vunpack.c.l.bf16 %v1990
    %v2631 = vunpack.c.l.bf16 %v1991
    %v2632 = vunpack.c.l.bf16 %v1992
    %v2633 = vunpack.c.l.bf16 %v1993
    %v2634 = vunpack.c.l.bf16 %v1994
    %v2635 = vunpack.c.l.bf16 %v1995
    %v2636 = vunpack.c.l.bf16 %v1996
    %v2637 = vunpack.c.l.bf16 %v1997
    %v2638 = vunpack.c.l.bf16 %v1998
    %v2639 = vunpack.c.l.bf16 %v1999
    %v2640 = vunpack.c.l.bf16 %v2000
    %v2641 = vunpack.c.l.bf16 %v2001
    %v2642 = vunpack.c.l.bf16 %v2002
    %v2643 = vunpack.c.l.bf16 %v2003
    %v2644 = vunpack.c.l.bf16 %v2004
    %v2645 = vunpack.c.l.bf16 %v2005
    %v2646 = vunpack.c.l.bf16 %v2006
    %v2647 = vunpack.c.l.bf16 %v2007
    %v2648 = vunpack.c.l.bf16 %v2008
    %v2649 = vunpack.c.l.bf16 %v2009
    %v2650 = vunpack.c.l.bf16 %v2010
    %v2651 = vunpack.c.l.bf16 %v2011
    %v2652 = vunpack.c.l.bf16 %v2012
    %v2653 = vunpack.c.l.bf16 %v2013
    %v2654 = vunpack.c.l.bf16 %v2014
    %v2655 = vunpack.c.l.bf16 %v2015
    %v2656 = vunpack.c.l.bf16 %v2016
    %v2657 = vunpack.c.l.bf16 %v2017
    %v2658 = vunpack.c.l.bf16 %v2018
    %v2659 = vunpack.c.l.bf16 %v2019
    %v2660 = vunpack.c.l.bf16 %v2020
    %v2661 = vunpack.c.l.bf16 %v2021
    %v2662 = vunpack.c.l.bf16 %v2022
    %v2663 = vunpack.c.l.bf16 %v2031
    %v2664 = vunpack.c.l.bf16 %v2040
    %v2665 = vunpack.c.l.bf16 %v2049
    %v2666 = vunpack.c.l.bf16 %v2058
    %v2667 = vunpack.c.l.bf16 %v2067
    %v2668 = vunpack.c.l.bf16 %v2076
    %v2669 = vunpack.c.l.bf16 %v2085
    %v2670 = vunpack.c.l.bf16 %v2094
    %v2671 = vunpack.c.l.bf16 %v2103
    %v2672 = vunpack.c.l.bf16 %v2112
    %v2673 = vunpack.c.l.bf16 %v2121
    %v2674 = vunpack.c.l.bf16 %v2130
    %v2675 = vunpack.c.l.bf16 %v2139
    %v2676 = vunpack.c.l.bf16 %v2148
    %v2677 = vunpack.c.l.bf16 %v2157
    %v2678 = vunpack.c.l.bf16 %v2166
    %v2679 = vunpack.c.l.bf16 %v2175
    %v2680 = vunpack.c.l.bf16 %v2184
    %v2681 = vunpack.c.l.bf16 %v2193
    %v2682 = vunpack.c.l.bf16 %v2202
    %v2683 = vunpack.c.l.bf16 %v2211
    %v2684 = vunpack.c.l.bf16 %v2220
    %v2685 = vunpack.c.l.bf16 %v2229
    %v2686 = vunpack.c.l.bf16 %v2238
    %v2687 = vunpack.c.l.bf16 %v2247
    %v2688 = vunpack.c.l.bf16 %v2256
    %v2689 = vunpack.c.l.bf16 %v2265
    %v2690 = vunpack.c.l.bf16 %v2274
    %v2691 = vunpack.c.l.bf16 %v2283
    %v2692 = vunpack.c.l.bf16 %v2292
    %v2693 = vunpack.c.l.bf16 %v2301
    %v2694 = vunpack.c.l.bf16 %v2310
    %v2695 = vunpack.c.l.bf16 %v2319
    %v2696 = vunpack.c.l.bf16 %v2328
    %v2697 = vunpack.c.l.bf16 %v2337
    %v2698 = vunpack.c.l.bf16 %v2346
    %v2699 = vunpack.c.l.bf16 %v2355
    %v2700 = vunpack.c.l.bf16 %v2364
    %v2701 = vunpack.c.l.bf16 %v2373
    %v2702 = vunpack.c.l.bf16 %v2382
    %v2703 = vunpack.c.l.bf16 %v2391
    %v2704 = vunpack.c.l.bf16 %v2400
    %v2705 = vunpack.c.l.bf16 %v2409
    %v2706 = vunpack.c.l.bf16 %v2418
    %v2707 = vunpack.c.l.bf16 %v2427
    %v2708 = vunpack.c.l.bf16 %v2436
    %v2709 = vunpack.c.l.bf16 %v2445
    %v2710 = vunpack.c.l.bf16 %v2454
    %v2711 = vunpack.c.l.bf16 %v2463
    %v2712 = vunpack.c.l.bf16 %v2472
    %v2713 = vunpack.c.l.bf16 %v2481
    %v2714 = vunpack.c.l.bf16 %v2490
    %v2715 = vunpack.c.l.bf16 %v2499
    %v2716 = vunpack.c.l.bf16 %v2508
    %v2717 = vunpack.c.l.bf16 %v2517
    %v2718 = vunpack.c.l.bf16 %v2526
    %v2719 = vunpack.c.l.bf16 %v2535
    %v2720 = vunpack.c.l.bf16 %v2544
    %v2721 = vunpack.c.l.bf16 %v2553
    %v2722 = vunpack.c.l.bf16 %v2562
    %v2723 = vunpack.c.l.bf16 %v2571
    %v2724 = vunpack.c.l.bf16 %v2580
    %v2725 = vunpack.c.l.bf16 %v2589
    %v2726 = vunpack.c.l.bf16 %v2598
    %v2727 = vadd.f32 %v2599, %v2663
    %v2728 = vadd.f32 %v2600, %v2664
    %v2729 = vadd.f32 %v2601, %v2665
    %v2730 = vadd.f32 %v2602, %v2666
    %v2731 = vadd.f32 %v2603, %v2667
    %v2732 = vadd.f32 %v2604, %v2668
    %v2733 = vadd.f32 %v2605, %v2669
    %v2734 = vadd.f32 %v2606, %v2670
    %v2735 = vadd.f32 %v2607, %v2671
    %v2736 = vadd.f32 %v2608, %v2672
    %v2737 = vadd.f32 %v2609, %v2673
    %v2738 = vadd.f32 %v2610, %v2674
    %v2739 = vadd.f32 %v2611, %v2675
    %v2740 = vadd.f32 %v2612, %v2676
    %v2741 = vadd.f32 %v2613, %v2677
    %v2742 = vadd.f32 %v2614, %v2678
    %v2743 = vadd.f32 %v2615, %v2679
    %v2744 = vadd.f32 %v2616, %v2680
    %v2745 = vadd.f32 %v2617, %v2681
    %v2746 = vadd.f32 %v2618, %v2682
    %v2747 = vadd.f32 %v2619, %v2683
    %v2748 = vadd.f32 %v2620, %v2684
    %v2749 = vadd.f32 %v2621, %v2685
    %v2750 = vadd.f32 %v2622, %v2686
    %v2751 = vadd.f32 %v2623, %v2687
    %v2752 = vadd.f32 %v2624, %v2688
    %v2753 = vadd.f32 %v2625, %v2689
    %v2754 = vadd.f32 %v2626, %v2690
    %v2755 = vadd.f32 %v2627, %v2691
    %v2756 = vadd.f32 %v2628, %v2692
    %v2757 = vadd.f32 %v2629, %v2693
    %v2758 = vadd.f32 %v2630, %v2694
    %v2759 = vadd.f32 %v2631, %v2695
    %v2760 = vadd.f32 %v2632, %v2696
    %v2761 = vadd.f32 %v2633, %v2697
    %v2762 = vadd.f32 %v2634, %v2698
    %v2763 = vadd.f32 %v2635, %v2699
    %v2764 = vadd.f32 %v2636, %v2700
    %v2765 = vadd.f32 %v2637, %v2701
    %v2766 = vadd.f32 %v2638, %v2702
    %v2767 = vadd.f32 %v2639, %v2703
    %v2768 = vadd.f32 %v2640, %v2704
    %v2769 = vadd.f32 %v2641, %v2705
    %v2770 = vadd.f32 %v2642, %v2706
    %v2771 = vadd.f32 %v2643, %v2707
    %v2772 = vadd.f32 %v2644, %v2708
    %v2773 = vadd.f32 %v2645, %v2709
    %v2774 = vadd.f32 %v2646, %v2710
    %v2775 = vadd.f32 %v2647, %v2711
    %v2776 = vadd.f32 %v2648, %v2712
    %v2777 = vadd.f32 %v2649, %v2713
    %v2778 = vadd.f32 %v2650, %v2714
    %v2779 = vadd.f32 %v2651, %v2715
    %v2780 = vadd.f32 %v2652, %v2716
    %v2781 = vadd.f32 %v2653, %v2717
    %v2782 = vadd.f32 %v2654, %v2718
    %v2783 = vadd.f32 %v2655, %v2719
    %v2784 = vadd.f32 %v2656, %v2720
    %v2785 = vadd.f32 %v2657, %v2721
    %v2786 = vadd.f32 %v2658, %v2722
    %v2787 = vadd.f32 %v2659, %v2723
    %v2788 = vadd.f32 %v2660, %v2724
    %v2789 = vadd.f32 %v2661, %v2725
    %v2790 = vadd.f32 %v2662, %v2726
    %v2791 = vpack.c.bf16 %v2727, %v2727
    %v2792 = vpack.c.bf16 %v2728, %v2728
    %v2793 = vpack.c.bf16 %v2729, %v2729
    %v2794 = vpack.c.bf16 %v2730, %v2730
    %v2795 = vpack.c.bf16 %v2731, %v2731
    %v2796 = vpack.c.bf16 %v2732, %v2732
    %v2797 = vpack.c.bf16 %v2733, %v2733
    %v2798 = vpack.c.bf16 %v2734, %v2734
    %v2799 = vpack.c.bf16 %v2735, %v2735
    %v2800 = vpack.c.bf16 %v2736, %v2736
    %v2801 = vpack.c.bf16 %v2737, %v2737
    %v2802 = vpack.c.bf16 %v2738, %v2738
    %v2803 = vpack.c.bf16 %v2739, %v2739
    %v2804 = vpack.c.bf16 %v2740, %v2740
    %v2805 = vpack.c.bf16 %v2741, %v2741
    %v2806 = vpack.c.bf16 %v2742, %v2742
    %v2807 = vpack.c.bf16 %v2743, %v2743
    %v2808 = vpack.c.bf16 %v2744, %v2744
    %v2809 = vpack.c.bf16 %v2745, %v2745
    %v2810 = vpack.c.bf16 %v2746, %v2746
    %v2811 = vpack.c.bf16 %v2747, %v2747
    %v2812 = vpack.c.bf16 %v2748, %v2748
    %v2813 = vpack.c.bf16 %v2749, %v2749
    %v2814 = vpack.c.bf16 %v2750, %v2750
    %v2815 = vpack.c.bf16 %v2751, %v2751
    %v2816 = vpack.c.bf16 %v2752, %v2752
    %v2817 = vpack.c.bf16 %v2753, %v2753
    %v2818 = vpack.c.bf16 %v2754, %v2754
    %v2819 = vpack.c.bf16 %v2755, %v2755
    %v2820 = vpack.c.bf16 %v2756, %v2756
    %v2821 = vpack.c.bf16 %v2757, %v2757
    %v2822 = vpack.c.bf16 %v2758, %v2758
    %v2823 = vpack.c.bf16 %v2759, %v2759
    %v2824 = vpack.c.bf16 %v2760, %v2760
    %v2825 = vpack.c.bf16 %v2761, %v2761
    %v2826 = vpack.c.bf16 %v2762, %v2762
    %v2827 = vpack.c.bf16 %v2763, %v2763
    %v2828 = vpack.c.bf16 %v2764, %v2764
    %v2829 = vpack.c.bf16 %v2765, %v2765
    %v2830 = vpack.c.bf16 %v2766, %v2766
    %v2831 = vpack.c.bf16 %v2767, %v2767
    %v2832 = vpack.c.bf16 %v2768, %v2768
    %v2833 = vpack.c.bf16 %v2769, %v2769
    %v2834 = vpack.c.bf16 %v2770, %v2770
    %v2835 = vpack.c.bf16 %v2771, %v2771
    %v2836 = vpack.c.bf16 %v2772, %v2772
    %v2837 = vpack.c.bf16 %v2773, %v2773
    %v2838 = vpack.c.bf16 %v2774, %v2774
    %v2839 = vpack.c.bf16 %v2775, %v2775
    %v2840 = vpack.c.bf16 %v2776, %v2776
    %v2841 = vpack.c.bf16 %v2777, %v2777
    %v2842 = vpack.c.bf16 %v2778, %v2778
    %v2843 = vpack.c.bf16 %v2779, %v2779
    %v2844 = vpack.c.bf16 %v2780, %v2780
    %v2845 = vpack.c.bf16 %v2781, %v2781
    %v2846 = vpack.c.bf16 %v2782, %v2782
    %v2847 = vpack.c.bf16 %v2783, %v2783
    %v2848 = vpack.c.bf16 %v2784, %v2784
    %v2849 = vpack.c.bf16 %v2785, %v2785
    %v2850 = vpack.c.bf16 %v2786, %v2786
    %v2851 = vpack.c.bf16 %v2787, %v2787
    %v2852 = vpack.c.bf16 %v2788, %v2788
    %v2853 = vpack.c.bf16 %v2789, %v2789
    %v2854 = vpack.c.bf16 %v2790, %v2790
    %v2855 = vunpack.c.l.bf16 %v2791
    %v2856 = vunpack.c.l.bf16 %v2792
    %v2857 = vunpack.c.l.bf16 %v2793
    %v2858 = vunpack.c.l.bf16 %v2794
    %v2859 = vunpack.c.l.bf16 %v2795
    %v2860 = vunpack.c.l.bf16 %v2796
    %v2861 = vunpack.c.l.bf16 %v2797
    %v2862 = vunpack.c.l.bf16 %v2798
    %v2863 = vunpack.c.l.bf16 %v2799
    %v2864 = vunpack.c.l.bf16 %v2800
    %v2865 = vunpack.c.l.bf16 %v2801
    %v2866 = vunpack.c.l.bf16 %v2802
    %v2867 = vunpack.c.l.bf16 %v2803
    %v2868 = vunpack.c.l.bf16 %v2804
    %v2869 = vunpack.c.l.bf16 %v2805
    %v2870 = vunpack.c.l.bf16 %v2806
    %v2871 = vunpack.c.l.bf16 %v2807
    %v2872 = vunpack.c.l.bf16 %v2808
    %v2873 = vunpack.c.l.bf16 %v2809
    %v2874 = vunpack.c.l.bf16 %v2810
    %v2875 = vunpack.c.l.bf16 %v2811
    %v2876 = vunpack.c.l.bf16 %v2812
    %v2877 = vunpack.c.l.bf16 %v2813
    %v2878 = vunpack.c.l.bf16 %v2814
    %v2879 = vunpack.c.l.bf16 %v2815
    %v2880 = vunpack.c.l.bf16 %v2816
    %v2881 = vunpack.c.l.bf16 %v2817
    %v2882 = vunpack.c.l.bf16 %v2818
    %v2883 = vunpack.c.l.bf16 %v2819
    %v2884 = vunpack.c.l.bf16 %v2820
    %v2885 = vunpack.c.l.bf16 %v2821
    %v2886 = vunpack.c.l.bf16 %v2822
    %v2887 = vunpack.c.l.bf16 %v2823
    %v2888 = vunpack.c.l.bf16 %v2824
    %v2889 = vunpack.c.l.bf16 %v2825
    %v2890 = vunpack.c.l.bf16 %v2826
    %v2891 = vunpack.c.l.bf16 %v2827
    %v2892 = vunpack.c.l.bf16 %v2828
    %v2893 = vunpack.c.l.bf16 %v2829
    %v2894 = vunpack.c.l.bf16 %v2830
    %v2895 = vunpack.c.l.bf16 %v2831
    %v2896 = vunpack.c.l.bf16 %v2832
    %v2897 = vunpack.c.l.bf16 %v2833
    %v2898 = vunpack.c.l.bf16 %v2834
    %v2899 = vunpack.c.l.bf16 %v2835
    %v2900 = vunpack.c.l.bf16 %v2836
    %v2901 = vunpack.c.l.bf16 %v2837
    %v2902 = vunpack.c.l.bf16 %v2838
    %v2903 = vunpack.c.l.bf16 %v2839
    %v2904 = vunpack.c.l.bf16 %v2840
    %v2905 = vunpack.c.l.bf16 %v2841
    %v2906 = vunpack.c.l.bf16 %v2842
    %v2907 = vunpack.c.l.bf16 %v2843
    %v2908 = vunpack.c.l.bf16 %v2844
    %v2909 = vunpack.c.l.bf16 %v2845
    %v2910 = vunpack.c.l.bf16 %v2846
    %v2911 = vunpack.c.l.bf16 %v2847
    %v2912 = vunpack.c.l.bf16 %v2848
    %v2913 = vunpack.c.l.bf16 %v2849
    %v2914 = vunpack.c.l.bf16 %v2850
    %v2915 = vunpack.c.l.bf16 %v2851
    %v2916 = vunpack.c.l.bf16 %v2852
    %v2917 = vunpack.c.l.bf16 %v2853
    %v2918 = vunpack.c.l.bf16 %v2854
    %v2919 = vmax.f32 %v2855, 0.0
    %v2920 = vmax.f32 %v2856, 0.0
    %v2921 = vmax.f32 %v2857, 0.0
    %v2922 = vmax.f32 %v2858, 0.0
    %v2923 = vmax.f32 %v2859, 0.0
    %v2924 = vmax.f32 %v2860, 0.0
    %v2925 = vmax.f32 %v2861, 0.0
    %v2926 = vmax.f32 %v2862, 0.0
    %v2927 = vmax.f32 %v2863, 0.0
    %v2928 = vmax.f32 %v2864, 0.0
    %v2929 = vmax.f32 %v2865, 0.0
    %v2930 = vmax.f32 %v2866, 0.0
    %v2931 = vmax.f32 %v2867, 0.0
    %v2932 = vmax.f32 %v2868, 0.0
    %v2933 = vmax.f32 %v2869, 0.0
    %v2934 = vmax.f32 %v2870, 0.0
    %v2935 = vmax.f32 %v2871, 0.0
    %v2936 = vmax.f32 %v2872, 0.0
    %v2937 = vmax.f32 %v2873, 0.0
    %v2938 = vmax.f32 %v2874, 0.0
    %v2939 = vmax.f32 %v2875, 0.0
    %v2940 = vmax.f32 %v2876, 0.0
    %v2941 = vmax.f32 %v2877, 0.0
    %v2942 = vmax.f32 %v2878, 0.0
    %v2943 = vmax.f32 %v2879, 0.0
    %v2944 = vmax.f32 %v2880, 0.0
    %v2945 = vmax.f32 %v2881, 0.0
    %v2946 = vmax.f32 %v2882, 0.0
    %v2947 = vmax.f32 %v2883, 0.0
    %v2948 = vmax.f32 %v2884, 0.0
    %v2949 = vmax.f32 %v2885, 0.0
    %v2950 = vmax.f32 %v2886, 0.0
    %v2951 = vmax.f32 %v2887, 0.0
    %v2952 = vmax.f32 %v2888, 0.0
    %v2953 = vmax.f32 %v2889, 0.0
    %v2954 = vmax.f32 %v2890, 0.0
    %v2955 = vmax.f32 %v2891, 0.0
    %v2956 = vmax.f32 %v2892, 0.0
    %v2957 = vmax.f32 %v2893, 0.0
    %v2958 = vmax.f32 %v2894, 0.0
    %v2959 = vmax.f32 %v2895, 0.0
    %v2960 = vmax.f32 %v2896, 0.0
    %v2961 = vmax.f32 %v2897, 0.0
    %v2962 = vmax.f32 %v2898, 0.0
    %v2963 = vmax.f32 %v2899, 0.0
    %v2964 = vmax.f32 %v2900, 0.0
    %v2965 = vmax.f32 %v2901, 0.0
    %v2966 = vmax.f32 %v2902, 0.0
    %v2967 = vmax.f32 %v2903, 0.0
    %v2968 = vmax.f32 %v2904, 0.0
    %v2969 = vmax.f32 %v2905, 0.0
    %v2970 = vmax.f32 %v2906, 0.0
    %v2971 = vmax.f32 %v2907, 0.0
    %v2972 = vmax.f32 %v2908, 0.0
    %v2973 = vmax.f32 %v2909, 0.0
    %v2974 = vmax.f32 %v2910, 0.0
    %v2975 = vmax.f32 %v2911, 0.0
    %v2976 = vmax.f32 %v2912, 0.0
    %v2977 = vmax.f32 %v2913, 0.0
    %v2978 = vmax.f32 %v2914, 0.0
    %v2979 = vmax.f32 %v2915, 0.0
    %v2980 = vmax.f32 %v2916, 0.0
    %v2981 = vmax.f32 %v2917, 0.0
    %v2982 = vmax.f32 %v2918, 0.0
    %v2983 = vpack.c.bf16 %v2920, %v2919
    %v2984 = vpack.c.bf16 %v2922, %v2921
    %v2985 = vpack.c.bf16 %v2924, %v2923
    %v2986 = vpack.c.bf16 %v2926, %v2925
    %v2987 = vpack.c.bf16 %v2928, %v2927
    %v2988 = vpack.c.bf16 %v2930, %v2929
    %v2989 = vpack.c.bf16 %v2932, %v2931
    %v2990 = vpack.c.bf16 %v2934, %v2933
    %v2991 = vpack.c.bf16 %v2936, %v2935
    %v2992 = vpack.c.bf16 %v2938, %v2937
    %v2993 = vpack.c.bf16 %v2940, %v2939
    %v2994 = vpack.c.bf16 %v2942, %v2941
    %v2995 = vpack.c.bf16 %v2944, %v2943
    %v2996 = vpack.c.bf16 %v2946, %v2945
    %v2997 = vpack.c.bf16 %v2948, %v2947
    %v2998 = vpack.c.bf16 %v2950, %v2949
    %v2999 = vpack.c.bf16 %v2952, %v2951
    %v3000 = vpack.c.bf16 %v2954, %v2953
    %v3001 = vpack.c.bf16 %v2956, %v2955
    %v3002 = vpack.c.bf16 %v2958, %v2957
    %v3003 = vpack.c.bf16 %v2960, %v2959
    %v3004 = vpack.c.bf16 %v2962, %v2961
    %v3005 = vpack.c.bf16 %v2964, %v2963
    %v3006 = vpack.c.bf16 %v2966, %v2965
    %v3007 = vpack.c.bf16 %v2968, %v2967
    %v3008 = vpack.c.bf16 %v2970, %v2969
    %v3009 = vpack.c.bf16 %v2972, %v2971
    %v3010 = vpack.c.bf16 %v2974, %v2973
    %v3011 = vpack.c.bf16 %v2976, %v2975
    %v3012 = vpack.c.bf16 %v2978, %v2977
    %v3013 = vpack.c.bf16 %v2980, %v2979
    %v3014 = vpack.c.bf16 %v2982, %v2981
    %v3015 = vld [vmem:[%s3] sm:$0xff]
    %v3016 = vld [vmem:[%s3 + $0x8] sm:$0xff]
    %v3017 = vld [vmem:[%s3 + $0x10] sm:$0xff]
    %v3018 = vld [vmem:[%s3 + $0x18] sm:$0xff]
    %v3019 = vld [vmem:[%s3 + $0x20] sm:$0xff]
    %v3020 = vld [vmem:[%s3 + $0x28] sm:$0xff]
    %v3021 = vld [vmem:[%s3 + $0x30] sm:$0xff]
    %v3022 = vld [vmem:[%s3 + $0x38] sm:$0xff]
    %v3023 = vld [vmem:[%s3 + $0x40] sm:$0xff]
    %v3024 = vld [vmem:[%s3 + $0x48] sm:$0xff]
    %v3025 = vld [vmem:[%s3 + $0x50] sm:$0xff]
    %v3026 = vld [vmem:[%s3 + $0x58] sm:$0xff]
    %v3027 = vld [vmem:[%s3 + $0x60] sm:$0xff]
    %v3028 = vld [vmem:[%s3 + $0x68] sm:$0xff]
    %v3029 = vld [vmem:[%s3 + $0x70] sm:$0xff]
    %v3030 = vld [vmem:[%s3 + $0x78] sm:$0xff]
    %v3031 = vld [vmem:[%s3 + $0x80] sm:$0xff]
    %v3032 = vld [vmem:[%s3 + $0x88] sm:$0xff]
    %v3033 = vld [vmem:[%s3 + $0x90] sm:$0xff]
    %v3034 = vld [vmem:[%s3 + $0x98] sm:$0xff]
    %v3035 = vld [vmem:[%s3 + $0xa0] sm:$0xff]
    %v3036 = vld [vmem:[%s3 + $0xa8] sm:$0xff]
    %v3037 = vld [vmem:[%s3 + $0xb0] sm:$0xff]
    %v3038 = vld [vmem:[%s3 + $0xb8] sm:$0xff]
    %v3039 = vld [vmem:[%s3 + $0xc0] sm:$0xff]
    %v3040 = vld [vmem:[%s3 + $0xc8] sm:$0xff]
    %v3041 = vld [vmem:[%s3 + $0xd0] sm:$0xff]
    %v3042 = vld [vmem:[%s3 + $0xd8] sm:$0xff]
    %v3043 = vld [vmem:[%s3 + $0xe0] sm:$0xff]
    %v3044 = vld [vmem:[%s3 + $0xe8] sm:$0xff]
    %v3045 = vld [vmem:[%s3 + $0xf0] sm:$0xff]
    %v3046 = vld [vmem:[%s3 + $0xf8] sm:$0xff]
    %v3047 = vld [vmem:[%s3 + $0x100] sm:$0xff]
    %v3048 = vld [vmem:[%s3 + $0x108] sm:$0xff]
    %v3049 = vld [vmem:[%s3 + $0x110] sm:$0xff]
    %v3050 = vld [vmem:[%s3 + $0x118] sm:$0xff]
    %v3051 = vld [vmem:[%s3 + $0x120] sm:$0xff]
    %v3052 = vld [vmem:[%s3 + $0x128] sm:$0xff]
    %v3053 = vld [vmem:[%s3 + $0x130] sm:$0xff]
    %v3054 = vld [vmem:[%s3 + $0x138] sm:$0xff]
    %v3055 = vld [vmem:[%s3 + $0x140] sm:$0xff]
    %v3056 = vld [vmem:[%s3 + $0x148] sm:$0xff]
    %v3057 = vld [vmem:[%s3 + $0x150] sm:$0xff]
    %v3058 = vld [vmem:[%s3 + $0x158] sm:$0xff]
    %v3059 = vld [vmem:[%s3 + $0x160] sm:$0xff]
    %v3060 = vld [vmem:[%s3 + $0x168] sm:$0xff]
    %v3061 = vld [vmem:[%s3 + $0x170] sm:$0xff]
    %v3062 = vld [vmem:[%s3 + $0x178] sm:$0xff]
    %v3063 = vld [vmem:[%s3 + $0x180] sm:$0xff]
    %v3064 = vld [vmem:[%s3 + $0x188] sm:$0xff]
    %v3065 = vld [vmem:[%s3 + $0x190] sm:$0xff]
    %v3066 = vld [vmem:[%s3 + $0x198] sm:$0xff]
    %v3067 = vld [vmem:[%s3 + $0x1a0] sm:$0xff]
    %v3068 = vld [vmem:[%s3 + $0x1a8] sm:$0xff]
    %v3069 = vld [vmem:[%s3 + $0x1b0] sm:$0xff]
    %v3070 = vld [vmem:[%s3 + $0x1b8] sm:$0xff]
    %v3071 = vld [vmem:[%s3 + $0x1c0] sm:$0xff]
    %v3072 = vld [vmem:[%s3 + $0x1c8] sm:$0xff]
    %v3073 = vld [vmem:[%s3 + $0x1d0] sm:$0xff]
    %v3074 = vld [vmem:[%s3 + $0x1d8] sm:$0xff]
    %v3075 = vld [vmem:[%s3 + $0x1e0] sm:$0xff]
    %v3076 = vld [vmem:[%s3 + $0x1e8] sm:$0xff]
    %v3077 = vld [vmem:[%s3 + $0x1f0] sm:$0xff]
    %v3078 = vld [vmem:[%s3 + $0x1f8] sm:$0xff]
    %v3079 = vld [vmem:[%s4] sm:$0xff]
    %v3080 = vld [vmem:[%s4 + $0x8] sm:$0xff]
    %v3081 = vld [vmem:[%s4 + $0x10] sm:$0xff]
    %v3082 = vld [vmem:[%s4 + $0x18] sm:$0xff]
    %v3083 = vld [vmem:[%s4 + $0x20] sm:$0xff]
    %v3084 = vld [vmem:[%s4 + $0x28] sm:$0xff]
    %v3085 = vld [vmem:[%s4 + $0x30] sm:$0xff]
    %v3086 = vld [vmem:[%s4 + $0x38] sm:$0xff]
    %v3087 = vld [vmem:[%s4 + $0x40] sm:$0xff]
    %v3088 = vld [vmem:[%s4 + $0x48] sm:$0xff]
    %v3089 = vld [vmem:[%s4 + $0x50] sm:$0xff]
    %v3090 = vld [vmem:[%s4 + $0x58] sm:$0xff]
    %v3091 = vld [vmem:[%s4 + $0x60] sm:$0xff]
    %v3092 = vld [vmem:[%s4 + $0x68] sm:$0xff]
    %v3093 = vld [vmem:[%s4 + $0x70] sm:$0xff]
    %v3094 = vld [vmem:[%s4 + $0x78] sm:$0xff]
    %v3095 = vld [vmem:[%s4 + $0x80] sm:$0xff]
    %v3096 = vld [vmem:[%s4 + $0x88] sm:$0xff]
    %v3097 = vld [vmem:[%s4 + $0x90] sm:$0xff]
    %v3098 = vld [vmem:[%s4 + $0x98] sm:$0xff]
    %v3099 = vld [vmem:[%s4 + $0xa0] sm:$0xff]
    %v3100 = vld [vmem:[%s4 + $0xa8] sm:$0xff]
    %v3101 = vld [vmem:[%s4 + $0xb0] sm:$0xff]
    %v3102 = vld [vmem:[%s4 + $0xb8] sm:$0xff]
    %v3103 = vld [vmem:[%s4 + $0xc0] sm:$0xff]
    %v3104 = vld [vmem:[%s4 + $0xc8] sm:$0xff]
    %v3105 = vld [vmem:[%s4 + $0xd0] sm:$0xff]
    %v3106 = vld [vmem:[%s4 + $0xd8] sm:$0xff]
    %v3107 = vld [vmem:[%s4 + $0xe0] sm:$0xff]
    %v3108 = vld [vmem:[%s4 + $0xe8] sm:$0xff]
    %v3109 = vld [vmem:[%s4 + $0xf0] sm:$0xff]
    %v3110 = vld [vmem:[%s4 + $0xf8] sm:$0xff]
    %3112 = vset.pattern.permute.xlu0 0
    %3113 = vperm.xlu0 %3112, %v3079
    %v3114 = vpop.permute.xlu0 %3113
    %3117 = vset.pattern.permute.xlu0 0
    %3118 = vperm.xlu0 %3117, %v3080
    %v3119 = vpop.permute.xlu0 %3118
    %3122 = vset.pattern.permute.xlu0 0
    %3123 = vperm.xlu0 %3122, %v3081
    %v3124 = vpop.permute.xlu0 %3123
    %3127 = vset.pattern.permute.xlu0 0
    %3128 = vperm.xlu0 %3127, %v3082
    %v3129 = vpop.permute.xlu0 %3128
    %3132 = vset.pattern.permute.xlu0 0
    %3133 = vperm.xlu0 %3132, %v3083
    %v3134 = vpop.permute.xlu0 %3133
    %3137 = vset.pattern.permute.xlu0 0
    %3138 = vperm.xlu0 %3137, %v3084
    %v3139 = vpop.permute.xlu0 %3138
    %3142 = vset.pattern.permute.xlu0 0
    %3143 = vperm.xlu0 %3142, %v3085
    %v3144 = vpop.permute.xlu0 %3143
    %3147 = vset.pattern.permute.xlu0 0
    %3148 = vperm.xlu0 %3147, %v3086
    %v3149 = vpop.permute.xlu0 %3148
    %3152 = vset.pattern.permute.xlu0 0
    %3153 = vperm.xlu0 %3152, %v3087
    %v3154 = vpop.permute.xlu0 %3153
    %3157 = vset.pattern.permute.xlu0 0
    %3158 = vperm.xlu0 %3157, %v3088
    %v3159 = vpop.permute.xlu0 %3158
    %3162 = vset.pattern.permute.xlu0 0
    %3163 = vperm.xlu0 %3162, %v3089
    %v3164 = vpop.permute.xlu0 %3163
    %3167 = vset.pattern.permute.xlu0 0
    %3168 = vperm.xlu0 %3167, %v3090
    %v3169 = vpop.permute.xlu0 %3168
    %3172 = vset.pattern.permute.xlu0 0
    %3173 = vperm.xlu0 %3172, %v3091
    %v3174 = vpop.permute.xlu0 %3173
    %3177 = vset.pattern.permute.xlu0 0
    %3178 = vperm.xlu0 %3177, %v3092
    %v3179 = vpop.permute.xlu0 %3178
    %3182 = vset.pattern.permute.xlu0 0
    %3183 = vperm.xlu0 %3182, %v3093
    %v3184 = vpop.permute.xlu0 %3183
    %3187 = vset.pattern.permute.xlu0 0
    %3188 = vperm.xlu0 %3187, %v3094
    %v3189 = vpop.permute.xlu0 %3188
    %3192 = vset.pattern.permute.xlu0 0
    %3193 = vperm.xlu0 %3192, %v3095
    %v3194 = vpop.permute.xlu0 %3193
    %3197 = vset.pattern.permute.xlu0 0
    %3198 = vperm.xlu0 %3197, %v3096
    %v3199 = vpop.permute.xlu0 %3198
    %3202 = vset.pattern.permute.xlu0 0
    %3203 = vperm.xlu0 %3202, %v3097
    %v3204 = vpop.permute.xlu0 %3203
    %3207 = vset.pattern.permute.xlu0 0
    %3208 = vperm.xlu0 %3207, %v3098
    %v3209 = vpop.permute.xlu0 %3208
    %3212 = vset.pattern.permute.xlu0 0
    %3213 = vperm.xlu0 %3212, %v3099
    %v3214 = vpop.permute.xlu0 %3213
    %3217 = vset.pattern.permute.xlu0 0
    %3218 = vperm.xlu0 %3217, %v3100
    %v3219 = vpop.permute.xlu0 %3218
    %3222 = vset.pattern.permute.xlu0 0
    %3223 = vperm.xlu0 %3222, %v3101
    %v3224 = vpop.permute.xlu0 %3223
    %3227 = vset.pattern.permute.xlu0 0
    %3228 = vperm.xlu0 %3227, %v3102
    %v3229 = vpop.permute.xlu0 %3228
    %3232 = vset.pattern.permute.xlu0 0
    %3233 = vperm.xlu0 %3232, %v3103
    %v3234 = vpop.permute.xlu0 %3233
    %3237 = vset.pattern.permute.xlu0 0
    %3238 = vperm.xlu0 %3237, %v3104
    %v3239 = vpop.permute.xlu0 %3238
    %3242 = vset.pattern.permute.xlu0 0
    %3243 = vperm.xlu0 %3242, %v3105
    %v3244 = vpop.permute.xlu0 %3243
    %3247 = vset.pattern.permute.xlu0 0
    %3248 = vperm.xlu0 %3247, %v3106
    %v3249 = vpop.permute.xlu0 %3248
    %3252 = vset.pattern.permute.xlu0 0
    %3253 = vperm.xlu0 %3252, %v3107
    %v3254 = vpop.permute.xlu0 %3253
    %3257 = vset.pattern.permute.xlu0 0
    %3258 = vperm.xlu0 %3257, %v3108
    %v3259 = vpop.permute.xlu0 %3258
    %3262 = vset.pattern.permute.xlu0 0
    %3263 = vperm.xlu0 %3262, %v3109
    %v3264 = vpop.permute.xlu0 %3263
    %3267 = vset.pattern.permute.xlu0 0
    %3268 = vperm.xlu0 %3267, %v3110
    %v3269 = vpop.permute.xlu0 %3268
    %v3335 = vunpack.c.l.b16 %v3015
    %v3336 = vunpack.c.h.b16 %v3015
    %v3337 = vunpack.c.l.b16 %v3016
    %v3338 = vunpack.c.h.b16 %v3016
    %v3339 = vunpack.c.l.b16 %v3017
    %v3340 = vunpack.c.h.b16 %v3017
    %v3341 = vunpack.c.l.b16 %v3018
    %v3342 = vunpack.c.h.b16 %v3018
    %v3343 = vunpack.c.l.b16 %v3019
    %v3344 = vunpack.c.h.b16 %v3019
    %v3345 = vunpack.c.l.b16 %v3020
    %v3346 = vunpack.c.h.b16 %v3020
    %v3347 = vunpack.c.l.b16 %v3021
    %v3348 = vunpack.c.h.b16 %v3021
    %v3349 = vunpack.c.l.b16 %v3022
    %v3350 = vunpack.c.h.b16 %v3022
    %v3351 = vunpack.c.l.b16 %v3023
    %v3352 = vunpack.c.h.b16 %v3023
    %v3353 = vunpack.c.l.b16 %v3024
    %v3354 = vunpack.c.h.b16 %v3024
    %v3355 = vunpack.c.l.b16 %v3025
    %v3356 = vunpack.c.h.b16 %v3025
    %v3357 = vunpack.c.l.b16 %v3026
    %v3358 = vunpack.c.h.b16 %v3026
    %v3359 = vunpack.c.l.b16 %v3027
    %v3360 = vunpack.c.h.b16 %v3027
    %v3361 = vunpack.c.l.b16 %v3028
    %v3362 = vunpack.c.h.b16 %v3028
    %v3363 = vunpack.c.l.b16 %v3029
    %v3364 = vunpack.c.h.b16 %v3029
    %v3365 = vunpack.c.l.b16 %v3030
    %v3366 = vunpack.c.h.b16 %v3030
    %v3367 = vunpack.c.l.b16 %v3031
    %v3368 = vunpack.c.h.b16 %v3031
    %v3369 = vunpack.c.l.b16 %v3032
    %v3370 = vunpack.c.h.b16 %v3032
    %v3371 = vunpack.c.l.b16 %v3033
    %v3372 = vunpack.c.h.b16 %v3033
    %v3373 = vunpack.c.l.b16 %v3034
    %v3374 = vunpack.c.h.b16 %v3034
    %v3375 = vunpack.c.l.b16 %v3035
    %v3376 = vunpack.c.h.b16 %v3035
    %v3377 = vunpack.c.l.b16 %v3036
    %v3378 = vunpack.c.h.b16 %v3036
    %v3379 = vunpack.c.l.b16 %v3037
    %v3380 = vunpack.c.h.b16 %v3037
    %v3381 = vunpack.c.l.b16 %v3038
    %v3382 = vunpack.c.h.b16 %v3038
    %v3383 = vunpack.c.l.b16 %v3039
    %v3384 = vunpack.c.h.b16 %v3039
    %v3385 = vunpack.c.l.b16 %v3040
    %v3386 = vunpack.c.h.b16 %v3040
    %v3387 = vunpack.c.l.b16 %v3041
    %v3388 = vunpack.c.h.b16 %v3041
    %v3389 = vunpack.c.l.b16 %v3042
    %v3390 = vunpack.c.h.b16 %v3042
    %v3391 = vunpack.c.l.b16 %v3043
    %v3392 = vunpack.c.h.b16 %v3043
    %v3393 = vunpack.c.l.b16 %v3044
    %v3394 = vunpack.c.h.b16 %v3044
    %v3395 = vunpack.c.l.b16 %v3045
    %v3396 = vunpack.c.h.b16 %v3045
    %v3397 = vunpack.c.l.b16 %v3046
    %v3398 = vunpack.c.h.b16 %v3046
    %v3399 = vunpack.c.l.b16 %v3047
    %v3400 = vunpack.c.h.b16 %v3047
    %v3401 = vunpack.c.l.b16 %v3048
    %v3402 = vunpack.c.h.b16 %v3048
    %v3403 = vunpack.c.l.b16 %v3049
    %v3404 = vunpack.c.h.b16 %v3049
    %v3405 = vunpack.c.l.b16 %v3050
    %v3406 = vunpack.c.h.b16 %v3050
    %v3407 = vunpack.c.l.b16 %v3051
    %v3408 = vunpack.c.h.b16 %v3051
    %v3409 = vunpack.c.l.b16 %v3052
    %v3410 = vunpack.c.h.b16 %v3052
    %v3411 = vunpack.c.l.b16 %v3053
    %v3412 = vunpack.c.h.b16 %v3053
    %v3413 = vunpack.c.l.b16 %v3054
    %v3414 = vunpack.c.h.b16 %v3054
    %v3415 = vunpack.c.l.b16 %v3055
    %v3416 = vunpack.c.h.b16 %v3055
    %v3417 = vunpack.c.l.b16 %v3056
    %v3418 = vunpack.c.h.b16 %v3056
    %v3419 = vunpack.c.l.b16 %v3057
    %v3420 = vunpack.c.h.b16 %v3057
    %v3421 = vunpack.c.l.b16 %v3058
    %v3422 = vunpack.c.h.b16 %v3058
    %v3423 = vunpack.c.l.b16 %v3059
    %v3424 = vunpack.c.h.b16 %v3059
    %v3425 = vunpack.c.l.b16 %v3060
    %v3426 = vunpack.c.h.b16 %v3060
    %v3427 = vunpack.c.l.b16 %v3061
    %v3428 = vunpack.c.h.b16 %v3061
    %v3429 = vunpack.c.l.b16 %v3062
    %v3430 = vunpack.c.h.b16 %v3062
    %v3431 = vunpack.c.l.b16 %v3063
    %v3432 = vunpack.c.h.b16 %v3063
    %v3433 = vunpack.c.l.b16 %v3064
    %v3434 = vunpack.c.h.b16 %v3064
    %v3435 = vunpack.c.l.b16 %v3065
    %v3436 = vunpack.c.h.b16 %v3065
    %v3437 = vunpack.c.l.b16 %v3066
    %v3438 = vunpack.c.h.b16 %v3066
    %v3439 = vunpack.c.l.b16 %v3067
    %v3440 = vunpack.c.h.b16 %v3067
    %v3441 = vunpack.c.l.b16 %v3068
    %v3442 = vunpack.c.h.b16 %v3068
    %v3443 = vunpack.c.l.b16 %v3069
    %v3444 = vunpack.c.h.b16 %v3069
    %v3445 = vunpack.c.l.b16 %v3070
    %v3446 = vunpack.c.h.b16 %v3070
    %v3447 = vunpack.c.l.b16 %v3071
    %v3448 = vunpack.c.h.b16 %v3071
    %v3449 = vunpack.c.l.b16 %v3072
    %v3450 = vunpack.c.h.b16 %v3072
    %v3451 = vunpack.c.l.b16 %v3073
    %v3452 = vunpack.c.h.b16 %v3073
    %v3453 = vunpack.c.l.b16 %v3074
    %v3454 = vunpack.c.h.b16 %v3074
    %v3455 = vunpack.c.l.b16 %v3075
    %v3456 = vunpack.c.h.b16 %v3075
    %v3457 = vunpack.c.l.b16 %v3076
    %v3458 = vunpack.c.h.b16 %v3076
    %v3459 = vunpack.c.l.b16 %v3077
    %v3460 = vunpack.c.h.b16 %v3077
    %v3461 = vunpack.c.l.b16 %v3078
    %v3462 = vunpack.c.h.b16 %v3078
    %v3463 = vpack.c.b16 %v3339, %v3335
    %v3464 = vpack.c.b16 %v3340, %v3336
    %v3465 = vpack.c.b16 %v3341, %v3337
    %v3466 = vpack.c.b16 %v3342, %v3338
    %v3467 = vpack.c.b16 %v3347, %v3343
    %v3468 = vpack.c.b16 %v3348, %v3344
    %v3469 = vpack.c.b16 %v3349, %v3345
    %v3470 = vpack.c.b16 %v3350, %v3346
    %v3471 = vpack.c.b16 %v3355, %v3351
    %v3472 = vpack.c.b16 %v3356, %v3352
    %v3473 = vpack.c.b16 %v3357, %v3353
    %v3474 = vpack.c.b16 %v3358, %v3354
    %v3475 = vpack.c.b16 %v3363, %v3359
    %v3476 = vpack.c.b16 %v3364, %v3360
    %v3477 = vpack.c.b16 %v3365, %v3361
    %v3478 = vpack.c.b16 %v3366, %v3362
    %v3479 = vpack.c.b16 %v3371, %v3367
    %v3480 = vpack.c.b16 %v3372, %v3368
    %v3481 = vpack.c.b16 %v3373, %v3369
    %v3482 = vpack.c.b16 %v3374, %v3370
    %v3483 = vpack.c.b16 %v3379, %v3375
    %v3484 = vpack.c.b16 %v3380, %v3376
    %v3485 = vpack.c.b16 %v3381, %v3377
    %v3486 = vpack.c.b16 %v3382, %v3378
    %v3487 = vpack.c.b16 %v3387, %v3383
    %v3488 = vpack.c.b16 %v3388, %v3384
    %v3489 = vpack.c.b16 %v3389, %v3385
    %v3490 = vpack.c.b16 %v3390, %v3386
    %v3491 = vpack.c.b16 %v3395, %v3391
    %v3492 = vpack.c.b16 %v3396, %v3392
    %v3493 = vpack.c.b16 %v3397, %v3393
    %v3494 = vpack.c.b16 %v3398, %v3394
    %v3495 = vpack.c.b16 %v3403, %v3399
    %v3496 = vpack.c.b16 %v3404, %v3400
    %v3497 = vpack.c.b16 %v3405, %v3401
    %v3498 = vpack.c.b16 %v3406, %v3402
    %v3499 = vpack.c.b16 %v3411, %v3407
    %v3500 = vpack.c.b16 %v3412, %v3408
    %v3501 = vpack.c.b16 %v3413, %v3409
    %v3502 = vpack.c.b16 %v3414, %v3410
    %v3503 = vpack.c.b16 %v3419, %v3415
    %v3504 = vpack.c.b16 %v3420, %v3416
    %v3505 = vpack.c.b16 %v3421, %v3417
    %v3506 = vpack.c.b16 %v3422, %v3418
    %v3507 = vpack.c.b16 %v3427, %v3423
    %v3508 = vpack.c.b16 %v3428, %v3424
    %v3509 = vpack.c.b16 %v3429, %v3425
    %v3510 = vpack.c.b16 %v3430, %v3426
    %v3511 = vpack.c.b16 %v3435, %v3431
    %v3512 = vpack.c.b16 %v3436, %v3432
    %v3513 = vpack.c.b16 %v3437, %v3433
    %v3514 = vpack.c.b16 %v3438, %v3434
    %v3515 = vpack.c.b16 %v3443, %v3439
    %v3516 = vpack.c.b16 %v3444, %v3440
    %v3517 = vpack.c.b16 %v3445, %v3441
    %v3518 = vpack.c.b16 %v3446, %v3442
    %v3519 = vpack.c.b16 %v3451, %v3447
    %v3520 = vpack.c.b16 %v3452, %v3448
    %v3521 = vpack.c.b16 %v3453, %v3449
    %v3522 = vpack.c.b16 %v3454, %v3450
    %v3523 = vpack.c.b16 %v3459, %v3455
    %v3524 = vpack.c.b16 %v3460, %v3456
    %v3525 = vpack.c.b16 %v3461, %v3457
    %v3526 = vpack.c.b16 %v3462, %v3458
    %3591 = vmatpush.bf16.msra.mxu0 %v2990
    %3592 = vmatpush.bf16.msra.mxu0 %v2989
    %3593 = vmatpush.bf16.msra.mxu0 %v2988
    %3594 = vmatpush.bf16.msra.mxu0 %v2987
    %3595 = vmatpush.bf16.msra.mxu0 %v2986
    %3596 = vmatpush.bf16.msra.mxu0 %v2985
    %3597 = vmatpush.bf16.msra.mxu0 %v2984
    %3598 = vmatpush.bf16.msra.mxu0 %v2983
    %3599 = vmatmul.bf16.gmra.mxu0 %v3463
    %v3600 = vpop.f32.mrf.mxu0
    %v3601 = vadd.f32 %v3114, %v3600
    %v3602 = vpop.f32.mrf.mxu0
    %v3603 = vadd.f32 %v3119, %v3602
    %3604 = vmatmul.bf16.gmra.mxu0 %v3467
    %v3605 = vpop.f32.mrf.mxu0
    %v3606 = vadd.f32 %v3124, %v3605
    %v3607 = vpop.f32.mrf.mxu0
    %v3608 = vadd.f32 %v3129, %v3607
    %3609 = vmatmul.bf16.gmra.mxu0 %v3471
    %v3610 = vpop.f32.mrf.mxu0
    %v3611 = vadd.f32 %v3134, %v3610
    %v3612 = vpop.f32.mrf.mxu0
    %v3613 = vadd.f32 %v3139, %v3612
    %3614 = vmatmul.bf16.gmra.mxu0 %v3475
    %v3615 = vpop.f32.mrf.mxu0
    %v3616 = vadd.f32 %v3144, %v3615
    %v3617 = vpop.f32.mrf.mxu0
    %v3618 = vadd.f32 %v3149, %v3617
    %3619 = vmatmul.bf16.gmra.mxu0 %v3479
    %v3620 = vpop.f32.mrf.mxu0
    %v3621 = vadd.f32 %v3154, %v3620
    %v3622 = vpop.f32.mrf.mxu0
    %v3623 = vadd.f32 %v3159, %v3622
    %3624 = vmatmul.bf16.gmra.mxu0 %v3483
    %v3625 = vpop.f32.mrf.mxu0
    %v3626 = vadd.f32 %v3164, %v3625
    %v3627 = vpop.f32.mrf.mxu0
    %v3628 = vadd.f32 %v3169, %v3627
    %3629 = vmatmul.bf16.gmra.mxu0 %v3487
    %v3630 = vpop.f32.mrf.mxu0
    %v3631 = vadd.f32 %v3174, %v3630
    %v3632 = vpop.f32.mrf.mxu0
    %v3633 = vadd.f32 %v3179, %v3632
    %3634 = vmatmul.bf16.gmra.mxu0 %v3491
    %v3635 = vpop.f32.mrf.mxu0
    %v3636 = vadd.f32 %v3184, %v3635
    %v3637 = vpop.f32.mrf.mxu0
    %v3638 = vadd.f32 %v3189, %v3637
    %3639 = vmatmul.bf16.gmra.mxu0 %v3495
    %v3640 = vpop.f32.mrf.mxu0
    %v3641 = vadd.f32 %v3194, %v3640
    %v3642 = vpop.f32.mrf.mxu0
    %v3643 = vadd.f32 %v3199, %v3642
    %3644 = vmatmul.bf16.gmra.mxu0 %v3499
    %v3645 = vpop.f32.mrf.mxu0
    %v3646 = vadd.f32 %v3204, %v3645
    %v3647 = vpop.f32.mrf.mxu0
    %v3648 = vadd.f32 %v3209, %v3647
    %3649 = vmatmul.bf16.gmra.mxu0 %v3503
    %v3650 = vpop.f32.mrf.mxu0
    %v3651 = vadd.f32 %v3214, %v3650
    %v3652 = vpop.f32.mrf.mxu0
    %v3653 = vadd.f32 %v3219, %v3652
    %3654 = vmatmul.bf16.gmra.mxu0 %v3507
    %v3655 = vpop.f32.mrf.mxu0
    %v3656 = vadd.f32 %v3224, %v3655
    %v3657 = vpop.f32.mrf.mxu0
    %v3658 = vadd.f32 %v3229, %v3657
    %3659 = vmatmul.bf16.gmra.mxu0 %v3511
    %v3660 = vpop.f32.mrf.mxu0
    %v3661 = vadd.f32 %v3234, %v3660
    %v3662 = vpop.f32.mrf.mxu0
    %v3663 = vadd.f32 %v3239, %v3662
    %3664 = vmatmul.bf16.gmra.mxu0 %v3515
    %v3665 = vpop.f32.mrf.mxu0
    %v3666 = vadd.f32 %v3244, %v3665
    %v3667 = vpop.f32.mrf.mxu0
    %v3668 = vadd.f32 %v3249, %v3667
    %3669 = vmatmul.bf16.gmra.mxu0 %v3519
    %v3670 = vpop.f32.mrf.mxu0
    %v3671 = vadd.f32 %v3254, %v3670
    %v3672 = vpop.f32.mrf.mxu0
    %v3673 = vadd.f32 %v3259, %v3672
    %3674 = vmatmul.bf16.gmra.mxu0 %v3523
    %v3675 = vpop.f32.mrf.mxu0
    %v3676 = vadd.f32 %v3264, %v3675
    %v3677 = vpop.f32.mrf.mxu0
    %v3678 = vadd.f32 %v3269, %v3677
    %3679 = vdwg.mxu0
    %3680 = vmatpush.bf16.msra.mxu0 %v2998
    %3681 = vmatpush.bf16.msra.mxu0 %v2997
    %3682 = vmatpush.bf16.msra.mxu0 %v2996
    %3683 = vmatpush.bf16.msra.mxu0 %v2995
    %3684 = vmatpush.bf16.msra.mxu0 %v2994
    %3685 = vmatpush.bf16.msra.mxu0 %v2993
    %3686 = vmatpush.bf16.msra.mxu0 %v2992
    %3687 = vmatpush.bf16.msra.mxu0 %v2991
    %3688 = vmatmul.bf16.gmra.mxu0 %v3464
    %v3689 = vpop.f32.mrf.mxu0
    %v3690 = vadd.f32 %v3601, %v3689
    %v3691 = vpop.f32.mrf.mxu0
    %v3692 = vadd.f32 %v3603, %v3691
    %3693 = vmatmul.bf16.gmra.mxu0 %v3468
    %v3694 = vpop.f32.mrf.mxu0
    %v3695 = vadd.f32 %v3606, %v3694
    %v3696 = vpop.f32.mrf.mxu0
    %v3697 = vadd.f32 %v3608, %v3696
    %3698 = vmatmul.bf16.gmra.mxu0 %v3472
    %v3699 = vpop.f32.mrf.mxu0
    %v3700 = vadd.f32 %v3611, %v3699
    %v3701 = vpop.f32.mrf.mxu0
    %v3702 = vadd.f32 %v3613, %v3701
    %3703 = vmatmul.bf16.gmra.mxu0 %v3476
    %v3704 = vpop.f32.mrf.mxu0
    %v3705 = vadd.f32 %v3616, %v3704
    %v3706 = vpop.f32.mrf.mxu0
    %v3707 = vadd.f32 %v3618, %v3706
    %3708 = vmatmul.bf16.gmra.mxu0 %v3480
    %v3709 = vpop.f32.mrf.mxu0
    %v3710 = vadd.f32 %v3621, %v3709
    %v3711 = vpop.f32.mrf.mxu0
    %v3712 = vadd.f32 %v3623, %v3711
    %3713 = vmatmul.bf16.gmra.mxu0 %v3484
    %v3714 = vpop.f32.mrf.mxu0
    %v3715 = vadd.f32 %v3626, %v3714
    %v3716 = vpop.f32.mrf.mxu0
    %v3717 = vadd.f32 %v3628, %v3716
    %3718 = vmatmul.bf16.gmra.mxu0 %v3488
    %v3719 = vpop.f32.mrf.mxu0
    %v3720 = vadd.f32 %v3631, %v3719
    %v3721 = vpop.f32.mrf.mxu0
    %v3722 = vadd.f32 %v3633, %v3721
    %3723 = vmatmul.bf16.gmra.mxu0 %v3492
    %v3724 = vpop.f32.mrf.mxu0
    %v3725 = vadd.f32 %v3636, %v3724
    %v3726 = vpop.f32.mrf.mxu0
    %v3727 = vadd.f32 %v3638, %v3726
    %3728 = vmatmul.bf16.gmra.mxu0 %v3496
    %v3729 = vpop.f32.mrf.mxu0
    %v3730 = vadd.f32 %v3641, %v3729
    %v3731 = vpop.f32.mrf.mxu0
    %v3732 = vadd.f32 %v3643, %v3731
    %3733 = vmatmul.bf16.gmra.mxu0 %v3500
    %v3734 = vpop.f32.mrf.mxu0
    %v3735 = vadd.f32 %v3646, %v3734
    %v3736 = vpop.f32.mrf.mxu0
    %v3737 = vadd.f32 %v3648, %v3736
    %3738 = vmatmul.bf16.gmra.mxu0 %v3504
    %v3739 = vpop.f32.mrf.mxu0
    %v3740 = vadd.f32 %v3651, %v3739
    %v3741 = vpop.f32.mrf.mxu0
    %v3742 = vadd.f32 %v3653, %v3741
    %3743 = vmatmul.bf16.gmra.mxu0 %v3508
    %v3744 = vpop.f32.mrf.mxu0
    %v3745 = vadd.f32 %v3656, %v3744
    %v3746 = vpop.f32.mrf.mxu0
    %v3747 = vadd.f32 %v3658, %v3746
    %3748 = vmatmul.bf16.gmra.mxu0 %v3512
    %v3749 = vpop.f32.mrf.mxu0
    %v3750 = vadd.f32 %v3661, %v3749
    %v3751 = vpop.f32.mrf.mxu0
    %v3752 = vadd.f32 %v3663, %v3751
    %3753 = vmatmul.bf16.gmra.mxu0 %v3516
    %v3754 = vpop.f32.mrf.mxu0
    %v3755 = vadd.f32 %v3666, %v3754
    %v3756 = vpop.f32.mrf.mxu0
    %v3757 = vadd.f32 %v3668, %v3756
    %3758 = vmatmul.bf16.gmra.mxu0 %v3520
    %v3759 = vpop.f32.mrf.mxu0
    %v3760 = vadd.f32 %v3671, %v3759
    %v3761 = vpop.f32.mrf.mxu0
    %v3762 = vadd.f32 %v3673, %v3761
    %3763 = vmatmul.bf16.gmra.mxu0 %v3524
    %v3764 = vpop.f32.mrf.mxu0
    %v3765 = vadd.f32 %v3676, %v3764
    %v3766 = vpop.f32.mrf.mxu0
    %v3767 = vadd.f32 %v3678, %v3766
    %3768 = vdwg.mxu0
    %3769 = vmatpush.bf16.msra.mxu0 %v3006
    %3770 = vmatpush.bf16.msra.mxu0 %v3005
    %3771 = vmatpush.bf16.msra.mxu0 %v3004
    %3772 = vmatpush.bf16.msra.mxu0 %v3003
    %3773 = vmatpush.bf16.msra.mxu0 %v3002
    %3774 = vmatpush.bf16.msra.mxu0 %v3001
    %3775 = vmatpush.bf16.msra.mxu0 %v3000
    %3776 = vmatpush.bf16.msra.mxu0 %v2999
    %3777 = vmatmul.bf16.gmra.mxu0 %v3465
    %v3778 = vpop.f32.mrf.mxu0
    %v3779 = vadd.f32 %v3690, %v3778
    %v3780 = vpop.f32.mrf.mxu0
    %v3781 = vadd.f32 %v3692, %v3780
    %3782 = vmatmul.bf16.gmra.mxu0 %v3469
    %v3783 = vpop.f32.mrf.mxu0
    %v3784 = vadd.f32 %v3695, %v3783
    %v3785 = vpop.f32.mrf.mxu0
    %v3786 = vadd.f32 %v3697, %v3785
    %3787 = vmatmul.bf16.gmra.mxu0 %v3473
    %v3788 = vpop.f32.mrf.mxu0
    %v3789 = vadd.f32 %v3700, %v3788
    %v3790 = vpop.f32.mrf.mxu0
    %v3791 = vadd.f32 %v3702, %v3790
    %3792 = vmatmul.bf16.gmra.mxu0 %v3477
    %v3793 = vpop.f32.mrf.mxu0
    %v3794 = vadd.f32 %v3705, %v3793
    %v3795 = vpop.f32.mrf.mxu0
    %v3796 = vadd.f32 %v3707, %v3795
    %3797 = vmatmul.bf16.gmra.mxu0 %v3481
    %v3798 = vpop.f32.mrf.mxu0
    %v3799 = vadd.f32 %v3710, %v3798
    %v3800 = vpop.f32.mrf.mxu0
    %v3801 = vadd.f32 %v3712, %v3800
    %3802 = vmatmul.bf16.gmra.mxu0 %v3485
    %v3803 = vpop.f32.mrf.mxu0
    %v3804 = vadd.f32 %v3715, %v3803
    %v3805 = vpop.f32.mrf.mxu0
    %v3806 = vadd.f32 %v3717, %v3805
    %3807 = vmatmul.bf16.gmra.mxu0 %v3489
    %v3808 = vpop.f32.mrf.mxu0
    %v3809 = vadd.f32 %v3720, %v3808
    %v3810 = vpop.f32.mrf.mxu0
    %v3811 = vadd.f32 %v3722, %v3810
    %3812 = vmatmul.bf16.gmra.mxu0 %v3493
    %v3813 = vpop.f32.mrf.mxu0
    %v3814 = vadd.f32 %v3725, %v3813
    %v3815 = vpop.f32.mrf.mxu0
    %v3816 = vadd.f32 %v3727, %v3815
    %3817 = vmatmul.bf16.gmra.mxu0 %v3497
    %v3818 = vpop.f32.mrf.mxu0
    %v3819 = vadd.f32 %v3730, %v3818
    %v3820 = vpop.f32.mrf.mxu0
    %v3821 = vadd.f32 %v3732, %v3820
    %3822 = vmatmul.bf16.gmra.mxu0 %v3501
    %v3823 = vpop.f32.mrf.mxu0
    %v3824 = vadd.f32 %v3735, %v3823
    %v3825 = vpop.f32.mrf.mxu0
    %v3826 = vadd.f32 %v3737, %v3825
    %3827 = vmatmul.bf16.gmra.mxu0 %v3505
    %v3828 = vpop.f32.mrf.mxu0
    %v3829 = vadd.f32 %v3740, %v3828
    %v3830 = vpop.f32.mrf.mxu0
    %v3831 = vadd.f32 %v3742, %v3830
    %3832 = vmatmul.bf16.gmra.mxu0 %v3509
    %v3833 = vpop.f32.mrf.mxu0
    %v3834 = vadd.f32 %v3745, %v3833
    %v3835 = vpop.f32.mrf.mxu0
    %v3836 = vadd.f32 %v3747, %v3835
    %3837 = vmatmul.bf16.gmra.mxu0 %v3513
    %v3838 = vpop.f32.mrf.mxu0
    %v3839 = vadd.f32 %v3750, %v3838
    %v3840 = vpop.f32.mrf.mxu0
    %v3841 = vadd.f32 %v3752, %v3840
    %3842 = vmatmul.bf16.gmra.mxu0 %v3517
    %v3843 = vpop.f32.mrf.mxu0
    %v3844 = vadd.f32 %v3755, %v3843
    %v3845 = vpop.f32.mrf.mxu0
    %v3846 = vadd.f32 %v3757, %v3845
    %3847 = vmatmul.bf16.gmra.mxu0 %v3521
    %v3848 = vpop.f32.mrf.mxu0
    %v3849 = vadd.f32 %v3760, %v3848
    %v3850 = vpop.f32.mrf.mxu0
    %v3851 = vadd.f32 %v3762, %v3850
    %3852 = vmatmul.bf16.gmra.mxu0 %v3525
    %v3853 = vpop.f32.mrf.mxu0
    %v3854 = vadd.f32 %v3765, %v3853
    %v3855 = vpop.f32.mrf.mxu0
    %v3856 = vadd.f32 %v3767, %v3855
    %3857 = vdwg.mxu0
    %3858 = vmatpush.bf16.msra.mxu0 %v3014
    %3859 = vmatpush.bf16.msra.mxu0 %v3013
    %3860 = vmatpush.bf16.msra.mxu0 %v3012
    %3861 = vmatpush.bf16.msra.mxu0 %v3011
    %3862 = vmatpush.bf16.msra.mxu0 %v3010
    %3863 = vmatpush.bf16.msra.mxu0 %v3009
    %3864 = vmatpush.bf16.msra.mxu0 %v3008
    %3865 = vmatpush.bf16.msra.mxu0 %v3007
    %3866 = vmatmul.bf16.gmra.mxu0 %v3466
    %v3867 = vpop.f32.mrf.mxu0
    %v3868 = vadd.f32 %v3779, %v3867
    %v3869 = vpop.f32.mrf.mxu0
    %v3870 = vadd.f32 %v3781, %v3869
    %3871 = vmatmul.bf16.gmra.mxu0 %v3470
    %v3872 = vpop.f32.mrf.mxu0
    %v3873 = vadd.f32 %v3784, %v3872
    %v3874 = vpop.f32.mrf.mxu0
    %v3875 = vadd.f32 %v3786, %v3874
    %3876 = vmatmul.bf16.gmra.mxu0 %v3474
    %v3877 = vpop.f32.mrf.mxu0
    %v3878 = vadd.f32 %v3789, %v3877
    %v3879 = vpop.f32.mrf.mxu0
    %v3880 = vadd.f32 %v3791, %v3879
    %3881 = vmatmul.bf16.gmra.mxu0 %v3478
    %v3882 = vpop.f32.mrf.mxu0
    %v3883 = vadd.f32 %v3794, %v3882
    %v3884 = vpop.f32.mrf.mxu0
    %v3885 = vadd.f32 %v3796, %v3884
    %3886 = vmatmul.bf16.gmra.mxu0 %v3482
    %v3887 = vpop.f32.mrf.mxu0
    %v3888 = vadd.f32 %v3799, %v3887
    %v3889 = vpop.f32.mrf.mxu0
    %v3890 = vadd.f32 %v3801, %v3889
    %3891 = vmatmul.bf16.gmra.mxu0 %v3486
    %v3892 = vpop.f32.mrf.mxu0
    %v3893 = vadd.f32 %v3804, %v3892
    %v3894 = vpop.f32.mrf.mxu0
    %v3895 = vadd.f32 %v3806, %v3894
    %3896 = vmatmul.bf16.gmra.mxu0 %v3490
    %v3897 = vpop.f32.mrf.mxu0
    %v3898 = vadd.f32 %v3809, %v3897
    %v3899 = vpop.f32.mrf.mxu0
    %v3900 = vadd.f32 %v3811, %v3899
    %3901 = vmatmul.bf16.gmra.mxu0 %v3494
    %v3902 = vpop.f32.mrf.mxu0
    %v3903 = vadd.f32 %v3814, %v3902
    %v3904 = vpop.f32.mrf.mxu0
    %v3905 = vadd.f32 %v3816, %v3904
    %3906 = vmatmul.bf16.gmra.mxu0 %v3498
    %v3907 = vpop.f32.mrf.mxu0
    %v3908 = vadd.f32 %v3819, %v3907
    %v3909 = vpop.f32.mrf.mxu0
    %v3910 = vadd.f32 %v3821, %v3909
    %3911 = vmatmul.bf16.gmra.mxu0 %v3502
    %v3912 = vpop.f32.mrf.mxu0
    %v3913 = vadd.f32 %v3824, %v3912
    %v3914 = vpop.f32.mrf.mxu0
    %v3915 = vadd.f32 %v3826, %v3914
    %3916 = vmatmul.bf16.gmra.mxu0 %v3506
    %v3917 = vpop.f32.mrf.mxu0
    %v3918 = vadd.f32 %v3829, %v3917
    %v3919 = vpop.f32.mrf.mxu0
    %v3920 = vadd.f32 %v3831, %v3919
    %3921 = vmatmul.bf16.gmra.mxu0 %v3510
    %v3922 = vpop.f32.mrf.mxu0
    %v3923 = vadd.f32 %v3834, %v3922
    %v3924 = vpop.f32.mrf.mxu0
    %v3925 = vadd.f32 %v3836, %v3924
    %3926 = vmatmul.bf16.gmra.mxu0 %v3514
    %v3927 = vpop.f32.mrf.mxu0
    %v3928 = vadd.f32 %v3839, %v3927
    %v3929 = vpop.f32.mrf.mxu0
    %v3930 = vadd.f32 %v3841, %v3929
    %3931 = vmatmul.bf16.gmra.mxu0 %v3518
    %v3932 = vpop.f32.mrf.mxu0
    %v3933 = vadd.f32 %v3844, %v3932
    %v3934 = vpop.f32.mrf.mxu0
    %v3935 = vadd.f32 %v3846, %v3934
    %3936 = vmatmul.bf16.gmra.mxu0 %v3522
    %v3937 = vpop.f32.mrf.mxu0
    %v3938 = vadd.f32 %v3849, %v3937
    %v3939 = vpop.f32.mrf.mxu0
    %v3940 = vadd.f32 %v3851, %v3939
    %3941 = vmatmul.bf16.gmra.mxu0 %v3526
    %v3942 = vpop.f32.mrf.mxu0
    %v3943 = vadd.f32 %v3854, %v3942
    %v3944 = vpop.f32.mrf.mxu0
    %v3945 = vadd.f32 %v3856, %v3944
    %3946 = vdwg.mxu0
    %v3947 = vmax.f32 %v3868, 0.0
    %v3948 = vmax.f32 %v3870, 0.0
    %v3949 = vmax.f32 %v3873, 0.0
    %v3950 = vmax.f32 %v3875, 0.0
    %v3951 = vmax.f32 %v3878, 0.0
    %v3952 = vmax.f32 %v3880, 0.0
    %v3953 = vmax.f32 %v3883, 0.0
    %v3954 = vmax.f32 %v3885, 0.0
    %v3955 = vmax.f32 %v3888, 0.0
    %v3956 = vmax.f32 %v3890, 0.0
    %v3957 = vmax.f32 %v3893, 0.0
    %v3958 = vmax.f32 %v3895, 0.0
    %v3959 = vmax.f32 %v3898, 0.0
    %v3960 = vmax.f32 %v3900, 0.0
    %v3961 = vmax.f32 %v3903, 0.0
    %v3962 = vmax.f32 %v3905, 0.0
    %v3963 = vmax.f32 %v3908, 0.0
    %v3964 = vmax.f32 %v3910, 0.0
    %v3965 = vmax.f32 %v3913, 0.0
    %v3966 = vmax.f32 %v3915, 0.0
    %v3967 = vmax.f32 %v3918, 0.0
    %v3968 = vmax.f32 %v3920, 0.0
    %v3969 = vmax.f32 %v3923, 0.0
    %v3970 = vmax.f32 %v3925, 0.0
    %v3971 = vmax.f32 %v3928, 0.0
    %v3972 = vmax.f32 %v3930, 0.0
    %v3973 = vmax.f32 %v3933, 0.0
    %v3974 = vmax.f32 %v3935, 0.0
    %v3975 = vmax.f32 %v3938, 0.0
    %v3976 = vmax.f32 %v3940, 0.0
    %v3977 = vmax.f32 %v3943, 0.0
    %v3978 = vmax.f32 %v3945, 0.0
    %v3979 = vpack.c.bf16 %v3948, %v3947
    %v3980 = vpack.c.bf16 %v3950, %v3949
    %v3981 = vpack.c.bf16 %v3952, %v3951
    %v3982 = vpack.c.bf16 %v3954, %v3953
    %v3983 = vpack.c.bf16 %v3956, %v3955
    %v3984 = vpack.c.bf16 %v3958, %v3957
    %v3985 = vpack.c.bf16 %v3960, %v3959
    %v3986 = vpack.c.bf16 %v3962, %v3961
    %v3987 = vpack.c.bf16 %v3964, %v3963
    %v3988 = vpack.c.bf16 %v3966, %v3965
    %v3989 = vpack.c.bf16 %v3968, %v3967
    %v3990 = vpack.c.bf16 %v3970, %v3969
    %v3991 = vpack.c.bf16 %v3972, %v3971
    %v3992 = vpack.c.bf16 %v3974, %v3973
    %v3993 = vpack.c.bf16 %v3976, %v3975
    %v3994 = vpack.c.bf16 %v3978, %v3977
    %v3995 = vld [vmem:[%s5] sm:$0xff]
    %v3996 = vld [vmem:[%s6] sm:$0xff]
    %3998 = vset.pattern.permute.xlu0 0
    %3999 = vperm.xlu0 %3998, %v3996
    %v4000 = vpop.permute.xlu0 %3999
    %v4003 = vunpack.c.l.b16 %v3995
    %v4004 = vunpack.c.h.b16 %v3995
    %v4005 = vpack.c.b16 %v4003, %v4003
    %v4006 = vpack.c.b16 %v4004, %v4004
    %4009 = vmatpush.bf16.msra.mxu0 %v3986
    %4010 = vmatpush.bf16.msra.mxu0 %v3985
    %4011 = vmatpush.bf16.msra.mxu0 %v3984
    %4012 = vmatpush.bf16.msra.mxu0 %v3983
    %4013 = vmatpush.bf16.msra.mxu0 %v3982
    %4014 = vmatpush.bf16.msra.mxu0 %v3981
    %4015 = vmatpush.bf16.msra.mxu0 %v3980
    %4016 = vmatpush.bf16.msra.mxu0 %v3979
    %4017 = vmatmul.bf16.gmra.mxu0 %v4005
    %v4018 = vpop.f32.mrf.mxu0
    %v4019 = vadd.f32 %v4000, %v4018
    %v4020 = vpop.f32.mrf.mxu0
    %4021 = vdwg.mxu0
    %4022 = vmatpush.bf16.msra.mxu0 %v3994
    %4023 = vmatpush.bf16.msra.mxu0 %v3993
    %4024 = vmatpush.bf16.msra.mxu0 %v3992
    %4025 = vmatpush.bf16.msra.mxu0 %v3991
    %4026 = vmatpush.bf16.msra.mxu0 %v3990
    %4027 = vmatpush.bf16.msra.mxu0 %v3989
    %4028 = vmatpush.bf16.msra.mxu0 %v3988
    %4029 = vmatpush.bf16.msra.mxu0 %v3987
    %4030 = vmatmul.bf16.gmra.mxu0 %v4006
    %v4031 = vpop.f32.mrf.mxu0
    %v4032 = vadd.f32 %v4019, %v4031
    %v4033 = vpop.f32.mrf.mxu0
    %4034 = vdwg.mxu0
    %vm4035 = vcmp.gt.f32.partialorder %v4032, 20.0
    %v4036 = vmin.f32 %v4032, 20.0
    %v4037 = vmul.f32 %v4036, 1.442695
    %v4038 = vpow.pop %v4037
    %v4039 = vadd.f32 %v4038, 1.0
    %v4040 = vlog2.pop %v4039
    %v4041 = vmul.f32 %v4040, 0.6931472
    %v4042 = vmul.f32 -0.5, %v4038
    %v4043 = vadd.f32 %v4042, 1.0
    %v4044 = vmul.f32 %v4043, %v4038
    %v4045 = vand.u32 2147483647, %v4038
    %vm4046 = vcmp.lt.f32.partialorder %v4045, 0.0004427343
    %v4047 = vsel %vm4046, %v4044, %v4041
    %v4048 = vsel %vm4035, %v4032, %v4047
    %v4049 = vadd.f32 %v4048, 1e-05
    %vm4050 = vcmask 1040384
    %v4051 = vsel %vm4050, %v4032, %v4049
    %4052 = vst [vmem:[#allocation2] sm:$0x3] %v4051
    // Predicated region
    $region30: #{tpu_custom_call.1} parent=1 // pred_check
      _
    $region31: #{tpu_custom_call.1} parent=1 // pred_check_branch
      %4054 = sbr.rel (0) target = $region33
    $region32: #{tpu_custom_call.1} parent=1 // pred_region
      %4056 = vsyncadd [#allocation3], 0
      %s4058 = sshll.u32 [#allocation2], 4
      %s4059 = int_to_ptr.vmem [resolvable:$true] %s4058
      %s4060 = sshll.u32 %s7, 4
      %s4061 = int_to_ptr.hbm [resolvable:$true] %s4060
      %4063 = dma.vmem_to_hbm [thread:$0]  %s4059, 32, %s4061, [#allocation3]
    $region33: #{tpu_custom_call.1} parent=1 // pred_fallthru
      _
    // Predicated region
    $region34: #{tpu_custom_call.1} parent=1 // pred_check
      _
    $region35: #{tpu_custom_call.1} parent=1 // pred_check_branch
      %4065 = sbr.rel (0) target = $region37
    $region36: #{tpu_custom_call.1} parent=1 // pred_region
      %4067 = dma.done [#allocation3], 32
    $region37: #{tpu_custom_call.1} parent=1 // pred_fallthru
      _
    %4068 = vsyncpa [#allocation3], 1

</llo_original>
